<compile_context>
chip_gen: v7x
topology: tpu7x:2x2x1
jax: 0.10.0
libtpu: 0.0.40
codegen_flags: <defaults>
</compile_context>

<pallas_src>
import jax
import jax.numpy as jnp
from jax import lax
from jax.experimental import pallas as pl
from jax.experimental.pallas import tpu as pltpu

LN_EPS = 1e-5  # PyTorch nn.LayerNorm default


def _detect_chip_kind():
    try:
        return jax.devices()[0].device_kind.lower()
    except Exception:
        return ""


_IS_V7 = "v7" in _detect_chip_kind()
# v7x: 64 MiB physical VMEM per TensorCore -> stay conservative.
# v5e/v6e: 128 MiB physical -> bigger scoped budget and bigger row tiles.
VMEM_LIMIT = (40 if _IS_V7 else 64) * 1024 * 1024
ROW_CAP = 1024 if _IS_V7 else 2048
EDGE_TILE_BYTES = (6 if _IS_V7 else 12) * 1024 * 1024


# ----------------------------------------------------------------------------
# small helpers
# ----------------------------------------------------------------------------
def _round_up(x, m):
    return ((x + m - 1) // m) * m


def _cdiv(a, b):
    return -(-a // b)


def _row_plan(m, cap=ROW_CAP):
    """Balanced row tile (multiple of 8) and padded row count (pad < 8 rows/tile)."""
    n_tiles = max(1, _cdiv(m, cap))
    tm = _round_up(_cdiv(m, n_tiles), 8)
    mp = _round_up(m, tm)
    return tm, mp


def _pad_rows(x, mp):
    m = x.shape[0]
    if mp == m:
        return x
    return jnp.pad(x, ((0, mp - m), (0, 0)))


def _edge_row_tile(n, e, h):
    """How many i-rows each edge-kernel grid step handles (must divide N and be
    a multiple of 8, or equal N for small/ragged N)."""
    if n % 8 != 0 or n <= 8:
        return n
    per_row = n * (4 * h + 12 * e) + 1       # rough per-i-row VMEM footprint
    ti = min(n, max(8, EDGE_TILE_BYTES // per_row))
    ti = (ti // 8) * 8
    while n % ti:
        ti -= 8
    return max(ti, 8)


def _layernorm(h, g, b):
    """Single-pass LayerNorm statistics (mean and mean-of-squares)."""
    mu = jnp.mean(h, axis=-1, keepdims=True)
    ms = jnp.mean(h * h, axis=-1, keepdims=True)
    var = jnp.maximum(ms - mu * mu, 0.0)
    return (h - mu) * lax.rsqrt(var + LN_EPS) * g + b


# ----------------------------------------------------------------------------
# Pallas kernels
# ----------------------------------------------------------------------------
def _mlp_kernel(x_ref, w1_ref, b1_ref, g_ref, bln_ref, w2_ref, b2_ref, o_ref):
    """out = relu(LayerNorm(x @ W1 + b1)) @ W2 + b2   (bf16 MXU, f32 acc)."""
    x = x_ref[...]
    h = jnp.dot(x.astype(jnp.bfloat16), w1_ref[...],
                preferred_element_type=jnp.float32) + b1_ref[...]
    h = jnp.maximum(_layernorm(h, g_ref[...], bln_ref[...]), 0.0)
    o_ref[...] = (jnp.dot(h.astype(jnp.bfloat16), w2_ref[...],
                          preferred_element_type=jnp.float32)
                  + b2_ref[...]).astype(o_ref.dtype)


def _node_update_kernel(ea_ref, x_ref, w1e_ref, w1n_ref, b1_ref, g_ref,
                        bln_ref, w2_ref, b2_ref, o_ref):
    """Fused node update (concat-free, residual fused):
       out = x + relu(LN(ea @ W1_e + x @ W1_n + b1)) @ W2 + b2
       (W1_n is pre-scaled by N in the wrapper)."""
    x = x_ref[...]
    h = jnp.dot(ea_ref[...].astype(jnp.bfloat16), w1e_ref[...],
                preferred_element_type=jnp.float32)
    h = h + jnp.dot(x.astype(jnp.bfloat16), w1n_ref[...],
                    preferred_element_type=jnp.float32)
    h = h + b1_ref[...]
    h = jnp.maximum(_layernorm(h, g_ref[...], bln_ref[...]), 0.0)
    o_ref[...] = (x
                  + jnp.dot(h.astype(jnp.bfloat16), w2_ref[...],
                            preferred_element_type=jnp.float32)
                  + b2_ref[...]).astype(o_ref.dtype)


def _edge_update_kernel(e_ref, adj_ref, pi_ref, pj_ref, w1e_ref, g_ref,
                        bln_ref, w2_ref, b2_ref, oe_ref, oea_ref):
    """Fused edge update for a (batch b, TI rows of i) block.
       h[r,j]   = edges[r,j] @ W1_e + proj_i[r] + proj_j[j]   (b1 folded in proj_i)
       new_e    = edges + relu(LN(h)) @ W2 + b2               (stored bf16)
       ea[r]    = sum_j adj[r,j] * new_e[r,j,:]               (fused aggregation)"""
    ti, n, ed = e_ref.shape
    hd = w1e_ref.shape[1]
    e = e_ref[...]                                              # [TI,N,E] bf16
    h = jnp.dot(e.reshape(ti * n, ed), w1e_ref[...],
                preferred_element_type=jnp.float32).reshape(ti, n, hd)
    h = h + pi_ref[...][:, None, :] + pj_ref[...][None, :, :]
    h = jnp.maximum(_layernorm(h, g_ref[...], bln_ref[...]), 0.0)
    d = jnp.dot(h.reshape(ti * n, hd).astype(jnp.bfloat16), w2_ref[...],
                preferred_element_type=jnp.float32).reshape(ti, n, ed)
    d = d + b2_ref[...]
    new_e = (e.astype(jnp.float32) + d).astype(oe_ref.dtype)
    oe_ref[...] = new_e
    oea_ref[...] = jnp.sum(new_e.astype(jnp.float32)
                           * adj_ref[...][:, :, None], axis=1)


def _edge_init_kernel(ci_ref, cj_ref, w_ref, b_ref, g_ref, bln_ref,
                      oe_ref, oadj_ref, oea_ref):
    """Fused pairwise distance + Linear(1->E) -> LN -> ReLU edge embedding,
       plus adjacency (dist < 10) and the layer-0 aggregated messages."""
    ci = ci_ref[...]                                            # [TI,3]
    cj = cj_ref[...]                                            # [N,3]
    diff = ci[:, None, :] - cj[None, :, :]                      # [TI,N,3]
    dist = jnp.sqrt(jnp.sum(diff * diff, axis=-1, keepdims=True))  # [TI,N,1]
    adj = jnp.where(dist[..., 0] < 10.0, 1.0, 0.0)              # [TI,N] f32
    h = dist * w_ref[...] + b_ref[...]                          # Linear(1->E)
    edges = jnp.maximum(_layernorm(h, g_ref[...], bln_ref[...]), 0.0)
    edges = edges.astype(oe_ref.dtype)
    oe_ref[...] = edges
    oadj_ref[...] = adj
    oea_ref[...] = jnp.sum(edges.astype(jnp.float32) * adj[:, :, None], axis=1)


# ----------------------------------------------------------------------------
# wrappers
# ----------------------------------------------------------------------------
def structure_mlp(x, w1, b1, gamma, beta, w2, b2):
    """Linear -> LN -> ReLU -> Linear on rows of x; output lane-padded to 128."""
    m, din = x.shape
    hid = w1.shape[1]
    dout = w2.shape[1]
    dpad = _round_up(max(dout, 128), 128)
    w2p = jnp.zeros((hid, dpad), w2.dtype).at[:, :dout].set(w2)
    b2p = jnp.zeros((dpad,), b2.dtype).at[:dout].set(b2)
    tm, mp = _row_plan(m)
    xp = _pad_rows(x, mp)
    out = pl.pallas_call(
        _mlp_kernel,
        out_shape=jax.ShapeDtypeStruct((mp, dpad), x.dtype),
        grid=(mp // tm,),
        in_specs=[
            pl.BlockSpec((tm, din), lambda i: (i, 0)),
            pl.BlockSpec((din, hid), lambda i: (0, 0)),
            pl.BlockSpec((1, hid), lambda i: (0, 0)),
            pl.BlockSpec((1, hid), lambda i: (0, 0)),
            pl.BlockSpec((1, hid), lambda i: (0, 0)),
            pl.BlockSpec((hid, dpad), lambda i: (0, 0)),
            pl.BlockSpec((1, dpad), lambda i: (0, 0)),
        ],
        out_specs=pl.BlockSpec((tm, dpad), lambda i: (i, 0)),
        compiler_params=pltpu.CompilerParams(
            dimension_semantics=("parallel",),
            vmem_limit_bytes=VMEM_LIMIT),
    )(xp, w1.astype(jnp.bfloat16), b1.reshape(1, -1), gamma.reshape(1, -1),
      beta.reshape(1, -1), w2p.astype(jnp.bfloat16), b2p.reshape(1, -1))
    return out[:m, :dout]


def node_update_rows(ea, x, n_scale, w1, b1, gamma, beta, w2, b2):
    """x + MLP(cat[ea, N*x]) with the concat split into two in-kernel matmuls."""
    m, d = x.shape
    e = ea.shape[1]
    hid = w1.shape[1]
    w1e = w1[:e].astype(jnp.bfloat16)
    w1n = (w1[e:] * n_scale).astype(jnp.bfloat16)   # fold the N* scale
    tm, mp = _row_plan(m)
    eap = _pad_rows(ea, mp)
    xp = _pad_rows(x, mp)
    out = pl.pallas_call(
        _node_update_kernel,
        out_shape=jax.ShapeDtypeStruct((mp, d), x.dtype),
        grid=(mp // tm,),
        in_specs=[
            pl.BlockSpec((tm, e), lambda i: (i, 0)),
            pl.BlockSpec((tm, d), lambda i: (i, 0)),
            pl.BlockSpec((e, hid), lambda i: (0, 0)),
            pl.BlockSpec((d, hid), lambda i: (0, 0)),
            pl.BlockSpec((1, hid), lambda i: (0, 0)),
            pl.BlockSpec((1, hid), lambda i: (0, 0)),
            pl.BlockSpec((1, hid), lambda i: (0, 0)),
            pl.BlockSpec((hid, d), lambda i: (0, 0)),
            pl.BlockSpec((1, d), lambda i: (0, 0)),
        ],
        out_specs=pl.BlockSpec((tm, d), lambda i: (i, 0)),
        compiler_params=pltpu.CompilerParams(
            dimension_semantics=("parallel",),
            vmem_limit_bytes=VMEM_LIMIT),
    )(eap, xp, w1e, w1n, b1.reshape(1, -1), gamma.reshape(1, -1),
      beta.reshape(1, -1), w2.astype(jnp.bfloat16), b2.reshape(1, -1))
    return out[:m]


def edge_update(edges, nodes, adjacency, w1, b1, gamma, beta, w2, b2):
    """new_edges = edges + MLP(cat[edges, nodes_i, nodes_j])  (bf16 HBM storage)
       ea        = sum_j adjacency * new_edges                 (fused, f32)"""
    B, N, _, E = edges.shape
    D = nodes.shape[-1]
    H = w1.shape[1]
    TI = _edge_row_tile(N, E, H)
    w1e = w1[:E].astype(jnp.bfloat16)
    w1i = w1[E:E + D].astype(jnp.bfloat16)
    w1j = w1[E + D:].astype(jnp.bfloat16)
    nb = nodes.astype(jnp.bfloat16)
    dn = (((2,), (0,)), ((), ()))
    proj_i = lax.dot_general(nb, w1i, dn,
                             preferred_element_type=jnp.float32) + b1   # [B,N,H]
    proj_j = lax.dot_general(nb, w1j, dn,
                             preferred_element_type=jnp.float32)        # [B,N,H]
    new_edges, ea = pl.pallas_call(
        _edge_update_kernel,
        out_shape=(jax.ShapeDtypeStruct((B, N, N, E), edges.dtype),
                   jax.ShapeDtypeStruct((B, N, E), jnp.float32)),
        grid=(B, N // TI),
        in_specs=[
            pl.BlockSpec((None, TI, N, E), lambda b, i: (b, i, 0, 0)),
            pl.BlockSpec((None, TI, N), lambda b, i: (b, i, 0)),
            pl.BlockSpec((None, TI, H), lambda b, i: (b, i, 0)),
            pl.BlockSpec((None, N, H), lambda b, i: (b, 0, 0)),
            pl.BlockSpec((E, H), lambda b, i: (0, 0)),
            pl.BlockSpec((1, H), lambda b, i: (0, 0)),
            pl.BlockSpec((1, H), lambda b, i: (0, 0)),
            pl.BlockSpec((H, E), lambda b, i: (0, 0)),
            pl.BlockSpec((1, E), lambda b, i: (0, 0)),
        ],
        out_specs=(pl.BlockSpec((None, TI, N, E), lambda b, i: (b, i, 0, 0)),
                   pl.BlockSpec((None, TI, E), lambda b, i: (b, i, 0))),
        compiler_params=pltpu.CompilerParams(
            dimension_semantics=("parallel", "parallel"),
            vmem_limit_bytes=VMEM_LIMIT),
    )(edges, adjacency, proj_i, proj_j, w1e, gamma.reshape(1, -1),
      beta.reshape(1, -1), w2.astype(jnp.bfloat16), b2.reshape(1, -1))
    return new_edges, ea


def edge_init(coords, w, b, gamma, beta, edge_dtype=jnp.bfloat16):
    """Fused pairwise-distance + edge embedding + adjacency + layer-0 messages."""
    B, N, C = coords.shape
    E = w.shape[1]
    TI = _edge_row_tile(N, E, E)
    return pl.pallas_call(
        _edge_init_kernel,
        out_shape=(jax.ShapeDtypeStruct((B, N, N, E), edge_dtype),
                   jax.ShapeDtypeStruct((B, N, N), jnp.float32),
                   jax.ShapeDtypeStruct((B, N, E), jnp.float32)),
        grid=(B, N // TI),
        in_specs=[
            pl.BlockSpec((None, TI, C), lambda b, i: (b, i, 0)),
            pl.BlockSpec((None, N, C), lambda b, i: (b, 0, 0)),
            pl.BlockSpec((1, E), lambda b, i: (0, 0)),
            pl.BlockSpec((1, E), lambda b, i: (0, 0)),
            pl.BlockSpec((1, E), lambda b, i: (0, 0)),
            pl.BlockSpec((1, E), lambda b, i: (0, 0)),
        ],
        out_specs=(pl.BlockSpec((None, TI, N, E), lambda b, i: (b, i, 0, 0)),
                   pl.BlockSpec((None, TI, N), lambda b, i: (b, i, 0)),
                   pl.BlockSpec((None, TI, E), lambda b, i: (b, i, 0))),
        compiler_params=pltpu.CompilerParams(
            dimension_semantics=("parallel", "parallel"),
            vmem_limit_bytes=VMEM_LIMIT),
    )(coords, coords, w, b.reshape(1, -1), gamma.reshape(1, -1),
      beta.reshape(1, -1))


# ----------------------------------------------------------------------------
# parameter init (PyTorch-style uniform(-1/sqrt(fan_in), 1/sqrt(fan_in)))
# ----------------------------------------------------------------------------
def _linear_init(key, din, dout):
    k1, k2 = jax.random.split(key)
    lim = 1.0 / jnp.sqrt(jnp.float32(din))
    w = jax.random.uniform(k1, (din, dout), jnp.float32, -lim, lim)
    b = jax.random.uniform(k2, (dout,), jnp.float32, -lim, lim)
    return w, b


def init_params(key, node_dim, edge_dim, hidden_dim, num_layers):
    keys = jax.random.split(key, 3 + 2 * num_layers)
    params = {}

    w1, b1 = _linear_init(keys[0], node_dim, hidden_dim)
    w2, b2 = _linear_init(keys[1], hidden_dim, 3)
    params["structure_preserving"] = (
        w1, b1, jnp.ones((hidden_dim,), jnp.float32),
        jnp.zeros((hidden_dim,), jnp.float32), w2, b2)

    we, be = _linear_init(keys[2], 1, edge_dim)
    params["edge_embedding"] = (
        we, be, jnp.ones((edge_dim,), jnp.float32),
        jnp.zeros((edge_dim,), jnp.float32))

    layers = []
    for l in range(num_layers):
        kn, ke = keys[3 + 2 * l], keys[4 + 2 * l]
        kn1, kn2 = jax.random.split(kn)
        ke1, ke2 = jax.random.split(ke)
        nw1, nb1 = _linear_init(kn1, node_dim + edge_dim, hidden_dim)
        nw2, nb2 = _linear_init(kn2, hidden_dim, node_dim)
        ew1, eb1 = _linear_init(ke1, edge_dim + 2 * node_dim, hidden_dim)
        ew2, eb2 = _linear_init(ke2, hidden_dim, edge_dim)
        layers.append({
            "node_update": (nw1, nb1, jnp.ones((hidden_dim,), jnp.float32),
                            jnp.zeros((hidden_dim,), jnp.float32), nw2, nb2),
            "edge_update": (ew1, eb1, jnp.ones((hidden_dim,), jnp.float32),
                            jnp.zeros((hidden_dim,), jnp.float32), ew2, eb2),
        })
    params["layers"] = layers
    return params


# ----------------------------------------------------------------------------
# forward pass (Pallas kernels + thin JAX glue)
# ----------------------------------------------------------------------------
def graph_sampler_forward(params, nodes):
    B, N, D = nodes.shape
    sp = params["structure_preserving"]
    E = params["edge_embedding"][0].shape[1]

    coords = structure_mlp(nodes.reshape(B * N, D), *sp).reshape(B, N, 3)

    # edges (bf16 HBM), adjacency and the layer-0 aggregated messages, all from
    # one fused kernel over the coordinates.
    cur_edges, adjacency, cur_ea = edge_init(coords, *params["edge_embedding"])

    cur_nodes = nodes
    for layer in params["layers"]:
        new_nodes = node_update_rows(
            cur_ea.reshape(B * N, E), cur_nodes.reshape(B * N, D), float(N),
            *layer["node_update"]).reshape(B, N, D)
        # edge update also produces the aggregated messages for the NEXT layer,
        # avoiding a second HBM pass over the [B,N,N,E] tensor.
        new_edges, new_ea = edge_update(cur_edges, cur_nodes, adjacency,
                                        *layer["edge_update"])
        cur_nodes, cur_edges, cur_ea = new_nodes, new_edges, new_ea

    coords_pred = structure_mlp(cur_nodes.reshape(B * N, D), *sp).reshape(B, N, 3)
    return cur_nodes, coords_pred


# ----------------------------------------------------------------------------
# pure-JAX reference mirroring the PyTorch module (precision-matched:
# bf16 matmul operands, f32 accumulation/LN, bf16 edge storage between layers)
# ----------------------------------------------------------------------------
def _linear_bf16(x, w, b):
    dn = (((x.ndim - 1,), (0,)), ((), ()))
    return lax.dot_general(x.astype(jnp.bfloat16), w.astype(jnp.bfloat16),
                           dn, preferred_element_type=jnp.float32) + b


def _mlp_ref(x, w1, b1, g, bln, w2, b2):
    h = jnp.maximum(_layernorm(_linear_bf16(x, w1, b1), g, bln), 0.0)
    return _linear_bf16(h, w2, b2)


def _forward_ref(params, nodes):
    B, N, D = nodes.shape
    sp = params["structure_preserving"]
    coords = _mlp_ref(nodes, *sp)
    diff = coords[:, :, None, :] - coords[:, None, :, :]
    dist = jnp.sqrt(jnp.sum(diff * diff, axis=-1, keepdims=True))
    adjacency = jnp.where(dist[..., 0] < 10.0, 1.0, 0.0)
    we, be, ge, bbe = params["edge_embedding"]
    edges = jnp.maximum(_layernorm(dist * we[0] + be, ge, bbe), 0.0)
    edges = edges.astype(jnp.bfloat16).astype(jnp.float32)   # mirror bf16 HBM

    cur_n, cur_e = nodes, edges
    for layer in params["layers"]:
        ea = cur_e * adjacency[..., None]
        n_exp = jnp.broadcast_to(cur_n[:, :, None, :], (B, N, N, D))
        msgs = jnp.concatenate([ea, n_exp], axis=-1).sum(axis=2)
        new_n = cur_n + _mlp_ref(msgs, *layer["node_update"])
        ni = jnp.broadcast_to(cur_n[:, :, None, :], (B, N, N, D))
        nj = jnp.broadcast_to(cur_n[:, None, :, :], (B, N, N, D))
        ei = jnp.concatenate([cur_e, ni, nj], axis=-1)
        new_e = cur_e + _mlp_ref(ei, *layer["edge_update"])
        new_e = new_e.astype(jnp.bfloat16).astype(jnp.float32)  # mirror bf16 HBM
        cur_n, cur_e = new_n, new_e
    coords_pred = _mlp_ref(cur_n, *sp)
    return cur_n, coords_pred


# ----------------------------------------------------------------------------
if __name__ == "__main__":
    # Small shapes consistent with the module (dims are constructor args).
    B, N = 2, 8
    NODE_DIM, EDGE_DIM, HIDDEN_DIM, NUM_LAYERS = 128, 64, 128, 2

    key = jax.random.PRNGKey(0)
    kp, kx = jax.random.split(key)
    params = init_params(kp, NODE_DIM, EDGE_DIM, HIDDEN_DIM, NUM_LAYERS)
    nodes = jax.random.normal(kx, (B, N, NODE_DIM), jnp.float32)

    fwd = jax.jit(graph_sampler_forward)
    out_nodes, out_coords = fwd(params, nodes)
    out_nodes = jax.block_until_ready(out_nodes)
    out_coords = jax.block_until_ready(out_coords)

    # Sanity check against a precision-matched reference.
    ref_nodes, ref_coords = jax.jit(_forward_ref)(params, nodes)
    ref_nodes = jax.block_until_ready(ref_nodes)
    ref_coords = jax.block_until_ready(ref_coords)

    assert out_nodes.shape == (B, N, NODE_DIM)
    assert out_coords.shape == (B, N, 3)
    assert jnp.allclose(out_nodes, ref_nodes, atol=1e-2, rtol=1e-2), \
        float(jnp.max(jnp.abs(out_nodes - ref_nodes)))
    assert jnp.allclose(out_coords, ref_coords, atol=1e-2, rtol=1e-2), \
        float(jnp.max(jnp.abs(out_coords - ref_coords)))

    print("KERNEL_OK")
</pallas_src>

<mosaic_0001>
module attributes {stable_mosaic.version = 11 : i64} {
  func.func @_mlp_kernel(%arg0: i32, %arg1: memref<16x128xf32, #tpu.memory_space<vmem>>, %arg2: memref<128x128xbf16, #tpu.memory_space<vmem>>, %arg3: memref<1x128xf32, #tpu.memory_space<vmem>>, %arg4: memref<1x128xf32, #tpu.memory_space<vmem>>, %arg5: memref<1x128xf32, #tpu.memory_space<vmem>>, %arg6: memref<128x128xbf16, #tpu.memory_space<vmem>>, %arg7: memref<1x128xf32, #tpu.memory_space<vmem>>, %arg8: memref<16x128xf32, #tpu.memory_space<vmem>>) attributes {dimension_semantics = [#tpu.dimension_semantics<parallel>], iteration_bounds = array<i64: 1>, scalar_prefetch = 0 : i64, scratch_operands = 0 : i64, tpu.core_type = #tpu.core_type<tc>, window_params = [{transform_indices = @transform_0, window_bounds = array<i64: 16, 128>}, {pipeline_mode = #tpu.pipeline_mode<synchronous>, transform_indices = @transform_1, window_bounds = array<i64: 128, 128>}, {pipeline_mode = #tpu.pipeline_mode<synchronous>, transform_indices = @transform_2, window_bounds = array<i64: 1, 128>}, {pipeline_mode = #tpu.pipeline_mode<synchronous>, transform_indices = @transform_3, window_bounds = array<i64: 1, 128>}, {pipeline_mode = #tpu.pipeline_mode<synchronous>, transform_indices = @transform_4, window_bounds = array<i64: 1, 128>}, {pipeline_mode = #tpu.pipeline_mode<synchronous>, transform_indices = @transform_5, window_bounds = array<i64: 128, 128>}, {pipeline_mode = #tpu.pipeline_mode<synchronous>, transform_indices = @transform_6, window_bounds = array<i64: 1, 128>}, {transform_indices = @transform_7, window_bounds = array<i64: 16, 128>}]} {
    %c0 = arith.constant 0 : index
    %c0_0 = arith.constant 0 : index
    %0 = vector.load %arg1[%c0, %c0_0] : memref<16x128xf32, #tpu.memory_space<vmem>>, vector<16x128xf32>
    %1 = arith.truncf %0 : vector<16x128xf32> to vector<16x128xbf16>
    %c0_1 = arith.constant 0 : index
    %c0_2 = arith.constant 0 : index
    %2 = vector.load %arg2[%c0_1, %c0_2] : memref<128x128xbf16, #tpu.memory_space<vmem>>, vector<128x128xbf16>
    %cst = arith.constant dense<0.000000e+00> : vector<16x128xf32>
    %3 = tpu.matmul %1, %2, %cst {dimension_numbers = #tpu.dot_dimension_numbers<[1], [0], [0], [1], [0, 0, 1, 1], [], []>} : vector<16x128xbf16>, vector<128x128xbf16>, vector<16x128xf32> -> vector<16x128xf32>
    %c0_3 = arith.constant 0 : index
    %c0_4 = arith.constant 0 : index
    %4 = vector.load %arg3[%c0_3, %c0_4] : memref<1x128xf32, #tpu.memory_space<vmem>>, vector<1x128xf32>
    %5 = vector.broadcast %4 : vector<1x128xf32> to vector<16x128xf32>
    %6 = arith.addf %3, %5 : vector<16x128xf32>
    %c0_5 = arith.constant 0 : index
    %c0_6 = arith.constant 0 : index
    %7 = vector.load %arg4[%c0_5, %c0_6] : memref<1x128xf32, #tpu.memory_space<vmem>>, vector<1x128xf32>
    %c0_7 = arith.constant 0 : index
    %c0_8 = arith.constant 0 : index
    %8 = vector.load %arg5[%c0_7, %c0_8] : memref<1x128xf32, #tpu.memory_space<vmem>>, vector<1x128xf32>
    %cst_9 = arith.constant dense<0.000000e+00> : vector<16xf32>
    %9 = vector.multi_reduction <add>, %6, %cst_9 [1] : vector<16x128xf32> to vector<16xf32>
    %10 = vector.shape_cast %9 : vector<16xf32> to vector<16x1xf32>
    %cst_10 = arith.constant 1.280000e+02 : f32
    %11 = vector.broadcast %cst_10 : f32 to vector<16x1xf32>
    %12 = arith.divf %10, %11 : vector<16x1xf32>
    %13 = arith.mulf %6, %6 : vector<16x128xf32>
    %cst_11 = arith.constant dense<0.000000e+00> : vector<16xf32>
    %14 = vector.multi_reduction <add>, %13, %cst_11 [1] : vector<16x128xf32> to vector<16xf32>
    %15 = vector.shape_cast %14 : vector<16xf32> to vector<16x1xf32>
    %cst_12 = arith.constant 1.280000e+02 : f32
    %16 = vector.broadcast %cst_12 : f32 to vector<16x1xf32>
    %17 = arith.divf %15, %16 : vector<16x1xf32>
    %18 = arith.mulf %12, %12 : vector<16x1xf32>
    %19 = arith.subf %17, %18 : vector<16x1xf32>
    %cst_13 = arith.constant 0.000000e+00 : f32
    %20 = vector.broadcast %cst_13 : f32 to vector<16x1xf32>
    %21 = arith.maximumf %19, %20 : vector<16x1xf32>
    %22 = vector.broadcast %12 : vector<16x1xf32> to vector<16x128xf32>
    %23 = arith.subf %6, %22 : vector<16x128xf32>
    %cst_14 = arith.constant 9.99999974E-6 : f32
    %24 = vector.broadcast %cst_14 : f32 to vector<16x1xf32>
    %25 = arith.addf %21, %24 : vector<16x1xf32>
    %26 = math.rsqrt %25 : vector<16x1xf32>
    %27 = vector.broadcast %26 : vector<16x1xf32> to vector<16x128xf32>
    %28 = arith.mulf %23, %27 : vector<16x128xf32>
    %29 = vector.broadcast %7 : vector<1x128xf32> to vector<16x128xf32>
    %30 = arith.mulf %28, %29 : vector<16x128xf32>
    %31 = vector.broadcast %8 : vector<1x128xf32> to vector<16x128xf32>
    %32 = arith.addf %30, %31 : vector<16x128xf32>
    %cst_15 = arith.constant 0.000000e+00 : f32
    %33 = vector.broadcast %cst_15 : f32 to vector<16x128xf32>
    %34 = arith.maximumf %32, %33 : vector<16x128xf32>
    %35 = arith.truncf %34 : vector<16x128xf32> to vector<16x128xbf16>
    %c0_16 = arith.constant 0 : index
    %c0_17 = arith.constant 0 : index
    %36 = vector.load %arg6[%c0_16, %c0_17] : memref<128x128xbf16, #tpu.memory_space<vmem>>, vector<128x128xbf16>
    %cst_18 = arith.constant dense<0.000000e+00> : vector<16x128xf32>
    %37 = tpu.matmul %35, %36, %cst_18 {dimension_numbers = #tpu.dot_dimension_numbers<[1], [0], [0], [1], [0, 0, 1, 1], [], []>} : vector<16x128xbf16>, vector<128x128xbf16>, vector<16x128xf32> -> vector<16x128xf32>
    %c0_19 = arith.constant 0 : index
    %c0_20 = arith.constant 0 : index
    %38 = vector.load %arg7[%c0_19, %c0_20] : memref<1x128xf32, #tpu.memory_space<vmem>>, vector<1x128xf32>
    %39 = vector.broadcast %38 : vector<1x128xf32> to vector<16x128xf32>
    %40 = arith.addf %37, %39 : vector<16x128xf32>
    %c0_21 = arith.constant 0 : index
    %c0_22 = arith.constant 0 : index
    %41 = vector.load %arg8[%c0_21, %c0_22] : memref<16x128xf32, #tpu.memory_space<vmem>>, vector<16x128xf32>
    tpu.vector_store %arg8[%c0_21, %c0_22], %40 {strides = array<i32>} : memref<16x128xf32, #tpu.memory_space<vmem>>, vector<16x128xf32>,
    return
  }
  func.func @transform_0(%arg0: i32) -> (i32, i32) {
    %c0_i32 = arith.constant 0 : i32
    %c0_i32_0 = arith.constant 0 : i32
    return %arg0, %c0_i32 : i32, i32
  }
  func.func @transform_1(%arg0: i32) -> (i32, i32) {
    %c0_i32 = arith.constant 0 : i32
    %c0_i32_0 = arith.constant 0 : i32
    %c0_i32_1 = arith.constant 0 : i32
    return %c0_i32, %c0_i32_0 : i32, i32
  }
  func.func @transform_2(%arg0: i32) -> (i32, i32) {
    %c0_i32 = arith.constant 0 : i32
    %c0_i32_0 = arith.constant 0 : i32
    %c0_i32_1 = arith.constant 0 : i32
    return %c0_i32, %c0_i32_0 : i32, i32
  }
  func.func @transform_3(%arg0: i32) -> (i32, i32) {
    %c0_i32 = arith.constant 0 : i32
    %c0_i32_0 = arith.constant 0 : i32
    %c0_i32_1 = arith.constant 0 : i32
    return %c0_i32, %c0_i32_0 : i32, i32
  }
  func.func @transform_4(%arg0: i32) -> (i32, i32) {
    %c0_i32 = arith.constant 0 : i32
    %c0_i32_0 = arith.constant 0 : i32
    %c0_i32_1 = arith.constant 0 : i32
    return %c0_i32, %c0_i32_0 : i32, i32
  }
  func.func @transform_5(%arg0: i32) -> (i32, i32) {
    %c0_i32 = arith.constant 0 : i32
    %c0_i32_0 = arith.constant 0 : i32
    %c0_i32_1 = arith.constant 0 : i32
    return %c0_i32, %c0_i32_0 : i32, i32
  }
  func.func @transform_6(%arg0: i32) -> (i32, i32) {
    %c0_i32 = arith.constant 0 : i32
    %c0_i32_0 = arith.constant 0 : i32
    %c0_i32_1 = arith.constant 0 : i32
    return %c0_i32, %c0_i32_0 : i32, i32
  }
  func.func @transform_7(%arg0: i32) -> (i32, i32) {
    %c0_i32 = arith.constant 0 : i32
    %c0_i32_0 = arith.constant 0 : i32
    return %arg0, %c0_i32 : i32, i32
  }
}

module attributes {stable_mosaic.version = 11 : i64} {
  func.func @_edge_init_kernel(%arg0: i32, %arg1: i32, %arg2: memref<1x8x3xf32, #tpu.memory_space<vmem>>, %arg3: memref<1x8x3xf32, #tpu.memory_space<vmem>>, %arg4: memref<1x64xf32, #tpu.memory_space<vmem>>, %arg5: memref<1x64xf32, #tpu.memory_space<vmem>>, %arg6: memref<1x64xf32, #tpu.memory_space<vmem>>, %arg7: memref<1x64xf32, #tpu.memory_space<vmem>>, %arg8: memref<1x8x8x64xbf16, #tpu.memory_space<vmem>>, %arg9: memref<1x8x8xf32, #tpu.memory_space<vmem>>, %arg10: memref<1x8x64xf32, #tpu.memory_space<vmem>>) attributes {dimension_semantics = [#tpu.dimension_semantics<parallel>, #tpu.dimension_semantics<parallel>], iteration_bounds = array<i64: 2, 1>, scalar_prefetch = 0 : i64, scratch_operands = 0 : i64, tpu.core_type = #tpu.core_type<tc>, window_params = [{transform_indices = @transform_0, window_bounds = array<i64: 1, 8, 3>}, {transform_indices = @transform_1, window_bounds = array<i64: 1, 8, 3>}, {pipeline_mode = #tpu.pipeline_mode<synchronous>, transform_indices = @transform_2, window_bounds = array<i64: 1, 64>}, {pipeline_mode = #tpu.pipeline_mode<synchronous>, transform_indices = @transform_3, window_bounds = array<i64: 1, 64>}, {pipeline_mode = #tpu.pipeline_mode<synchronous>, transform_indices = @transform_4, window_bounds = array<i64: 1, 64>}, {pipeline_mode = #tpu.pipeline_mode<synchronous>, transform_indices = @transform_5, window_bounds = array<i64: 1, 64>}, {transform_indices = @transform_6, window_bounds = array<i64: 1, 8, 8, 64>}, {transform_indices = @transform_7, window_bounds = array<i64: 1, 8, 8>}, {transform_indices = @transform_8, window_bounds = array<i64: 1, 8, 64>}]} {
    %c0 = arith.constant 0 : index
    %c0_0 = arith.constant 0 : index
    %c0_1 = arith.constant 0 : index
    %0 = vector.load %arg2[%c0, %c0_0, %c0_1] : memref<1x8x3xf32, #tpu.memory_space<vmem>>, vector<1x8x3xf32>
    %1 = vector.shape_cast %0 : vector<1x8x3xf32> to vector<8x3xf32>
    %c0_2 = arith.constant 0 : index
    %c0_3 = arith.constant 0 : index
    %c0_4 = arith.constant 0 : index
    %2 = vector.load %arg3[%c0_2, %c0_3, %c0_4] : memref<1x8x3xf32, #tpu.memory_space<vmem>>, vector<1x8x3xf32>
    %3 = vector.shape_cast %2 : vector<1x8x3xf32> to vector<8x3xf32>
    %4 = vector.shape_cast %1 : vector<8x3xf32> to vector<8x1x3xf32>
    %5 = vector.shape_cast %3 : vector<8x3xf32> to vector<1x8x3xf32>
    %6 = vector.broadcast %4 : vector<8x1x3xf32> to vector<8x8x3xf32>
    %7 = vector.broadcast %5 : vector<1x8x3xf32> to vector<8x8x3xf32>
    %8 = arith.subf %6, %7 : vector<8x8x3xf32>
    %9 = arith.mulf %8, %8 : vector<8x8x3xf32>
    %cst = arith.constant dense<0.000000e+00> : vector<8x8xf32>
    %10 = vector.multi_reduction <add>, %9, %cst [2] : vector<8x8x3xf32> to vector<8x8xf32>
    %11 = vector.shape_cast %10 : vector<8x8xf32> to vector<8x8x1xf32>
    %12 = math.sqrt %11 : vector<8x8x1xf32>
    %13 = vector.shape_cast %12 : vector<8x8x1xf32> to vector<8x8xf32>
    %cst_5 = arith.constant 1.000000e+01 : f32
    %14 = vector.broadcast %cst_5 : f32 to vector<8x8xf32>
    %15 = arith.cmpf olt, %13, %14 : vector<8x8xf32>
    %cst_6 = arith.constant 1.000000e+00 : f32
    %cst_7 = arith.constant 0.000000e+00 : f32
    %16 = vector.broadcast %cst_6 : f32 to vector<8x8xf32>
    %17 = vector.broadcast %cst_7 : f32 to vector<8x8xf32>
    %18 = arith.select %15, %16, %17 : vector<8x8xi1>, vector<8x8xf32>
    %c0_8 = arith.constant 0 : index
    %c0_9 = arith.constant 0 : index
    %19 = vector.load %arg4[%c0_8, %c0_9] : memref<1x64xf32, #tpu.memory_space<vmem>>, vector<1x64xf32>
    %20 = vector.shape_cast %19 : vector<1x64xf32> to vector<1x1x64xf32>
    %21 = vector.broadcast %12 : vector<8x8x1xf32> to vector<8x8x64xf32>
    %22 = vector.broadcast %20 : vector<1x1x64xf32> to vector<8x8x64xf32>
    %23 = arith.mulf %21, %22 : vector<8x8x64xf32>
    %c0_10 = arith.constant 0 : index
    %c0_11 = arith.constant 0 : index
    %24 = vector.load %arg5[%c0_10, %c0_11] : memref<1x64xf32, #tpu.memory_space<vmem>>, vector<1x64xf32>
    %25 = vector.shape_cast %24 : vector<1x64xf32> to vector<1x1x64xf32>
    %26 = vector.broadcast %25 : vector<1x1x64xf32> to vector<8x8x64xf32>
    %27 = arith.addf %23, %26 : vector<8x8x64xf32>
    %c0_12 = arith.constant 0 : index
    %c0_13 = arith.constant 0 : index
    %28 = vector.load %arg6[%c0_12, %c0_13] : memref<1x64xf32, #tpu.memory_space<vmem>>, vector<1x64xf32>
    %c0_14 = arith.constant 0 : index
    %c0_15 = arith.constant 0 : index
    %29 = vector.load %arg7[%c0_14, %c0_15] : memref<1x64xf32, #tpu.memory_space<vmem>>, vector<1x64xf32>
    %cst_16 = arith.constant dense<0.000000e+00> : vector<8x8xf32>
    %30 = vector.multi_reduction <add>, %27, %cst_16 [2] : vector<8x8x64xf32> to vector<8x8xf32>
    %31 = vector.shape_cast %30 : vector<8x8xf32> to vector<8x8x1xf32>
    %cst_17 = arith.constant 6.400000e+01 : f32
    %32 = vector.broadcast %cst_17 : f32 to vector<8x8x1xf32>
    %33 = arith.divf %31, %32 : vector<8x8x1xf32>
    %34 = arith.mulf %27, %27 : vector<8x8x64xf32>
    %cst_18 = arith.constant dense<0.000000e+00> : vector<8x8xf32>
    %35 = vector.multi_reduction <add>, %34, %cst_18 [2] : vector<8x8x64xf32> to vector<8x8xf32>
    %36 = vector.shape_cast %35 : vector<8x8xf32> to vector<8x8x1xf32>
    %cst_19 = arith.constant 6.400000e+01 : f32
    %37 = vector.broadcast %cst_19 : f32 to vector<8x8x1xf32>
    %38 = arith.divf %36, %37 : vector<8x8x1xf32>
    %39 = arith.mulf %33, %33 : vector<8x8x1xf32>
    %40 = arith.subf %38, %39 : vector<8x8x1xf32>
    %cst_20 = arith.constant 0.000000e+00 : f32
    %41 = vector.broadcast %cst_20 : f32 to vector<8x8x1xf32>
    %42 = arith.maximumf %40, %41 : vector<8x8x1xf32>
    %43 = vector.broadcast %33 : vector<8x8x1xf32> to vector<8x8x64xf32>
    %44 = arith.subf %27, %43 : vector<8x8x64xf32>
    %cst_21 = arith.constant 9.99999974E-6 : f32
    %45 = vector.broadcast %cst_21 : f32 to vector<8x8x1xf32>
    %46 = arith.addf %42, %45 : vector<8x8x1xf32>
    %47 = math.rsqrt %46 : vector<8x8x1xf32>
    %48 = vector.broadcast %47 : vector<8x8x1xf32> to vector<8x8x64xf32>
    %49 = arith.mulf %44, %48 : vector<8x8x64xf32>
    %50 = vector.shape_cast %28 : vector<1x64xf32> to vector<1x1x64xf32>
    %51 = vector.broadcast %50 : vector<1x1x64xf32> to vector<8x8x64xf32>
    %52 = arith.mulf %49, %51 : vector<8x8x64xf32>
    %53 = vector.shape_cast %29 : vector<1x64xf32> to vector<1x1x64xf32>
    %54 = vector.broadcast %53 : vector<1x1x64xf32> to vector<8x8x64xf32>
    %55 = arith.addf %52, %54 : vector<8x8x64xf32>
    %cst_22 = arith.constant 0.000000e+00 : f32
    %56 = vector.broadcast %cst_22 : f32 to vector<8x8x64xf32>
    %57 = arith.maximumf %55, %56 : vector<8x8x64xf32>
    %58 = arith.truncf %57 : vector<8x8x64xf32> to vector<8x8x64xbf16>
    %c0_23 = arith.constant 0 : index
    %c0_24 = arith.constant 0 : index
    %c0_25 = arith.constant 0 : index
    %c0_26 = arith.constant 0 : index
    %59 = vector.load %arg8[%c0_23, %c0_24, %c0_25, %c0_26] : memref<1x8x8x64xbf16, #tpu.memory_space<vmem>>, vector<1x8x8x64xbf16>
    %60 = vector.shape_cast %59 : vector<1x8x8x64xbf16> to vector<8x8x64xbf16>
    %61 = vector.shape_cast %58 : vector<8x8x64xbf16> to vector<1x8x8x64xbf16>
    tpu.vector_store %arg8[%c0_23, %c0_24, %c0_25, %c0_26], %61 {strides = array<i32>} : memref<1x8x8x64xbf16, #tpu.memory_space<vmem>>, vector<1x8x8x64xbf16>,
    %c0_27 = arith.constant 0 : index
    %c0_28 = arith.constant 0 : index
    %c0_29 = arith.constant 0 : index
    %62 = vector.load %arg9[%c0_27, %c0_28, %c0_29] : memref<1x8x8xf32, #tpu.memory_space<vmem>>, vector<1x8x8xf32>
    %63 = vector.shape_cast %62 : vector<1x8x8xf32> to vector<8x8xf32>
    %64 = vector.shape_cast %18 : vector<8x8xf32> to vector<1x8x8xf32>
    tpu.vector_store %arg9[%c0_27, %c0_28, %c0_29], %64 {strides = array<i32>} : memref<1x8x8xf32, #tpu.memory_space<vmem>>, vector<1x8x8xf32>,
    %65 = arith.extf %58 : vector<8x8x64xbf16> to vector<8x8x64xf32>
    %66 = vector.shape_cast %18 : vector<8x8xf32> to vector<8x8x1xf32>
    %67 = vector.broadcast %66 : vector<8x8x1xf32> to vector<8x8x64xf32>
    %68 = arith.mulf %65, %67 : vector<8x8x64xf32>
    %cst_30 = arith.constant dense<0.000000e+00> : vector<8x64xf32>
    %69 = vector.multi_reduction <add>, %68, %cst_30 [1] : vector<8x8x64xf32> to vector<8x64xf32>
    %c0_31 = arith.constant 0 : index
    %c0_32 = arith.constant 0 : index
    %c0_33 = arith.constant 0 : index
    %70 = vector.load %arg10[%c0_31, %c0_32, %c0_33] : memref<1x8x64xf32, #tpu.memory_space<vmem>>, vector<1x8x64xf32>
    %71 = vector.shape_cast %70 : vector<1x8x64xf32> to vector<8x64xf32>
    %72 = vector.shape_cast %69 : vector<8x64xf32> to vector<1x8x64xf32>
    tpu.vector_store %arg10[%c0_31, %c0_32, %c0_33], %72 {strides = array<i32>} : memref<1x8x64xf32, #tpu.memory_space<vmem>>, vector<1x8x64xf32>,
    return
  }
  func.func @transform_0(%arg0: i32, %arg1: i32) -> (i32, i32, i32) {
    %c0_i32 = arith.constant 0 : i32
    %c0_i32_0 = arith.constant 0 : i32
    return %arg0, %arg1, %c0_i32 : i32, i32, i32
  }
  func.func @transform_1(%arg0: i32, %arg1: i32) -> (i32, i32, i32) {
    %c0_i32 = arith.constant 0 : i32
    %c0_i32_0 = arith.constant 0 : i32
    %c0_i32_1 = arith.constant 0 : i32
    return %arg0, %c0_i32, %c0_i32_0 : i32, i32, i32
  }
  func.func @transform_2(%arg0: i32, %arg1: i32) -> (i32, i32) {
    %c0_i32 = arith.constant 0 : i32
    %c0_i32_0 = arith.constant 0 : i32
    %c0_i32_1 = arith.constant 0 : i32
    return %c0_i32, %c0_i32_0 : i32, i32
  }
  func.func @transform_3(%arg0: i32, %arg1: i32) -> (i32, i32) {
    %c0_i32 = arith.constant 0 : i32
    %c0_i32_0 = arith.constant 0 : i32
    %c0_i32_1 = arith.constant 0 : i32
    return %c0_i32, %c0_i32_0 : i32, i32
  }
  func.func @transform_4(%arg0: i32, %arg1: i32) -> (i32, i32) {
    %c0_i32 = arith.constant 0 : i32
    %c0_i32_0 = arith.constant 0 : i32
    %c0_i32_1 = arith.constant 0 : i32
    return %c0_i32, %c0_i32_0 : i32, i32
  }
  func.func @transform_5(%arg0: i32, %arg1: i32) -> (i32, i32) {
    %c0_i32 = arith.constant 0 : i32
    %c0_i32_0 = arith.constant 0 : i32
    %c0_i32_1 = arith.constant 0 : i32
    return %c0_i32, %c0_i32_0 : i32, i32
  }
  func.func @transform_6(%arg0: i32, %arg1: i32) -> (i32, i32, i32, i32) {
    %c0_i32 = arith.constant 0 : i32
    %c0_i32_0 = arith.constant 0 : i32
    %c0_i32_1 = arith.constant 0 : i32
    return %arg0, %arg1, %c0_i32, %c0_i32_0 : i32, i32, i32, i32
  }
  func.func @transform_7(%arg0: i32, %arg1: i32) -> (i32, i32, i32) {
    %c0_i32 = arith.constant 0 : i32
    %c0_i32_0 = arith.constant 0 : i32
    return %arg0, %arg1, %c0_i32 : i32, i32, i32
  }
  func.func @transform_8(%arg0: i32, %arg1: i32) -> (i32, i32, i32) {
    %c0_i32 = arith.constant 0 : i32
    %c0_i32_0 = arith.constant 0 : i32
    return %arg0, %arg1, %c0_i32 : i32, i32, i32
  }
}

module attributes {stable_mosaic.version = 11 : i64} {
  func.func @_edge_update_kernel(%arg0: i32, %arg1: i32, %arg2: memref<1x8x8x64xbf16, #tpu.memory_space<vmem>>, %arg3: memref<1x8x8xf32, #tpu.memory_space<vmem>>, %arg4: memref<1x8x128xf32, #tpu.memory_space<vmem>>, %arg5: memref<1x8x128xf32, #tpu.memory_space<vmem>>, %arg6: memref<64x128xbf16, #tpu.memory_space<vmem>>, %arg7: memref<1x128xf32, #tpu.memory_space<vmem>>, %arg8: memref<1x128xf32, #tpu.memory_space<vmem>>, %arg9: memref<128x64xbf16, #tpu.memory_space<vmem>>, %arg10: memref<1x64xf32, #tpu.memory_space<vmem>>, %arg11: memref<1x8x8x64xbf16, #tpu.memory_space<vmem>>, %arg12: memref<1x8x64xf32, #tpu.memory_space<vmem>>) attributes {dimension_semantics = [#tpu.dimension_semantics<parallel>, #tpu.dimension_semantics<parallel>], iteration_bounds = array<i64: 2, 1>, scalar_prefetch = 0 : i64, scratch_operands = 0 : i64, tpu.core_type = #tpu.core_type<tc>, window_params = [{transform_indices = @transform_0, window_bounds = array<i64: 1, 8, 8, 64>}, {transform_indices = @transform_1, window_bounds = array<i64: 1, 8, 8>}, {transform_indices = @transform_2, window_bounds = array<i64: 1, 8, 128>}, {transform_indices = @transform_3, window_bounds = array<i64: 1, 8, 128>}, {pipeline_mode = #tpu.pipeline_mode<synchronous>, transform_indices = @transform_4, window_bounds = array<i64: 64, 128>}, {pipeline_mode = #tpu.pipeline_mode<synchronous>, transform_indices = @transform_5, window_bounds = array<i64: 1, 128>}, {pipeline_mode = #tpu.pipeline_mode<synchronous>, transform_indices = @transform_6, window_bounds = array<i64: 1, 128>}, {pipeline_mode = #tpu.pipeline_mode<synchronous>, transform_indices = @transform_7, window_bounds = array<i64: 128, 64>}, {pipeline_mode = #tpu.pipeline_mode<synchronous>, transform_indices = @transform_8, window_bounds = array<i64: 1, 64>}, {transform_indices = @transform_9, window_bounds = array<i64: 1, 8, 8, 64>}, {transform_indices = @transform_10, window_bounds = array<i64: 1, 8, 64>}]} {
    %c0 = arith.constant 0 : index
    %c0_0 = arith.constant 0 : index
    %c0_1 = arith.constant 0 : index
    %c0_2 = arith.constant 0 : index
    %0 = vector.load %arg2[%c0, %c0_0, %c0_1, %c0_2] : memref<1x8x8x64xbf16, #tpu.memory_space<vmem>>, vector<1x8x8x64xbf16>
    %1 = vector.shape_cast %0 : vector<1x8x8x64xbf16> to vector<8x8x64xbf16>
    %2 = vector.shape_cast %1 : vector<8x8x64xbf16> to vector<64x64xbf16>
    %c0_3 = arith.constant 0 : index
    %c0_4 = arith.constant 0 : index
    %3 = vector.load %arg6[%c0_3, %c0_4] : memref<64x128xbf16, #tpu.memory_space<vmem>>, vector<64x128xbf16>
    %cst = arith.constant dense<0.000000e+00> : vector<64x128xf32>
    %4 = tpu.matmul %2, %3, %cst {dimension_numbers = #tpu.dot_dimension_numbers<[1], [0], [0], [1], [0, 0, 1, 1], [], []>} : vector<64x64xbf16>, vector<64x128xbf16>, vector<64x128xf32> -> vector<64x128xf32>
    %5 = vector.shape_cast %4 : vector<64x128xf32> to vector<8x8x128xf32>
    %c0_5 = arith.constant 0 : index
    %c0_6 = arith.constant 0 : index
    %c0_7 = arith.constant 0 : index
    %6 = vector.load %arg4[%c0_5, %c0_6, %c0_7] : memref<1x8x128xf32, #tpu.memory_space<vmem>>, vector<1x8x128xf32>
    %7 = vector.shape_cast %6 : vector<1x8x128xf32> to vector<8x128xf32>
    %8 = vector.shape_cast %7 : vector<8x128xf32> to vector<8x1x128xf32>
    %9 = vector.broadcast %8 : vector<8x1x128xf32> to vector<8x8x128xf32>
    %10 = arith.addf %5, %9 : vector<8x8x128xf32>
    %c0_8 = arith.constant 0 : index
    %c0_9 = arith.constant 0 : index
    %c0_10 = arith.constant 0 : index
    %11 = vector.load %arg5[%c0_8, %c0_9, %c0_10] : memref<1x8x128xf32, #tpu.memory_space<vmem>>, vector<1x8x128xf32>
    %12 = vector.shape_cast %11 : vector<1x8x128xf32> to vector<8x128xf32>
    %13 = vector.shape_cast %12 : vector<8x128xf32> to vector<1x8x128xf32>
    %14 = vector.broadcast %13 : vector<1x8x128xf32> to vector<8x8x128xf32>
    %15 = arith.addf %10, %14 : vector<8x8x128xf32>
    %c0_11 = arith.constant 0 : index
    %c0_12 = arith.constant 0 : index
    %16 = vector.load %arg7[%c0_11, %c0_12] : memref<1x128xf32, #tpu.memory_space<vmem>>, vector<1x128xf32>
    %c0_13 = arith.constant 0 : index
    %c0_14 = arith.constant 0 : index
    %17 = vector.load %arg8[%c0_13, %c0_14] : memref<1x128xf32, #tpu.memory_space<vmem>>, vector<1x128xf32>
    %cst_15 = arith.constant dense<0.000000e+00> : vector<8x8xf32>
    %18 = vector.multi_reduction <add>, %15, %cst_15 [2] : vector<8x8x128xf32> to vector<8x8xf32>
    %19 = vector.shape_cast %18 : vector<8x8xf32> to vector<8x8x1xf32>
    %cst_16 = arith.constant 1.280000e+02 : f32
    %20 = vector.broadcast %cst_16 : f32 to vector<8x8x1xf32>
    %21 = arith.divf %19, %20 : vector<8x8x1xf32>
    %22 = arith.mulf %15, %15 : vector<8x8x128xf32>
    %cst_17 = arith.constant dense<0.000000e+00> : vector<8x8xf32>
    %23 = vector.multi_reduction <add>, %22, %cst_17 [2] : vector<8x8x128xf32> to vector<8x8xf32>
    %24 = vector.shape_cast %23 : vector<8x8xf32> to vector<8x8x1xf32>
    %cst_18 = arith.constant 1.280000e+02 : f32
    %25 = vector.broadcast %cst_18 : f32 to vector<8x8x1xf32>
    %26 = arith.divf %24, %25 : vector<8x8x1xf32>
    %27 = arith.mulf %21, %21 : vector<8x8x1xf32>
    %28 = arith.subf %26, %27 : vector<8x8x1xf32>
    %cst_19 = arith.constant 0.000000e+00 : f32
    %29 = vector.broadcast %cst_19 : f32 to vector<8x8x1xf32>
    %30 = arith.maximumf %28, %29 : vector<8x8x1xf32>
    %31 = vector.broadcast %21 : vector<8x8x1xf32> to vector<8x8x128xf32>
    %32 = arith.subf %15, %31 : vector<8x8x128xf32>
    %cst_20 = arith.constant 9.99999974E-6 : f32
    %33 = vector.broadcast %cst_20 : f32 to vector<8x8x1xf32>
    %34 = arith.addf %30, %33 : vector<8x8x1xf32>
    %35 = math.rsqrt %34 : vector<8x8x1xf32>
    %36 = vector.broadcast %35 : vector<8x8x1xf32> to vector<8x8x128xf32>
    %37 = arith.mulf %32, %36 : vector<8x8x128xf32>
    %38 = vector.shape_cast %16 : vector<1x128xf32> to vector<1x1x128xf32>
    %39 = vector.broadcast %38 : vector<1x1x128xf32> to vector<8x8x128xf32>
    %40 = arith.mulf %37, %39 : vector<8x8x128xf32>
    %41 = vector.shape_cast %17 : vector<1x128xf32> to vector<1x1x128xf32>
    %42 = vector.broadcast %41 : vector<1x1x128xf32> to vector<8x8x128xf32>
    %43 = arith.addf %40, %42 : vector<8x8x128xf32>
    %cst_21 = arith.constant 0.000000e+00 : f32
    %44 = vector.broadcast %cst_21 : f32 to vector<8x8x128xf32>
    %45 = arith.maximumf %43, %44 : vector<8x8x128xf32>
    %46 = vector.shape_cast %45 : vector<8x8x128xf32> to vector<64x128xf32>
    %47 = arith.truncf %46 : vector<64x128xf32> to vector<64x128xbf16>
    %c0_22 = arith.constant 0 : index
    %c0_23 = arith.constant 0 : index
    %48 = vector.load %arg9[%c0_22, %c0_23] : memref<128x64xbf16, #tpu.memory_space<vmem>>, vector<128x64xbf16>
    %cst_24 = arith.constant dense<0.000000e+00> : vector<64x64xf32>
    %49 = tpu.matmul %47, %48, %cst_24 {dimension_numbers = #tpu.dot_dimension_numbers<[1], [0], [0], [1], [0, 0, 1, 1], [], []>} : vector<64x128xbf16>, vector<128x64xbf16>, vector<64x64xf32> -> vector<64x64xf32>
    %50 = vector.shape_cast %49 : vector<64x64xf32> to vector<8x8x64xf32>
    %c0_25 = arith.constant 0 : index
    %c0_26 = arith.constant 0 : index
    %51 = vector.load %arg10[%c0_25, %c0_26] : memref<1x64xf32, #tpu.memory_space<vmem>>, vector<1x64xf32>
    %52 = vector.shape_cast %51 : vector<1x64xf32> to vector<1x1x64xf32>
    %53 = vector.broadcast %52 : vector<1x1x64xf32> to vector<8x8x64xf32>
    %54 = arith.addf %50, %53 : vector<8x8x64xf32>
    %55 = arith.extf %1 : vector<8x8x64xbf16> to vector<8x8x64xf32>
    %56 = arith.addf %55, %54 : vector<8x8x64xf32>
    %57 = arith.truncf %56 : vector<8x8x64xf32> to vector<8x8x64xbf16>
    %c0_27 = arith.constant 0 : index
    %c0_28 = arith.constant 0 : index
    %c0_29 = arith.constant 0 : index
    %c0_30 = arith.constant 0 : index
    %58 = vector.load %arg11[%c0_27, %c0_28, %c0_29, %c0_30] : memref<1x8x8x64xbf16, #tpu.memory_space<vmem>>, vector<1x8x8x64xbf16>
    %59 = vector.shape_cast %58 : vector<1x8x8x64xbf16> to vector<8x8x64xbf16>
    %60 = vector.shape_cast %57 : vector<8x8x64xbf16> to vector<1x8x8x64xbf16>
    tpu.vector_store %arg11[%c0_27, %c0_28, %c0_29, %c0_30], %60 {strides = array<i32>} : memref<1x8x8x64xbf16, #tpu.memory_space<vmem>>, vector<1x8x8x64xbf16>,
    %61 = arith.extf %57 : vector<8x8x64xbf16> to vector<8x8x64xf32>
    %c0_31 = arith.constant 0 : index
    %c0_32 = arith.constant 0 : index
    %c0_33 = arith.constant 0 : index
    %62 = vector.load %arg3[%c0_31, %c0_32, %c0_33] : memref<1x8x8xf32, #tpu.memory_space<vmem>>, vector<1x8x8xf32>
    %63 = vector.shape_cast %62 : vector<1x8x8xf32> to vector<8x8xf32>
    %64 = vector.shape_cast %63 : vector<8x8xf32> to vector<8x8x1xf32>
    %65 = vector.broadcast %64 : vector<8x8x1xf32> to vector<8x8x64xf32>
    %66 = arith.mulf %61, %65 : vector<8x8x64xf32>
    %cst_34 = arith.constant dense<0.000000e+00> : vector<8x64xf32>
    %67 = vector.multi_reduction <add>, %66, %cst_34 [1] : vector<8x8x64xf32> to vector<8x64xf32>
    %c0_35 = arith.constant 0 : index
    %c0_36 = arith.constant 0 : index
    %c0_37 = arith.constant 0 : index
    %68 = vector.load %arg12[%c0_35, %c0_36, %c0_37] : memref<1x8x64xf32, #tpu.memory_space<vmem>>, vector<1x8x64xf32>
    %69 = vector.shape_cast %68 : vector<1x8x64xf32> to vector<8x64xf32>
    %70 = vector.shape_cast %67 : vector<8x64xf32> to vector<1x8x64xf32>
    tpu.vector_store %arg12[%c0_35, %c0_36, %c0_37], %70 {strides = array<i32>} : memref<1x8x64xf32, #tpu.memory_space<vmem>>, vector<1x8x64xf32>,
    return
  }
  func.func @transform_0(%arg0: i32, %arg1: i32) -> (i32, i32, i32, i32) {
    %c0_i32 = arith.constant 0 : i32
    %c0_i32_0 = arith.constant 0 : i32
    %c0_i32_1 = arith.constant 0 : i32
    return %arg0, %arg1, %c0_i32, %c0_i32_0 : i32, i32, i32, i32
  }
  func.func @transform_1(%arg0: i32, %arg1: i32) -> (i32, i32, i32) {
    %c0_i32 = arith.constant 0 : i32
    %c0_i32_0 = arith.constant 0 : i32
    return %arg0, %arg1, %c0_i32 : i32, i32, i32
  }
  func.func @transform_2(%arg0: i32, %arg1: i32) -> (i32, i32, i32) {
    %c0_i32 = arith.constant 0 : i32
    %c0_i32_0 = arith.constant 0 : i32
    return %arg0, %arg1, %c0_i32 : i32, i32, i32
  }
  func.func @transform_3(%arg0: i32, %arg1: i32) -> (i32, i32, i32) {
    %c0_i32 = arith.constant 0 : i32
    %c0_i32_0 = arith.constant 0 : i32
    %c0_i32_1 = arith.constant 0 : i32
    return %arg0, %c0_i32, %c0_i32_0 : i32, i32, i32
  }
  func.func @transform_4(%arg0: i32, %arg1: i32) -> (i32, i32) {
    %c0_i32 = arith.constant 0 : i32
    %c0_i32_0 = arith.constant 0 : i32
    %c0_i32_1 = arith.constant 0 : i32
    return %c0_i32, %c0_i32_0 : i32, i32
  }
  func.func @transform_5(%arg0: i32, %arg1: i32) -> (i32, i32) {
    %c0_i32 = arith.constant 0 : i32
    %c0_i32_0 = arith.constant 0 : i32
    %c0_i32_1 = arith.constant 0 : i32
    return %c0_i32, %c0_i32_0 : i32, i32
  }
  func.func @transform_6(%arg0: i32, %arg1: i32) -> (i32, i32) {
    %c0_i32 = arith.constant 0 : i32
    %c0_i32_0 = arith.constant 0 : i32
    %c0_i32_1 = arith.constant 0 : i32
    return %c0_i32, %c0_i32_0 : i32, i32
  }
  func.func @transform_7(%arg0: i32, %arg1: i32) -> (i32, i32) {
    %c0_i32 = arith.constant 0 : i32
    %c0_i32_0 = arith.constant 0 : i32
    %c0_i32_1 = arith.constant 0 : i32
    return %c0_i32, %c0_i32_0 : i32, i32
  }
  func.func @transform_8(%arg0: i32, %arg1: i32) -> (i32, i32) {
    %c0_i32 = arith.constant 0 : i32
    %c0_i32_0 = arith.constant 0 : i32
    %c0_i32_1 = arith.constant 0 : i32
    return %c0_i32, %c0_i32_0 : i32, i32
  }
  func.func @transform_9(%arg0: i32, %arg1: i32) -> (i32, i32, i32, i32) {
    %c0_i32 = arith.constant 0 : i32
    %c0_i32_0 = arith.constant 0 : i32
    %c0_i32_1 = arith.constant 0 : i32
    return %arg0, %arg1, %c0_i32, %c0_i32_0 : i32, i32, i32, i32
  }
  func.func @transform_10(%arg0: i32, %arg1: i32) -> (i32, i32, i32) {
    %c0_i32 = arith.constant 0 : i32
    %c0_i32_0 = arith.constant 0 : i32
    return %arg0, %arg1, %c0_i32 : i32, i32, i32
  }
}

module attributes {stable_mosaic.version = 11 : i64} {
  func.func @_node_update_kernel(%arg0: i32, %arg1: memref<16x64xf32, #tpu.memory_space<vmem>>, %arg2: memref<16x128xf32, #tpu.memory_space<vmem>>, %arg3: memref<64x128xbf16, #tpu.memory_space<vmem>>, %arg4: memref<128x128xbf16, #tpu.memory_space<vmem>>, %arg5: memref<1x128xf32, #tpu.memory_space<vmem>>, %arg6: memref<1x128xf32, #tpu.memory_space<vmem>>, %arg7: memref<1x128xf32, #tpu.memory_space<vmem>>, %arg8: memref<128x128xbf16, #tpu.memory_space<vmem>>, %arg9: memref<1x128xf32, #tpu.memory_space<vmem>>, %arg10: memref<16x128xf32, #tpu.memory_space<vmem>>) attributes {dimension_semantics = [#tpu.dimension_semantics<parallel>], iteration_bounds = array<i64: 1>, scalar_prefetch = 0 : i64, scratch_operands = 0 : i64, tpu.core_type = #tpu.core_type<tc>, window_params = [{transform_indices = @transform_0, window_bounds = array<i64: 16, 64>}, {transform_indices = @transform_1, window_bounds = array<i64: 16, 128>}, {pipeline_mode = #tpu.pipeline_mode<synchronous>, transform_indices = @transform_2, window_bounds = array<i64: 64, 128>}, {pipeline_mode = #tpu.pipeline_mode<synchronous>, transform_indices = @transform_3, window_bounds = array<i64: 128, 128>}, {pipeline_mode = #tpu.pipeline_mode<synchronous>, transform_indices = @transform_4, window_bounds = array<i64: 1, 128>}, {pipeline_mode = #tpu.pipeline_mode<synchronous>, transform_indices = @transform_5, window_bounds = array<i64: 1, 128>}, {pipeline_mode = #tpu.pipeline_mode<synchronous>, transform_indices = @transform_6, window_bounds = array<i64: 1, 128>}, {pipeline_mode = #tpu.pipeline_mode<synchronous>, transform_indices = @transform_7, window_bounds = array<i64: 128, 128>}, {pipeline_mode = #tpu.pipeline_mode<synchronous>, transform_indices = @transform_8, window_bounds = array<i64: 1, 128>}, {transform_indices = @transform_9, window_bounds = array<i64: 16, 128>}]} {
    %c0 = arith.constant 0 : index
    %c0_0 = arith.constant 0 : index
    %0 = vector.load %arg2[%c0, %c0_0] : memref<16x128xf32, #tpu.memory_space<vmem>>, vector<16x128xf32>
    %c0_1 = arith.constant 0 : index
    %c0_2 = arith.constant 0 : index
    %1 = vector.load %arg1[%c0_1, %c0_2] : memref<16x64xf32, #tpu.memory_space<vmem>>, vector<16x64xf32>
    %2 = arith.truncf %1 : vector<16x64xf32> to vector<16x64xbf16>
    %c0_3 = arith.constant 0 : index
    %c0_4 = arith.constant 0 : index
    %3 = vector.load %arg3[%c0_3, %c0_4] : memref<64x128xbf16, #tpu.memory_space<vmem>>, vector<64x128xbf16>
    %cst = arith.constant dense<0.000000e+00> : vector<16x128xf32>
    %4 = tpu.matmul %2, %3, %cst {dimension_numbers = #tpu.dot_dimension_numbers<[1], [0], [0], [1], [0, 0, 1, 1], [], []>} : vector<16x64xbf16>, vector<64x128xbf16>, vector<16x128xf32> -> vector<16x128xf32>
    %5 = arith.truncf %0 : vector<16x128xf32> to vector<16x128xbf16>
    %c0_5 = arith.constant 0 : index
    %c0_6 = arith.constant 0 : index
    %6 = vector.load %arg4[%c0_5, %c0_6] : memref<128x128xbf16, #tpu.memory_space<vmem>>, vector<128x128xbf16>
    %cst_7 = arith.constant dense<0.000000e+00> : vector<16x128xf32>
    %7 = tpu.matmul %5, %6, %cst_7 {dimension_numbers = #tpu.dot_dimension_numbers<[1], [0], [0], [1], [0, 0, 1, 1], [], []>} : vector<16x128xbf16>, vector<128x128xbf16>, vector<16x128xf32> -> vector<16x128xf32>
    %8 = arith.addf %4, %7 : vector<16x128xf32>
    %c0_8 = arith.constant 0 : index
    %c0_9 = arith.constant 0 : index
    %9 = vector.load %arg5[%c0_8, %c0_9] : memref<1x128xf32, #tpu.memory_space<vmem>>, vector<1x128xf32>
    %10 = vector.broadcast %9 : vector<1x128xf32> to vector<16x128xf32>
    %11 = arith.addf %8, %10 : vector<16x128xf32>
    %c0_10 = arith.constant 0 : index
    %c0_11 = arith.constant 0 : index
    %12 = vector.load %arg6[%c0_10, %c0_11] : memref<1x128xf32, #tpu.memory_space<vmem>>, vector<1x128xf32>
    %c0_12 = arith.constant 0 : index
    %c0_13 = arith.constant 0 : index
    %13 = vector.load %arg7[%c0_12, %c0_13] : memref<1x128xf32, #tpu.memory_space<vmem>>, vector<1x128xf32>
    %cst_14 = arith.constant dense<0.000000e+00> : vector<16xf32>
    %14 = vector.multi_reduction <add>, %11, %cst_14 [1] : vector<16x128xf32> to vector<16xf32>
    %15 = vector.shape_cast %14 : vector<16xf32> to vector<16x1xf32>
    %cst_15 = arith.constant 1.280000e+02 : f32
    %16 = vector.broadcast %cst_15 : f32 to vector<16x1xf32>
    %17 = arith.divf %15, %16 : vector<16x1xf32>
    %18 = arith.mulf %11, %11 : vector<16x128xf32>
    %cst_16 = arith.constant dense<0.000000e+00> : vector<16xf32>
    %19 = vector.multi_reduction <add>, %18, %cst_16 [1] : vector<16x128xf32> to vector<16xf32>
    %20 = vector.shape_cast %19 : vector<16xf32> to vector<16x1xf32>
    %cst_17 = arith.constant 1.280000e+02 : f32
    %21 = vector.broadcast %cst_17 : f32 to vector<16x1xf32>
    %22 = arith.divf %20, %21 : vector<16x1xf32>
    %23 = arith.mulf %17, %17 : vector<16x1xf32>
    %24 = arith.subf %22, %23 : vector<16x1xf32>
    %cst_18 = arith.constant 0.000000e+00 : f32
    %25 = vector.broadcast %cst_18 : f32 to vector<16x1xf32>
    %26 = arith.maximumf %24, %25 : vector<16x1xf32>
    %27 = vector.broadcast %17 : vector<16x1xf32> to vector<16x128xf32>
    %28 = arith.subf %11, %27 : vector<16x128xf32>
    %cst_19 = arith.constant 9.99999974E-6 : f32
    %29 = vector.broadcast %cst_19 : f32 to vector<16x1xf32>
    %30 = arith.addf %26, %29 : vector<16x1xf32>
    %31 = math.rsqrt %30 : vector<16x1xf32>
    %32 = vector.broadcast %31 : vector<16x1xf32> to vector<16x128xf32>
    %33 = arith.mulf %28, %32 : vector<16x128xf32>
    %34 = vector.broadcast %12 : vector<1x128xf32> to vector<16x128xf32>
    %35 = arith.mulf %33, %34 : vector<16x128xf32>
    %36 = vector.broadcast %13 : vector<1x128xf32> to vector<16x128xf32>
    %37 = arith.addf %35, %36 : vector<16x128xf32>
    %cst_20 = arith.constant 0.000000e+00 : f32
    %38 = vector.broadcast %cst_20 : f32 to vector<16x128xf32>
    %39 = arith.maximumf %37, %38 : vector<16x128xf32>
    %40 = arith.truncf %39 : vector<16x128xf32> to vector<16x128xbf16>
    %c0_21 = arith.constant 0 : index
    %c0_22 = arith.constant 0 : index
    %41 = vector.load %arg8[%c0_21, %c0_22] : memref<128x128xbf16, #tpu.memory_space<vmem>>, vector<128x128xbf16>
    %cst_23 = arith.constant dense<0.000000e+00> : vector<16x128xf32>
    %42 = tpu.matmul %40, %41, %cst_23 {dimension_numbers = #tpu.dot_dimension_numbers<[1], [0], [0], [1], [0, 0, 1, 1], [], []>} : vector<16x128xbf16>, vector<128x128xbf16>, vector<16x128xf32> -> vector<16x128xf32>
    %43 = arith.addf %0, %42 : vector<16x128xf32>
    %c0_24 = arith.constant 0 : index
    %c0_25 = arith.constant 0 : index
    %44 = vector.load %arg9[%c0_24, %c0_25] : memref<1x128xf32, #tpu.memory_space<vmem>>, vector<1x128xf32>
    %45 = vector.broadcast %44 : vector<1x128xf32> to vector<16x128xf32>
    %46 = arith.addf %43, %45 : vector<16x128xf32>
    %c0_26 = arith.constant 0 : index
    %c0_27 = arith.constant 0 : index
    %47 = vector.load %arg10[%c0_26, %c0_27] : memref<16x128xf32, #tpu.memory_space<vmem>>, vector<16x128xf32>
    tpu.vector_store %arg10[%c0_26, %c0_27], %46 {strides = array<i32>} : memref<16x128xf32, #tpu.memory_space<vmem>>, vector<16x128xf32>,
    return
  }
  func.func @transform_0(%arg0: i32) -> (i32, i32) {
    %c0_i32 = arith.constant 0 : i32
    %c0_i32_0 = arith.constant 0 : i32
    return %arg0, %c0_i32 : i32, i32
  }
  func.func @transform_1(%arg0: i32) -> (i32, i32) {
    %c0_i32 = arith.constant 0 : i32
    %c0_i32_0 = arith.constant 0 : i32
    return %arg0, %c0_i32 : i32, i32
  }
  func.func @transform_2(%arg0: i32) -> (i32, i32) {
    %c0_i32 = arith.constant 0 : i32
    %c0_i32_0 = arith.constant 0 : i32
    %c0_i32_1 = arith.constant 0 : i32
    return %c0_i32, %c0_i32_0 : i32, i32
  }
  func.func @transform_3(%arg0: i32) -> (i32, i32) {
    %c0_i32 = arith.constant 0 : i32
    %c0_i32_0 = arith.constant 0 : i32
    %c0_i32_1 = arith.constant 0 : i32
    return %c0_i32, %c0_i32_0 : i32, i32
  }
  func.func @transform_4(%arg0: i32) -> (i32, i32) {
    %c0_i32 = arith.constant 0 : i32
    %c0_i32_0 = arith.constant 0 : i32
    %c0_i32_1 = arith.constant 0 : i32
    return %c0_i32, %c0_i32_0 : i32, i32
  }
  func.func @transform_5(%arg0: i32) -> (i32, i32) {
    %c0_i32 = arith.constant 0 : i32
    %c0_i32_0 = arith.constant 0 : i32
    %c0_i32_1 = arith.constant 0 : i32
    return %c0_i32, %c0_i32_0 : i32, i32
  }
  func.func @transform_6(%arg0: i32) -> (i32, i32) {
    %c0_i32 = arith.constant 0 : i32
    %c0_i32_0 = arith.constant 0 : i32
    %c0_i32_1 = arith.constant 0 : i32
    return %c0_i32, %c0_i32_0 : i32, i32
  }
  func.func @transform_7(%arg0: i32) -> (i32, i32) {
    %c0_i32 = arith.constant 0 : i32
    %c0_i32_0 = arith.constant 0 : i32
    %c0_i32_1 = arith.constant 0 : i32
    return %c0_i32, %c0_i32_0 : i32, i32
  }
  func.func @transform_8(%arg0: i32) -> (i32, i32) {
    %c0_i32 = arith.constant 0 : i32
    %c0_i32_0 = arith.constant 0 : i32
    %c0_i32_1 = arith.constant 0 : i32
    return %c0_i32, %c0_i32_0 : i32, i32
  }
  func.func @transform_9(%arg0: i32) -> (i32, i32) {
    %c0_i32 = arith.constant 0 : i32
    %c0_i32_0 = arith.constant 0 : i32
    return %arg0, %c0_i32 : i32, i32
  }
}

</mosaic_0001>

<llo_original>
// kernel: graph_sampler_forward.6
$region0: #{graph_sampler_forward.6}
  #allocation0 [shape = 'u32[]', space=smem, size = 0x4, offset = 0x4, fixed_abs, tag = 'smem constant byte address 0x4 - core index']
  #allocation1 [shape = 'u32[144,128]{1,0:T(1,128)}', space=vmem, size = 0x12000, scoped, tag = 'internal scratch']
  %s0 = inlined_call_operand.hbm [shape: f32[16,128], index: 0, kind: input, shape index: {}]
  %s1 = inlined_call_operand.hbm [shape: bf16[128,128], index: 1, kind: input, shape index: {}]
  %s2 = inlined_call_operand.hbm [shape: f32[1,128], index: 2, kind: input, shape index: {}]
  %s3 = inlined_call_operand.hbm [shape: f32[1,128], index: 3, kind: input, shape index: {}]
  %s4 = inlined_call_operand.hbm [shape: f32[1,128], index: 4, kind: input, shape index: {}]
  %s5 = inlined_call_operand.hbm [shape: bf16[128,128], index: 5, kind: input, shape index: {}]
  %s6 = inlined_call_operand.hbm [shape: f32[1,128], index: 6, kind: input, shape index: {}]
  %s7 = inlined_call_operand.hbm [shape: f32[16,128], index: 7, kind: output, shape index: {}]
  %s8 = sld [smem:[#allocation0]]
  $region66: #{graph_sampler_forward.6} parent=0
    _
  %s10 = ssub.s32 1, %s8
  %s11 = scalar_select 0, %s10, %s8
  $region1: #{graph_sampler_forward.6} parent=0
    #allocation2 [shape = 'u8[8192]{0}', space=vmem, size = 0x2000, scoped, tag = 'input window, operand 0, single buffered']
    #allocation3 [shape = 's32[1]{0}', space=sflag, size = 0x4, scoped, tag = 'scoped memory for graph_sampler_forward.6']
    #allocation4 [shape = 's32[1]{0}', space=sflag, size = 0x4, scoped, tag = 'scoped memory for graph_sampler_forward.6']
    #allocation5 [shape = 'u8[32768]{0}', space=vmem, size = 0x8000, scoped, tag = 'input window, operand 1, single buffered']
    #allocation6 [shape = 's32[1]{0}', space=sflag, size = 0x4, scoped, tag = 'scoped memory for graph_sampler_forward.6']
    #allocation7 [shape = 'u8[512]{0}', space=vmem, size = 0x400, scoped, tag = 'input window, operand 2, single buffered']
    #allocation8 [shape = 'u8[512]{0}', space=vmem, size = 0x400, scoped, tag = 'input window, operand 3, single buffered']
    #allocation9 [shape = 's32[1]{0}', space=sflag, size = 0x4, scoped, tag = 'scoped memory for graph_sampler_forward.6']
    #allocation10 [shape = 'u8[512]{0}', space=vmem, size = 0x400, scoped, tag = 'input window, operand 4, single buffered']
    #allocation11 [shape = 'u8[32768]{0}', space=vmem, size = 0x8000, scoped, tag = 'input window, operand 5, single buffered']
    #allocation12 [shape = 's32[1]{0}', space=sflag, size = 0x4, scoped, tag = 'scoped memory for graph_sampler_forward.6']
    #allocation13 [shape = 'u8[512]{0}', space=vmem, size = 0x400, scoped, tag = 'input window, operand 6, single buffered']
    #allocation14 [shape = 'u8[8192]{0}', space=vmem, size = 0x2000, scoped, tag = 'output window, operand 0, single buffered']
    %12 = vsyncpa [#allocation3], 0
    %13 = vsyncpa [#allocation6], 0
    %14 = vsyncpa [#allocation9], 0
    %15 = vsyncpa [#allocation12], 0
    %16 = vsyncpa [#allocation4], 0
    // Predicated region
    $region2: #{graph_sampler_forward.6} parent=1 // pred_check
      _
    $region3: #{graph_sampler_forward.6} parent=1 // pred_check_branch
      %18 = sbr.rel (0) target = $region5
    $region4: #{graph_sampler_forward.6} parent=1 // pred_region
      %s20 = ssub.s32 256, 256
      %21 = vsyncadd [#allocation3], %s20
      %s22 = sshll.u32 [#allocation2], 4
      %s23 = int_to_ptr.vmem [resolvable:$true] %s22
      %28 = dma.hbm_to_vmem [thread:$0]  %s0, 256, %s23, [#allocation3], 128, 128, 8
    $region5: #{graph_sampler_forward.6} parent=1 // pred_fallthru
      _
    // Predicated region
    $region6: #{graph_sampler_forward.6} parent=1 // pred_check
      _
    $region7: #{graph_sampler_forward.6} parent=1 // pred_check_branch
      %30 = sbr.rel (0) target = $region9
    $region8: #{graph_sampler_forward.6} parent=1 // pred_region
      %s32 = ssub.s32 1024, 1024
      %33 = vsyncadd [#allocation6], %s32
      %s34 = sshll.u32 [#allocation5], 4
      %s35 = int_to_ptr.vmem [resolvable:$true] %s34
      %40 = dma.hbm_to_vmem [thread:$0]  %s1, 1024, %s35, [#allocation6], 64, 64, 4
    $region9: #{graph_sampler_forward.6} parent=1 // pred_fallthru
      _
    // Predicated region
    $region10: #{graph_sampler_forward.6} parent=1 // pred_check
      _
    $region11: #{graph_sampler_forward.6} parent=1 // pred_check_branch
      %42 = sbr.rel (0) target = $region13
    $region12: #{graph_sampler_forward.6} parent=1 // pred_region
      %s44 = ssub.s32 16, 16
      %45 = vsyncadd [#allocation6], %s44
      %s47 = sshll.u32 [#allocation7], 4
      %s48 = int_to_ptr.vmem [resolvable:$true] %s47
      %50 = dma.hbm_to_vmem [thread:$0]  %s2, 16, %s48, [#allocation6]
    $region13: #{graph_sampler_forward.6} parent=1 // pred_fallthru
      _
    // Predicated region
    $region14: #{graph_sampler_forward.6} parent=1 // pred_check
      _
    $region15: #{graph_sampler_forward.6} parent=1 // pred_check_branch
      %52 = sbr.rel (0) target = $region17
    $region16: #{graph_sampler_forward.6} parent=1 // pred_region
      %s54 = ssub.s32 16, 16
      %55 = vsyncadd [#allocation9], %s54
      %s57 = sshll.u32 [#allocation8], 4
      %s58 = int_to_ptr.vmem [resolvable:$true] %s57
      %60 = dma.hbm_to_vmem [thread:$0]  %s3, 16, %s58, [#allocation9]
    $region17: #{graph_sampler_forward.6} parent=1 // pred_fallthru
      _
    // Predicated region
    $region18: #{graph_sampler_forward.6} parent=1 // pred_check
      _
    $region19: #{graph_sampler_forward.6} parent=1 // pred_check_branch
      %62 = sbr.rel (0) target = $region21
    $region20: #{graph_sampler_forward.6} parent=1 // pred_region
      %s64 = ssub.s32 16, 16
      %65 = vsyncadd [#allocation9], %s64
      %s67 = sshll.u32 [#allocation10], 4
      %s68 = int_to_ptr.vmem [resolvable:$true] %s67
      %70 = dma.hbm_to_vmem [thread:$0]  %s4, 16, %s68, [#allocation9]
    $region21: #{graph_sampler_forward.6} parent=1 // pred_fallthru
      _
    // Predicated region
    $region22: #{graph_sampler_forward.6} parent=1 // pred_check
      _
    $region23: #{graph_sampler_forward.6} parent=1 // pred_check_branch
      %72 = sbr.rel (0) target = $region25
    $region24: #{graph_sampler_forward.6} parent=1 // pred_region
      %s74 = ssub.s32 1024, 1024
      %75 = vsyncadd [#allocation12], %s74
      %s76 = sshll.u32 [#allocation11], 4
      %s77 = int_to_ptr.vmem [resolvable:$true] %s76
      %82 = dma.hbm_to_vmem [thread:$0]  %s5, 1024, %s77, [#allocation12], 64, 64, 4
    $region25: #{graph_sampler_forward.6} parent=1 // pred_fallthru
      _
    // Predicated region
    $region26: #{graph_sampler_forward.6} parent=1 // pred_check
      _
    $region27: #{graph_sampler_forward.6} parent=1 // pred_check_branch
      %84 = sbr.rel (0) target = $region29
    $region28: #{graph_sampler_forward.6} parent=1 // pred_region
      %s86 = ssub.s32 16, 16
      %87 = vsyncadd [#allocation12], %s86
      %s89 = sshll.u32 [#allocation13], 4
      %s90 = int_to_ptr.vmem [resolvable:$true] %s89
      %92 = dma.hbm_to_vmem [thread:$0]  %s6, 16, %s90, [#allocation12]
    $region29: #{graph_sampler_forward.6} parent=1 // pred_fallthru
      _
    // Predicated region
    $region30: #{graph_sampler_forward.6} parent=1 // pred_check
      _
    $region31: #{graph_sampler_forward.6} parent=1 // pred_check_branch
      %94 = sbr.rel (0) target = $region33
    $region32: #{graph_sampler_forward.6} parent=1 // pred_region
      %95 = dma.done [#allocation3], 256
    $region33: #{graph_sampler_forward.6} parent=1 // pred_fallthru
      _
    // Predicated region
    $region34: #{graph_sampler_forward.6} parent=1 // pred_check
      _
    $region35: #{graph_sampler_forward.6} parent=1 // pred_check_branch
      %97 = sbr.rel (0) target = $region37
    $region36: #{graph_sampler_forward.6} parent=1 // pred_region
      %98 = dma.done [#allocation6], 1024
    $region37: #{graph_sampler_forward.6} parent=1 // pred_fallthru
      _
    // Predicated region
    $region38: #{graph_sampler_forward.6} parent=1 // pred_check
      _
    $region39: #{graph_sampler_forward.6} parent=1 // pred_check_branch
      %100 = sbr.rel (0) target = $region41
    $region40: #{graph_sampler_forward.6} parent=1 // pred_region
      %101 = dma.done [#allocation6], 16
    $region41: #{graph_sampler_forward.6} parent=1 // pred_fallthru
      _
    // Predicated region
    $region42: #{graph_sampler_forward.6} parent=1 // pred_check
      _
    $region43: #{graph_sampler_forward.6} parent=1 // pred_check_branch
      %103 = sbr.rel (0) target = $region45
    $region44: #{graph_sampler_forward.6} parent=1 // pred_region
      %104 = dma.done [#allocation9], 16
    $region45: #{graph_sampler_forward.6} parent=1 // pred_fallthru
      _
    // Predicated region
    $region46: #{graph_sampler_forward.6} parent=1 // pred_check
      _
    $region47: #{graph_sampler_forward.6} parent=1 // pred_check_branch
      %106 = sbr.rel (0) target = $region49
    $region48: #{graph_sampler_forward.6} parent=1 // pred_region
      %107 = dma.done [#allocation9], 16
    $region49: #{graph_sampler_forward.6} parent=1 // pred_fallthru
      _
    // Predicated region
    $region50: #{graph_sampler_forward.6} parent=1 // pred_check
      _
    $region51: #{graph_sampler_forward.6} parent=1 // pred_check_branch
      %109 = sbr.rel (0) target = $region53
    $region52: #{graph_sampler_forward.6} parent=1 // pred_region
      %110 = dma.done [#allocation12], 1024
    $region53: #{graph_sampler_forward.6} parent=1 // pred_fallthru
      _
    // Predicated region
    $region54: #{graph_sampler_forward.6} parent=1 // pred_check
      _
    $region55: #{graph_sampler_forward.6} parent=1 // pred_check_branch
      %112 = sbr.rel (0) target = $region57
    $region56: #{graph_sampler_forward.6} parent=1 // pred_region
      %113 = dma.done [#allocation12], 16
    $region57: #{graph_sampler_forward.6} parent=1 // pred_fallthru
      _
    %v115 = vld [vmem:[#allocation2] sm:$0xff]
    %v116 = vld [vmem:[#allocation2 + $0x8] sm:$0xff]
    %v117 = vpack.c.bf16 %v116, %v115
    %v118 = vld [vmem:[#allocation5] sm:$0xf]
    %v119 = vld [vmem:[#allocation5 + $0x4] sm:$0xf]
    %v120 = vld [vmem:[#allocation5 + $0x8] sm:$0xf]
    %v121 = vld [vmem:[#allocation5 + $0xc] sm:$0xf]
    %v122 = vld [vmem:[#allocation5 + $0x10] sm:$0xf]
    %v123 = vld [vmem:[#allocation5 + $0x14] sm:$0xf]
    %v124 = vld [vmem:[#allocation5 + $0x18] sm:$0xf]
    %v125 = vld [vmem:[#allocation5 + $0x1c] sm:$0xf]
    %v126 = vld [vmem:[#allocation5 + $0x20] sm:$0xf]
    %v127 = vld [vmem:[#allocation5 + $0x24] sm:$0xf]
    %v128 = vld [vmem:[#allocation5 + $0x28] sm:$0xf]
    %v129 = vld [vmem:[#allocation5 + $0x2c] sm:$0xf]
    %v130 = vld [vmem:[#allocation5 + $0x30] sm:$0xf]
    %v131 = vld [vmem:[#allocation5 + $0x34] sm:$0xf]
    %v132 = vld [vmem:[#allocation5 + $0x38] sm:$0xf]
    %v133 = vld [vmem:[#allocation5 + $0x3c] sm:$0xf]
    %v134 = vld [vmem:[#allocation7] sm:$0x1]
    %v136 = vlaneseq
    %v137 = vshrl.u32 %v136, 7
    %v138 = vsub.s32 0, %v137
    %v139 = vrot.slane %v134, %v138
    %v157 = vunpack.c.l.b16 %v118
    %v158 = vunpack.c.l.b16 %v119
    %v159 = vunpack.c.l.b16 %v120
    %v160 = vunpack.c.l.b16 %v121
    %v161 = vunpack.c.l.b16 %v122
    %v162 = vunpack.c.l.b16 %v123
    %v163 = vunpack.c.l.b16 %v124
    %v164 = vunpack.c.l.b16 %v125
    %v165 = vunpack.c.l.b16 %v126
    %v166 = vunpack.c.l.b16 %v127
    %v167 = vunpack.c.l.b16 %v128
    %v168 = vunpack.c.l.b16 %v129
    %v169 = vunpack.c.l.b16 %v130
    %v170 = vunpack.c.l.b16 %v131
    %v171 = vunpack.c.l.b16 %v132
    %v172 = vunpack.c.l.b16 %v133
    %v173 = vpack.c.b16 %v158, %v157
    %v174 = vpack.c.b16 %v160, %v159
    %v175 = vpack.c.b16 %v162, %v161
    %v176 = vpack.c.b16 %v164, %v163
    %v177 = vpack.c.b16 %v166, %v165
    %v178 = vpack.c.b16 %v168, %v167
    %v179 = vpack.c.b16 %v170, %v169
    %v180 = vpack.c.b16 %v172, %v171
    %189 = vmatprep.subr.bf16.mxu0 0
    %190 = vmatpush1.bf16.msra.mxu0 %v173
    %191 = vmatprep.subr.bf16.mxu0 0
    %192 = vmatpush1.bf16.msra.mxu0 %v174
    %193 = vmatprep.subr.bf16.mxu0 0
    %194 = vmatpush1.bf16.msra.mxu0 %v175
    %195 = vmatprep.subr.bf16.mxu0 0
    %196 = vmatpush1.bf16.msra.mxu0 %v176
    %197 = vmatprep.subr.bf16.mxu0 0
    %198 = vmatpush1.bf16.msra.mxu0 %v177
    %199 = vmatprep.subr.bf16.mxu0 0
    %200 = vmatpush1.bf16.msra.mxu0 %v178
    %201 = vmatprep.subr.bf16.mxu0 0
    %202 = vmatpush1.bf16.msra.mxu0 %v179
    %203 = vmatprep.subr.bf16.mxu0 0
    %204 = vmatpush1.bf16.msra.mxu0 %v180
    %205 = vmatprep.subr.bf16.mxu0 0
    %206 = vmatpush1.bf16.msra.mxu0 0
    %207 = vmatprep.subr.bf16.mxu0 0
    %208 = vmatpush1.bf16.msra.mxu0 0
    %209 = vmatprep.subr.bf16.mxu0 0
    %210 = vmatpush1.bf16.msra.mxu0 0
    %211 = vmatprep.subr.bf16.mxu0 0
    %212 = vmatpush1.bf16.msra.mxu0 0
    %213 = vmatprep.subr.bf16.mxu0 0
    %214 = vmatpush1.bf16.msra.mxu0 0
    %215 = vmatprep.subr.bf16.mxu0 0
    %216 = vmatpush1.bf16.msra.mxu0 0
    %217 = vmatprep.subr.bf16.mxu0 0
    %218 = vmatpush1.bf16.msra.mxu0 0
    %219 = vmatprep.subr.bf16.mxu0 0
    %220 = vmatpush1.bf16.msra.mxu0 0
    %221 = vmatprep.mubr.bf16.mxu0 0
    %222 = vmatmul.mubr.bf16.gmra.mrb[0].mxu0 %v117
    %v223 = vpop.f32.mrb[0].mxu0
    %v224 = vadd.f32 %v139, %v223
    %v225 = vpop.f32.mrb[0].mxu0
    %v226 = vpop.f32.mrb[0].mxu0
    %v227 = vadd.f32 %v139, %v226
    %v228 = vpop.f32.mrb[0].mxu0
    %229 = vdwg.mxu0
    %v230 = vld [vmem:[#allocation8] sm:$0x1]
    %v231 = vld [vmem:[#allocation10] sm:$0x1]
    %232 = vadd.xlane.f32.xlu0 %v224
    %v233 = vpop.xlane.xlu0 %232
    %234 = vadd.xlane.f32.xlu0 %v227
    %v235 = vpop.xlane.xlu0 %234
    %v236 = vrcp.pop 128.0
    %v237 = vmul.f32 %v233, %v236
    %v238 = vmul.f32 %v235, %v236
    %v239 = vmul.f32 %v224, %v224
    %v240 = vmul.f32 %v227, %v227
    %241 = vadd.xlane.f32.xlu0 %v239
    %v242 = vpop.xlane.xlu0 %241
    %243 = vadd.xlane.f32.xlu0 %v240
    %v244 = vpop.xlane.xlu0 %243
    %v245 = vmul.f32 %v242, %v236
    %v246 = vmul.f32 %v244, %v236
    %v247 = vmul.f32 %v237, %v237
    %v248 = vmul.f32 %v238, %v238
    %v249 = vsub.f32 %v245, %v247
    %v250 = vsub.f32 %v246, %v248
    %v251 = vmax.f32 %v249, 0.0
    %v252 = vmax.f32 %v250, 0.0
    %v253 = vsub.f32 %v224, %v237
    %v254 = vsub.f32 %v227, %v238
    %v255 = vadd.f32 %v251, 1e-05
    %v256 = vadd.f32 %v252, 1e-05
    %v257 = vrsqrt.pop %v255
    %v258 = vrsqrt.pop %v256
    %v259 = vmul.f32 %v253, %v257
    %v260 = vmul.f32 %v254, %v258
    %v262 = vlaneseq
    %v263 = vshrl.u32 %v262, 7
    %v264 = vsub.s32 0, %v263
    %v265 = vrot.slane %v230, %v264
    %v267 = vmul.f32 %v259, %v265
    %v268 = vmul.f32 %v260, %v265
    %v270 = vlaneseq
    %v271 = vshrl.u32 %v270, 7
    %v272 = vsub.s32 0, %v271
    %v273 = vrot.slane %v231, %v272
    %v275 = vadd.f32 %v267, %v273
    %v276 = vadd.f32 %v268, %v273
    %v277 = vmax.f32 %v275, 0.0
    %v278 = vmax.f32 %v276, 0.0
    %v279 = vpack.c.bf16 %v278, %v277
    %v280 = vld [vmem:[#allocation11] sm:$0xf]
    %v281 = vld [vmem:[#allocation11 + $0x4] sm:$0xf]
    %v282 = vld [vmem:[#allocation11 + $0x8] sm:$0xf]
    %v283 = vld [vmem:[#allocation11 + $0xc] sm:$0xf]
    %v284 = vld [vmem:[#allocation11 + $0x10] sm:$0xf]
    %v285 = vld [vmem:[#allocation11 + $0x14] sm:$0xf]
    %v286 = vld [vmem:[#allocation11 + $0x18] sm:$0xf]
    %v287 = vld [vmem:[#allocation11 + $0x1c] sm:$0xf]
    %v288 = vld [vmem:[#allocation11 + $0x20] sm:$0xf]
    %v289 = vld [vmem:[#allocation11 + $0x24] sm:$0xf]
    %v290 = vld [vmem:[#allocation11 + $0x28] sm:$0xf]
    %v291 = vld [vmem:[#allocation11 + $0x2c] sm:$0xf]
    %v292 = vld [vmem:[#allocation11 + $0x30] sm:$0xf]
    %v293 = vld [vmem:[#allocation11 + $0x34] sm:$0xf]
    %v294 = vld [vmem:[#allocation11 + $0x38] sm:$0xf]
    %v295 = vld [vmem:[#allocation11 + $0x3c] sm:$0xf]
    %v296 = vld [vmem:[#allocation13] sm:$0x1]
    %v298 = vlaneseq
    %v299 = vshrl.u32 %v298, 7
    %v300 = vsub.s32 0, %v299
    %v301 = vrot.slane %v296, %v300
    %v319 = vunpack.c.l.b16 %v280
    %v320 = vunpack.c.l.b16 %v281
    %v321 = vunpack.c.l.b16 %v282
    %v322 = vunpack.c.l.b16 %v283
    %v323 = vunpack.c.l.b16 %v284
    %v324 = vunpack.c.l.b16 %v285
    %v325 = vunpack.c.l.b16 %v286
    %v326 = vunpack.c.l.b16 %v287
    %v327 = vunpack.c.l.b16 %v288
    %v328 = vunpack.c.l.b16 %v289
    %v329 = vunpack.c.l.b16 %v290
    %v330 = vunpack.c.l.b16 %v291
    %v331 = vunpack.c.l.b16 %v292
    %v332 = vunpack.c.l.b16 %v293
    %v333 = vunpack.c.l.b16 %v294
    %v334 = vunpack.c.l.b16 %v295
    %v335 = vpack.c.b16 %v320, %v319
    %v336 = vpack.c.b16 %v322, %v321
    %v337 = vpack.c.b16 %v324, %v323
    %v338 = vpack.c.b16 %v326, %v325
    %v339 = vpack.c.b16 %v328, %v327
    %v340 = vpack.c.b16 %v330, %v329
    %v341 = vpack.c.b16 %v332, %v331
    %v342 = vpack.c.b16 %v334, %v333
    %351 = vmatprep.subr.bf16.mxu0 0
    %352 = vmatpush1.bf16.msra.mxu0 %v335
    %353 = vmatprep.subr.bf16.mxu0 0
    %354 = vmatpush1.bf16.msra.mxu0 %v336
    %355 = vmatprep.subr.bf16.mxu0 0
    %356 = vmatpush1.bf16.msra.mxu0 %v337
    %357 = vmatprep.subr.bf16.mxu0 0
    %358 = vmatpush1.bf16.msra.mxu0 %v338
    %359 = vmatprep.subr.bf16.mxu0 0
    %360 = vmatpush1.bf16.msra.mxu0 %v339
    %361 = vmatprep.subr.bf16.mxu0 0
    %362 = vmatpush1.bf16.msra.mxu0 %v340
    %363 = vmatprep.subr.bf16.mxu0 0
    %364 = vmatpush1.bf16.msra.mxu0 %v341
    %365 = vmatprep.subr.bf16.mxu0 0
    %366 = vmatpush1.bf16.msra.mxu0 %v342
    %367 = vmatprep.subr.bf16.mxu0 0
    %368 = vmatpush1.bf16.msra.mxu0 0
    %369 = vmatprep.subr.bf16.mxu0 0
    %370 = vmatpush1.bf16.msra.mxu0 0
    %371 = vmatprep.subr.bf16.mxu0 0
    %372 = vmatpush1.bf16.msra.mxu0 0
    %373 = vmatprep.subr.bf16.mxu0 0
    %374 = vmatpush1.bf16.msra.mxu0 0
    %375 = vmatprep.subr.bf16.mxu0 0
    %376 = vmatpush1.bf16.msra.mxu0 0
    %377 = vmatprep.subr.bf16.mxu0 0
    %378 = vmatpush1.bf16.msra.mxu0 0
    %379 = vmatprep.subr.bf16.mxu0 0
    %380 = vmatpush1.bf16.msra.mxu0 0
    %381 = vmatprep.subr.bf16.mxu0 0
    %382 = vmatpush1.bf16.msra.mxu0 0
    %383 = vmatprep.mubr.bf16.mxu0 0
    %384 = vmatmul.mubr.bf16.gmra.mrb[0].mxu0 %v279
    %v385 = vpop.f32.mrb[0].mxu0
    %v386 = vadd.f32 %v301, %v385
    %v387 = vpop.f32.mrb[0].mxu0
    %v388 = vpop.f32.mrb[0].mxu0
    %v389 = vadd.f32 %v301, %v388
    %v390 = vpop.f32.mrb[0].mxu0
    %391 = vdwg.mxu0
    %392 = vst [vmem:[#allocation14] sm:$0xff] %v386
    %393 = vst [vmem:[#allocation14 + $0x8] sm:$0xff] %v389
    // Predicated region
    $region58: #{graph_sampler_forward.6} parent=1 // pred_check
      _
    $region59: #{graph_sampler_forward.6} parent=1 // pred_check_branch
      %395 = sbr.rel (0) target = $region61
    $region60: #{graph_sampler_forward.6} parent=1 // pred_region
      %s397 = ssub.s32 256, 256
      %398 = vsyncadd [#allocation4], %s397
      %s399 = sshll.u32 [#allocation14], 4
      %s400 = int_to_ptr.vmem [resolvable:$true] %s399
      %405 = dma.vmem_to_hbm [thread:$0]  %s400, 256, %s7, [#allocation4], 128, 128, 8
    $region61: #{graph_sampler_forward.6} parent=1 // pred_fallthru
      _
    // Predicated region
    $region62: #{graph_sampler_forward.6} parent=1 // pred_check
      _
    $region63: #{graph_sampler_forward.6} parent=1 // pred_check_branch
      %407 = sbr.rel (0) target = $region65
    $region64: #{graph_sampler_forward.6} parent=1 // pred_region
      %408 = dma.done [#allocation4], 256
    $region65: #{graph_sampler_forward.6} parent=1 // pred_fallthru
      _
    %409 = vsyncpa [#allocation3], 1
    %410 = vsyncpa [#allocation6], 1
    %411 = vsyncpa [#allocation9], 1
    %412 = vsyncpa [#allocation12], 1
    %413 = vsyncpa [#allocation4], 1

// kernel: graph_sampler_forward.7
$region0: #{graph_sampler_forward.7}
  #allocation0 [shape = 'u32[]', space=smem, size = 0x4, offset = 0x4, fixed_abs, tag = 'smem constant byte address 0x4 - core index']
  #allocation1 [shape = 'u32[144,128]{1,0:T(1,128)}', space=vmem, size = 0x12000, scoped, tag = 'internal scratch']
  %s0 = inlined_call_operand.hbm [shape: f32[2,8,3], index: 0, kind: input, shape index: {}, may-alias: {0,1}]
  %s1 = inlined_call_operand.hbm [shape: f32[2,8,3], index: 1, kind: input, shape index: {}, may-alias: {0,1}]
  %s2 = inlined_call_operand.hbm [shape: f32[1,64], index: 2, kind: input, shape index: {}]
  %s3 = inlined_call_operand.hbm [shape: f32[1,64], index: 3, kind: input, shape index: {}]
  %s4 = inlined_call_operand.hbm [shape: f32[1,64], index: 4, kind: input, shape index: {}]
  %s5 = inlined_call_operand.hbm [shape: f32[1,64], index: 5, kind: input, shape index: {}]
  %s6 = inlined_call_operand.hbm [shape: bf16[2,8,8,64], index: 6, kind: output, shape index: {0}]
  %s7 = inlined_call_operand.hbm [shape: f32[2,8,8], index: 7, kind: output, shape index: {1}]
  %s8 = inlined_call_operand.hbm [shape: f32[2,8,64], index: 8, kind: output, shape index: {2}]
  %9 = xla_tuple %s6, %s7, %s8
  %s10 = sld [smem:[#allocation0]]
  $region97: #{graph_sampler_forward.7} parent=0
    _
  %s12 = ssub.s32 1, %s10
  %s13 = scalar_select 0, %s12, %s10
  $region1: #{graph_sampler_forward.7} parent=0
    #allocation2 [shape = 'u8[8192]{0}', space=vmem, size = 0x2000, scoped, tag = 'input window, operand 0']
    #allocation3 [shape = 's32[2]{0}', space=sflag, size = 0x8, scoped, tag = 'scoped memory for graph_sampler_forward.7']
    #allocation4 [shape = 's32[2]{0}', space=sflag, size = 0x8, scoped, tag = 'scoped memory for graph_sampler_forward.7']
    #allocation5 [shape = 'u8[8192]{0}', space=vmem, size = 0x2000, scoped, tag = 'input window, operand 1']
    #allocation6 [shape = 's32[2]{0}', space=sflag, size = 0x8, scoped, tag = 'scoped memory for graph_sampler_forward.7']
    #allocation7 [shape = 'u8[512]{0}', space=vmem, size = 0x400, scoped, tag = 'input window, operand 2, single buffered']
    #allocation8 [shape = 'u8[512]{0}', space=vmem, size = 0x400, scoped, tag = 'input window, operand 3, single buffered']
    #allocation9 [shape = 's32[1]{0}', space=sflag, size = 0x4, scoped, tag = 'scoped memory for graph_sampler_forward.7']
    #allocation10 [shape = 'u8[512]{0}', space=vmem, size = 0x400, scoped, tag = 'input window, operand 4, single buffered']
    #allocation11 [shape = 'u8[512]{0}', space=vmem, size = 0x400, scoped, tag = 'input window, operand 5, single buffered']
    #allocation12 [shape = 's32[1]{0}', space=sflag, size = 0x4, scoped, tag = 'scoped memory for graph_sampler_forward.7']
    #allocation13 [shape = 'u8[32768]{0}', space=vmem, size = 0x8000, scoped, tag = 'output window, operand 0']
    #allocation14 [shape = 'u8[8192]{0}', space=vmem, size = 0x2000, scoped, tag = 'output window, operand 1']
    #allocation15 [shape = 's32[2]{0}', space=sflag, size = 0x8, scoped, tag = 'scoped memory for graph_sampler_forward.7']
    #allocation16 [shape = 'u8[8192]{0}', space=vmem, size = 0x2000, scoped, tag = 'output window, operand 2']
    %14 = vsyncpa [#allocation3], 0
    %s15 = scalar_lea.sflag [#allocation3], 1
    %16 = vsyncpa %s15, 0
    %17 = vsyncpa [#allocation6], 0
    %s18 = scalar_lea.sflag [#allocation6], 1
    %19 = vsyncpa %s18, 0
    %20 = vsyncpa [#allocation9], 0
    %21 = vsyncpa [#allocation12], 0
    %22 = vsyncpa [#allocation4], 0
    %s23 = scalar_lea.sflag [#allocation4], 1
    %24 = vsyncpa %s23, 0
    %25 = vsyncpa [#allocation15], 0
    %s26 = scalar_lea.sflag [#allocation15], 1
    %27 = vsyncpa %s26, 0
    loop: start=0, step=1, limit=4
    $region2: #{graph_sampler_forward.7} parent=1 // loop_pre_header
      _
    $region3: #{graph_sampler_forward.7} parent=1 // loop_header
      %s29 = sphi 0, %s33
      %p30 = scmp.ge.s32.totalorder %s29, 4
      %s36 = sphi 0, %s48
      %s37 = sphi 0, %s44
      %s38 = sphi 0, %s36
      %s39 = sphi 0, %s37
      %s40 = sphi 0, %s38
      %s41 = sphi 0, %s39
      %s53 = sphi 0, %s55
      %s56 = sphi 0, %s53
      %s57 = sphi 0, %s56
      %s73 = sphi 0, %s57
      %s79 = sphi 0, %s81
      %s82 = sphi 0, %s79
      %s83 = sphi 0, %s82
      %s99 = sphi 0, %s83
      %s103 = sphi 0, %s103
      %s105 = sphi 0, %s103
      %s106 = sphi 0, %s105
      %s120 = sphi 0, %s106
      %s124 = sphi 0, %s124
      %s126 = sphi 0, %s124
      %s127 = sphi 0, %s126
      %s141 = sphi 0, %s127
      %s145 = sphi 0, %s145
      %s147 = sphi 0, %s145
      %s148 = sphi 0, %s147
      %s162 = sphi 0, %s148
      %s166 = sphi 0, %s166
      %s168 = sphi 0, %s166
      %s169 = sphi 0, %s168
      %s183 = sphi 0, %s169
      %s191 = sphi 0, %s193
      %s194 = sphi 0, %s191
      %s195 = sphi 0, %s194
      %s211 = sphi 0, %s195
      %s219 = sphi 0, %s221
      %s222 = sphi 0, %s219
      %s223 = sphi 0, %s222
      %s239 = sphi 0, %s223
      %s247 = sphi 0, %s249
      %s250 = sphi 0, %s247
      %s251 = sphi 0, %s250
      %s267 = sphi 0, %s251
    $region4: #{graph_sampler_forward.7} parent=1 // loop_header_branch
      %32 = sbr.rel (%p30) target = $region8
    $region5: #{graph_sampler_forward.7} parent=1 // loop_body
      %s34 = ssub.s32 %s29, 1
      %s35 = ssub.s32 %s29, 2
      %s42 = sadd.s32 1, %s37
      %p43 = scmp.ge.s32.totalorder %s42, 1
      %s44 = scalar_select %p43, 0, %s42
      %s45 = sadd.s32 1, %s36
      %s46 = scalar_select %p43, %s45, %s36
      %p47 = scmp.ge.s32.totalorder %s46, 2
      %s48 = scalar_select %p47, 0, %s46
      %s49 = ssub.s32 %s36, %s48
      %s50 = ssub.s32 %s37, %s44
      %s51 = sor.u32 %s49, %s50
      %p52 = scmp.eq.s32.totalorder %s51, 0
      %s54 = sadd.s32 %s53, 1
      %s55 = scalar_select %p52, %s53, %s54
      %p58 = pneg %p52
      %p59 = scmp.eq.s32.totalorder %s29, 1
      %p60 = por %p58, %p59
      %p61 = scmp.ne.s32.totalorder %s53, %s56
      %p62 = scmp.eq.s32.totalorder %s29, 0
      %p63 = por %p61, %p62
      %p64 = scmp.ne.s32.totalorder %s53, %s56
      %p65 = scmp.eq.s32.totalorder %s34, 1
      %p66 = por %p64, %p65
      %p67 = scmp.ne.s32.totalorder %s56, %s57
      %p68 = scmp.eq.s32.totalorder %s34, 0
      %p69 = por %p67, %p68
      %p70 = scmp.ne.s32.totalorder %s56, %s57
      %p71 = scmp.eq.s32.totalorder %s35, 1
      %p72 = por %p70, %p71
      %p74 = scmp.ne.s32.totalorder %s57, %s73
      %p75 = scmp.eq.s32.totalorder %s35, 0
      %p76 = por %p74, %p75
      %s77 = ssub.s32 %s36, %s48
      %p78 = scmp.eq.s32.totalorder %s77, 0
      %s80 = sadd.s32 %s79, 1
      %s81 = scalar_select %p78, %s79, %s80
      %p84 = pneg %p78
      %p85 = scmp.eq.s32.totalorder %s29, 1
      %p86 = por %p84, %p85
      %p87 = scmp.ne.s32.totalorder %s79, %s82
      %p88 = scmp.eq.s32.totalorder %s29, 0
      %p89 = por %p87, %p88
      %p90 = scmp.ne.s32.totalorder %s79, %s82
      %p91 = scmp.eq.s32.totalorder %s34, 1
      %p92 = por %p90, %p91
      %p93 = scmp.ne.s32.totalorder %s82, %s83
      %p94 = scmp.eq.s32.totalorder %s34, 0
      %p95 = por %p93, %p94
      %p96 = scmp.ne.s32.totalorder %s82, %s83
      %p97 = scmp.eq.s32.totalorder %s35, 1
      %p98 = por %p96, %p97
      %p100 = scmp.ne.s32.totalorder %s83, %s99
      %p101 = scmp.eq.s32.totalorder %s35, 0
      %p102 = por %p100, %p101
      %s104 = sadd.s32 %s103, 1
      %p107 = scmp.eq.s32.totalorder %s29, 1
      %p108 = scmp.ne.s32.totalorder %s103, %s105
      %p109 = scmp.eq.s32.totalorder %s29, 0
      %p110 = por %p108, %p109
      %p111 = scmp.ne.s32.totalorder %s103, %s105
      %p112 = scmp.eq.s32.totalorder %s34, 1
      %p113 = por %p111, %p112
      %p114 = scmp.ne.s32.totalorder %s105, %s106
      %p115 = scmp.eq.s32.totalorder %s34, 0
      %p116 = por %p114, %p115
      %p117 = scmp.ne.s32.totalorder %s105, %s106
      %p118 = scmp.eq.s32.totalorder %s35, 1
      %p119 = por %p117, %p118
      %p121 = scmp.ne.s32.totalorder %s106, %s120
      %p122 = scmp.eq.s32.totalorder %s35, 0
      %p123 = por %p121, %p122
      %s125 = sadd.s32 %s124, 1
      %p128 = scmp.eq.s32.totalorder %s29, 1
      %p129 = scmp.ne.s32.totalorder %s124, %s126
      %p130 = scmp.eq.s32.totalorder %s29, 0
      %p131 = por %p129, %p130
      %p132 = scmp.ne.s32.totalorder %s124, %s126
      %p133 = scmp.eq.s32.totalorder %s34, 1
      %p134 = por %p132, %p133
      %p135 = scmp.ne.s32.totalorder %s126, %s127
      %p136 = scmp.eq.s32.totalorder %s34, 0
      %p137 = por %p135, %p136
      %p138 = scmp.ne.s32.totalorder %s126, %s127
      %p139 = scmp.eq.s32.totalorder %s35, 1
      %p140 = por %p138, %p139
      %p142 = scmp.ne.s32.totalorder %s127, %s141
      %p143 = scmp.eq.s32.totalorder %s35, 0
      %p144 = por %p142, %p143
      %s146 = sadd.s32 %s145, 1
      %p149 = scmp.eq.s32.totalorder %s29, 1
      %p150 = scmp.ne.s32.totalorder %s145, %s147
      %p151 = scmp.eq.s32.totalorder %s29, 0
      %p152 = por %p150, %p151
      %p153 = scmp.ne.s32.totalorder %s145, %s147
      %p154 = scmp.eq.s32.totalorder %s34, 1
      %p155 = por %p153, %p154
      %p156 = scmp.ne.s32.totalorder %s147, %s148
      %p157 = scmp.eq.s32.totalorder %s34, 0
      %p158 = por %p156, %p157
      %p159 = scmp.ne.s32.totalorder %s147, %s148
      %p160 = scmp.eq.s32.totalorder %s35, 1
      %p161 = por %p159, %p160
      %p163 = scmp.ne.s32.totalorder %s148, %s162
      %p164 = scmp.eq.s32.totalorder %s35, 0
      %p165 = por %p163, %p164
      %s167 = sadd.s32 %s166, 1
      %p170 = scmp.eq.s32.totalorder %s29, 1
      %p171 = scmp.ne.s32.totalorder %s166, %s168
      %p172 = scmp.eq.s32.totalorder %s29, 0
      %p173 = por %p171, %p172
      %p174 = scmp.ne.s32.totalorder %s166, %s168
      %p175 = scmp.eq.s32.totalorder %s34, 1
      %p176 = por %p174, %p175
      %p177 = scmp.ne.s32.totalorder %s168, %s169
      %p178 = scmp.eq.s32.totalorder %s34, 0
      %p179 = por %p177, %p178
      %p180 = scmp.ne.s32.totalorder %s168, %s169
      %p181 = scmp.eq.s32.totalorder %s35, 1
      %p182 = por %p180, %p181
      %p184 = scmp.ne.s32.totalorder %s169, %s183
      %p185 = scmp.eq.s32.totalorder %s35, 0
      %p186 = por %p184, %p185
      %s187 = ssub.s32 %s36, %s48
      %s188 = ssub.s32 %s37, %s44
      %s189 = sor.u32 %s187, %s188
      %p190 = scmp.eq.s32.totalorder %s189, 0
      %s192 = sadd.s32 %s191, 1
      %s193 = scalar_select %p190, %s191, %s192
      %p196 = pneg %p190
      %p197 = scmp.eq.s32.totalorder %s29, 1
      %p198 = por %p196, %p197
      %p199 = scmp.ne.s32.totalorder %s191, %s194
      %p200 = scmp.eq.s32.totalorder %s29, 0
      %p201 = por %p199, %p200
      %p202 = scmp.ne.s32.totalorder %s191, %s194
      %p203 = scmp.eq.s32.totalorder %s34, 1
      %p204 = por %p202, %p203
      %p205 = scmp.ne.s32.totalorder %s194, %s195
      %p206 = scmp.eq.s32.totalorder %s34, 0
      %p207 = por %p205, %p206
      %p208 = scmp.ne.s32.totalorder %s194, %s195
      %p209 = scmp.eq.s32.totalorder %s35, 1
      %p210 = por %p208, %p209
      %p212 = scmp.ne.s32.totalorder %s195, %s211
      %p213 = scmp.eq.s32.totalorder %s35, 0
      %p214 = por %p212, %p213
      %s215 = ssub.s32 %s36, %s48
      %s216 = ssub.s32 %s37, %s44
      %s217 = sor.u32 %s215, %s216
      %p218 = scmp.eq.s32.totalorder %s217, 0
      %s220 = sadd.s32 %s219, 1
      %s221 = scalar_select %p218, %s219, %s220
      %p224 = pneg %p218
      %p225 = scmp.eq.s32.totalorder %s29, 1
      %p226 = por %p224, %p225
      %p227 = scmp.ne.s32.totalorder %s219, %s222
      %p228 = scmp.eq.s32.totalorder %s29, 0
      %p229 = por %p227, %p228
      %p230 = scmp.ne.s32.totalorder %s219, %s222
      %p231 = scmp.eq.s32.totalorder %s34, 1
      %p232 = por %p230, %p231
      %p233 = scmp.ne.s32.totalorder %s222, %s223
      %p234 = scmp.eq.s32.totalorder %s34, 0
      %p235 = por %p233, %p234
      %p236 = scmp.ne.s32.totalorder %s222, %s223
      %p237 = scmp.eq.s32.totalorder %s35, 1
      %p238 = por %p236, %p237
      %p240 = scmp.ne.s32.totalorder %s223, %s239
      %p241 = scmp.eq.s32.totalorder %s35, 0
      %p242 = por %p240, %p241
      %s243 = ssub.s32 %s36, %s48
      %s244 = ssub.s32 %s37, %s44
      %s245 = sor.u32 %s243, %s244
      %p246 = scmp.eq.s32.totalorder %s245, 0
      %s248 = sadd.s32 %s247, 1
      %s249 = scalar_select %p246, %s247, %s248
      %p252 = pneg %p246
      %p253 = scmp.eq.s32.totalorder %s29, 1
      %p254 = por %p252, %p253
      %p255 = scmp.ne.s32.totalorder %s247, %s250
      %p256 = scmp.eq.s32.totalorder %s29, 0
      %p257 = por %p255, %p256
      %p258 = scmp.ne.s32.totalorder %s247, %s250
      %p259 = scmp.eq.s32.totalorder %s34, 1
      %p260 = por %p258, %p259
      %p261 = scmp.ne.s32.totalorder %s250, %s251
      %p262 = scmp.eq.s32.totalorder %s34, 0
      %p263 = por %p261, %p262
      %p264 = scmp.ne.s32.totalorder %s250, %s251
      %p265 = scmp.eq.s32.totalorder %s35, 1
      %p266 = por %p264, %p265
      %p268 = scmp.ne.s32.totalorder %s251, %s267
      %p269 = scmp.eq.s32.totalorder %s35, 0
      %p270 = por %p268, %p269
      %p271 = scmp.le.s32.totalorder 1, %s29
      %p272 = scmp.lt.s32.totalorder %s29, 3
      %p273 = pnand %p271, %p272
      %p274 = pneg %p273
      // Predicated region
      $region9: #{graph_sampler_forward.7} parent=5 // pred_check
        _
      $region10: #{graph_sampler_forward.7} parent=5 // pred_check_branch
        %276 = sbr.rel (%p273) target = $region12
      $region11: #{graph_sampler_forward.7} parent=5 // pred_region
        %s277 = ssub.s32 %s29, 1
        // Predicated region
        $region13: #{graph_sampler_forward.7} parent=11 // pred_check
          %p278 = pneg %p116
        $region14: #{graph_sampler_forward.7} parent=11 // pred_check_branch
          %280 = sbr.rel (%p278) target = $region16
        $region15: #{graph_sampler_forward.7} parent=11 // pred_region
          %s282 = ssub.s32 16, 16
          %283 = vsyncadd [#allocation6], %s282
          %s285 = sshll.u32 [#allocation7], 4
          %s286 = int_to_ptr.vmem [resolvable:$true] %s285
          %288 = dma.hbm_to_vmem [thread:$0]  %s2, 16, %s286, [#allocation6]
        $region16: #{graph_sampler_forward.7} parent=11 // pred_fallthru
          _
        // Predicated region
        $region17: #{graph_sampler_forward.7} parent=11 // pred_check
          %p289 = pneg %p137
        $region18: #{graph_sampler_forward.7} parent=11 // pred_check_branch
          %291 = sbr.rel (%p289) target = $region20
        $region19: #{graph_sampler_forward.7} parent=11 // pred_region
          %s293 = ssub.s32 16, 16
          %294 = vsyncadd [#allocation9], %s293
          %s296 = sshll.u32 [#allocation8], 4
          %s297 = int_to_ptr.vmem [resolvable:$true] %s296
          %299 = dma.hbm_to_vmem [thread:$0]  %s3, 16, %s297, [#allocation9]
        $region20: #{graph_sampler_forward.7} parent=11 // pred_fallthru
          _
        // Predicated region
        $region21: #{graph_sampler_forward.7} parent=11 // pred_check
          %p300 = pneg %p158
        $region22: #{graph_sampler_forward.7} parent=11 // pred_check_branch
          %302 = sbr.rel (%p300) target = $region24
        $region23: #{graph_sampler_forward.7} parent=11 // pred_region
          %s304 = ssub.s32 16, 16
          %305 = vsyncadd [#allocation9], %s304
          %s307 = sshll.u32 [#allocation10], 4
          %s308 = int_to_ptr.vmem [resolvable:$true] %s307
          %310 = dma.hbm_to_vmem [thread:$0]  %s4, 16, %s308, [#allocation9]
        $region24: #{graph_sampler_forward.7} parent=11 // pred_fallthru
          _
        // Predicated region
        $region25: #{graph_sampler_forward.7} parent=11 // pred_check
          %p311 = pneg %p179
        $region26: #{graph_sampler_forward.7} parent=11 // pred_check_branch
          %313 = sbr.rel (%p311) target = $region28
        $region27: #{graph_sampler_forward.7} parent=11 // pred_region
          %s315 = ssub.s32 16, 16
          %316 = vsyncadd [#allocation12], %s315
          %s318 = sshll.u32 [#allocation11], 4
          %s319 = int_to_ptr.vmem [resolvable:$true] %s318
          %321 = dma.hbm_to_vmem [thread:$0]  %s5, 16, %s319, [#allocation12]
        $region28: #{graph_sampler_forward.7} parent=11 // pred_fallthru
          _
      $region12: #{graph_sampler_forward.7} parent=5 // pred_fallthru
        _
      %p322 = scmp.lt.s32.totalorder %s29, 2
      // Predicated region
      $region29: #{graph_sampler_forward.7} parent=5 // pred_check
        %p323 = pneg %p322
      $region30: #{graph_sampler_forward.7} parent=5 // pred_check_branch
        %325 = sbr.rel (%p323) target = $region32
      $region31: #{graph_sampler_forward.7} parent=5 // pred_region
        // Predicated region
        $region33: #{graph_sampler_forward.7} parent=31 // pred_check
          %p326 = pneg %p63
        $region34: #{graph_sampler_forward.7} parent=31 // pred_check_branch
          %328 = sbr.rel (%p326) target = $region36
        $region35: #{graph_sampler_forward.7} parent=31 // pred_region
          %s329 = sand.u32 %s53, 1
          %s330 = scalar_lea.sflag [#allocation3], %s329
          %s331 = sand.u32 %s53, 1
          %s332 = smul.addr %s331, 8
          %s333 = scalar_lea.vmem [#allocation2], %s332
          %s335 = ssub.s32 128, 128
          %336 = vsyncadd %s330, %s335
          %s337 = sadd.s32 %s37, %s36
          %s338 = smul.addr %s337, 128
          %s339 = scalar_lea.hbm %s0, %s338
          %s341 = sshll.u32 %s333, 4
          %s342 = int_to_ptr.vmem [resolvable:$true] %s341
          %344 = dma.hbm_to_vmem [thread:$0]  %s339, 128, %s342, %s330
        $region36: #{graph_sampler_forward.7} parent=31 // pred_fallthru
          _
        // Predicated region
        $region37: #{graph_sampler_forward.7} parent=31 // pred_check
          %p345 = pneg %p89
        $region38: #{graph_sampler_forward.7} parent=31 // pred_check_branch
          %347 = sbr.rel (%p345) target = $region40
        $region39: #{graph_sampler_forward.7} parent=31 // pred_region
          %s348 = sand.u32 %s29, 1
          %s349 = scalar_lea.sflag [#allocation6], %s348
          %s350 = sand.u32 %s79, 1
          %s351 = smul.addr %s350, 8
          %s352 = scalar_lea.vmem [#allocation5], %s351
          %s354 = ssub.s32 128, 128
          %355 = vsyncadd %s349, %s354
          %s356 = smul.addr %s36, 128
          %s357 = scalar_lea.hbm %s1, %s356
          %s359 = sshll.u32 %s352, 4
          %s360 = int_to_ptr.vmem [resolvable:$true] %s359
          %362 = dma.hbm_to_vmem [thread:$0]  %s357, 128, %s360, %s349
        $region40: #{graph_sampler_forward.7} parent=31 // pred_fallthru
          _
      $region32: #{graph_sampler_forward.7} parent=5 // pred_fallthru
        _
      %p363 = scmp.le.s32.totalorder 1, %s29
      %p364 = scmp.lt.s32.totalorder %s29, 3
      %p365 = pnand %p363, %p364
      %p366 = pneg %p365
      // Predicated region
      $region41: #{graph_sampler_forward.7} parent=5 // pred_check
        _
      $region42: #{graph_sampler_forward.7} parent=5 // pred_check_branch
        %368 = sbr.rel (%p365) target = $region44
      $region43: #{graph_sampler_forward.7} parent=5 // pred_region
        %s369 = ssub.s32 %s29, 1
        %s370 = sand.u32 %s56, 1
        %s371 = scalar_lea.sflag [#allocation3], %s370
        %s372 = sand.u32 %s56, 1
        %s373 = smul.addr %s372, 8
        %s374 = scalar_lea.vmem [#allocation2], %s373
        // Predicated region
        $region45: #{graph_sampler_forward.7} parent=43 // pred_check
          %p375 = pneg %p69
        $region46: #{graph_sampler_forward.7} parent=43 // pred_check_branch
          %377 = sbr.rel (%p375) target = $region48
        $region47: #{graph_sampler_forward.7} parent=43 // pred_region
          %378 = dma.done %s371, 128
        $region48: #{graph_sampler_forward.7} parent=43 // pred_fallthru
          _
        %s379 = sand.u32 %s34, 1
        %s380 = scalar_lea.sflag [#allocation6], %s379
        %s381 = sand.u32 %s82, 1
        %s382 = smul.addr %s381, 8
        %s383 = scalar_lea.vmem [#allocation5], %s382
        // Predicated region
        $region49: #{graph_sampler_forward.7} parent=43 // pred_check
          %p384 = pneg %p95
        $region50: #{graph_sampler_forward.7} parent=43 // pred_check_branch
          %386 = sbr.rel (%p384) target = $region52
        $region51: #{graph_sampler_forward.7} parent=43 // pred_region
          %387 = dma.done %s380, 128
        $region52: #{graph_sampler_forward.7} parent=43 // pred_fallthru
          _
        // Predicated region
        $region53: #{graph_sampler_forward.7} parent=43 // pred_check
          %p388 = pneg %p116
        $region54: #{graph_sampler_forward.7} parent=43 // pred_check_branch
          %390 = sbr.rel (%p388) target = $region56
        $region55: #{graph_sampler_forward.7} parent=43 // pred_region
          %391 = dma.done [#allocation6], 16
        $region56: #{graph_sampler_forward.7} parent=43 // pred_fallthru
          _
        // Predicated region
        $region57: #{graph_sampler_forward.7} parent=43 // pred_check
          %p392 = pneg %p137
        $region58: #{graph_sampler_forward.7} parent=43 // pred_check_branch
          %394 = sbr.rel (%p392) target = $region60
        $region59: #{graph_sampler_forward.7} parent=43 // pred_region
          %395 = dma.done [#allocation9], 16
        $region60: #{graph_sampler_forward.7} parent=43 // pred_fallthru
          _
        // Predicated region
        $region61: #{graph_sampler_forward.7} parent=43 // pred_check
          %p396 = pneg %p158
        $region62: #{graph_sampler_forward.7} parent=43 // pred_check_branch
          %398 = sbr.rel (%p396) target = $region64
        $region63: #{graph_sampler_forward.7} parent=43 // pred_region
          %399 = dma.done [#allocation9], 16
        $region64: #{graph_sampler_forward.7} parent=43 // pred_fallthru
          _
        // Predicated region
        $region65: #{graph_sampler_forward.7} parent=43 // pred_check
          %p400 = pneg %p179
        $region66: #{graph_sampler_forward.7} parent=43 // pred_check_branch
          %402 = sbr.rel (%p400) target = $region68
        $region67: #{graph_sampler_forward.7} parent=43 // pred_region
          %403 = dma.done [#allocation12], 16
        $region68: #{graph_sampler_forward.7} parent=43 // pred_fallthru
          _
        %s404 = sand.u32 %s56, 1
        %s405 = scalar_lea.sflag [#allocation3], %s404
        %s406 = sand.u32 %s56, 1
        %s407 = smul.addr %s406, 8
        %s408 = scalar_lea.vmem [#allocation2], %s407
        %p409 = pneg %p69
        %p410 = pneg %p66
        %s411 = sand.u32 %s34, 1
        %s412 = scalar_lea.sflag [#allocation6], %s411
        %s413 = sand.u32 %s82, 1
        %s414 = smul.addr %s413, 8
        %s415 = scalar_lea.vmem [#allocation5], %s414
        %p416 = pneg %p95
        %p417 = pneg %p92
        %p418 = pneg %p116
        %p419 = pneg %p113
        %p420 = pneg %p137
        %p421 = pneg %p134
        %p422 = pneg %p158
        %p423 = pneg %p155
        %p424 = pneg %p179
        %p425 = pneg %p176
        %p426 = pneg %p207
        %p427 = pneg %p204
        %s428 = sand.u32 %s194, 1
        %s429 = scalar_lea.sflag [#allocation4], %s428
        %s430 = sand.u32 %s194, 1
        %s431 = smul.addr %s430, 32
        %s432 = scalar_lea.vmem [#allocation13], %s431
        %p433 = pneg %p235
        %p434 = pneg %p232
        %s435 = sand.u32 %s34, 1
        %s436 = scalar_lea.sflag [#allocation15], %s435
        %s437 = sand.u32 %s222, 1
        %s438 = smul.addr %s437, 8
        %s439 = scalar_lea.vmem [#allocation14], %s438
        %p440 = pneg %p263
        %p441 = pneg %p260
        %s442 = sand.u32 %s34, 1
        %s443 = scalar_lea.sflag [#allocation15], %s442
        %s444 = sand.u32 %s250, 1
        %s445 = smul.addr %s444, 8
        %s446 = scalar_lea.vmem [#allocation16], %s445
        %s447 = smul.u32 8, %s39
        %v448 = vld [vmem:[%s374] sm:$0xff]
        %v449 = vld [vmem:[%s383] sm:$0xff]
        %v451 = vcombine.high %v448, %v448
        %v453 = vunpack.c.l.s4 1966171168
        %v454 = vunpack.c.0.s8 %v453
        %v455 = vlaneseq
        %v456 = vshrl.u32 %v455, 7
        %v457 = vsub.s32 %v454, %v456
        %v458 = vrot.slane %v448, %v457
        %v460 = vunpack.c.l.s4 1966171168
        %v461 = vunpack.c.0.s8 %v460
        %v462 = vlaneseq
        %v463 = vshrl.u32 %v462, 7
        %v464 = vsub.s32 %v461, %v463
        %v465 = vrot.slane %v451, %v464
        %v466 = vcombine.high %v458, %v458
        %v467 = vcombine.high %v465, %v465
        %v469 = vunpack.c.l.s4 1966171168
        %v470 = vunpack.c.0.s8 %v469
        %v471 = vlaneseq
        %v472 = vshrl.u32 %v471, 7
        %v473 = vsub.s32 %v470, %v472
        %v474 = vrot.slane %v458, %v473
        %v476 = vunpack.c.l.s4 1966171168
        %v477 = vunpack.c.0.s8 %v476
        %v478 = vlaneseq
        %v479 = vshrl.u32 %v478, 7
        %v480 = vsub.s32 %v477, %v479
        %v481 = vrot.slane %v465, %v480
        %v483 = vunpack.c.l.s4 1966171168
        %v484 = vunpack.c.0.s8 %v483
        %v485 = vlaneseq
        %v486 = vshrl.u32 %v485, 7
        %v487 = vsub.s32 %v484, %v486
        %v488 = vrot.slane %v466, %v487
        %v490 = vunpack.c.l.s4 1966171168
        %v491 = vunpack.c.0.s8 %v490
        %v492 = vlaneseq
        %v493 = vshrl.u32 %v492, 7
        %v494 = vsub.s32 %v491, %v493
        %v495 = vrot.slane %v467, %v494
        %v496 = vcombine.high %v474, %v474
        %v497 = vcombine.high %v481, %v481
        %v498 = vcombine.high %v488, %v488
        %v499 = vcombine.high %v495, %v495
        %v500 = vlaneseq
        %v501 = vshrl.u32 %v500, 7
        %v502 = vsub.s32 0, %v501
        %v503 = vrot.slane %v474, %v502
        %v504 = vlaneseq
        %v505 = vshrl.u32 %v504, 7
        %v506 = vsub.s32 0, %v505
        %v507 = vrot.slane %v488, %v506
        %v508 = vlaneseq
        %v509 = vshrl.u32 %v508, 7
        %v510 = vsub.s32 0, %v509
        %v511 = vrot.slane %v496, %v510
        %v512 = vlaneseq
        %v513 = vshrl.u32 %v512, 7
        %v514 = vsub.s32 0, %v513
        %v515 = vrot.slane %v498, %v514
        %v516 = vlaneseq
        %v517 = vshrl.u32 %v516, 7
        %v518 = vsub.s32 0, %v517
        %v519 = vrot.slane %v481, %v518
        %v520 = vlaneseq
        %v521 = vshrl.u32 %v520, 7
        %v522 = vsub.s32 0, %v521
        %v523 = vrot.slane %v495, %v522
        %v524 = vlaneseq
        %v525 = vshrl.u32 %v524, 7
        %v526 = vsub.s32 0, %v525
        %v527 = vrot.slane %v497, %v526
        %v528 = vlaneseq
        %v529 = vshrl.u32 %v528, 7
        %v530 = vsub.s32 0, %v529
        %v531 = vrot.slane %v499, %v530
        %v540 = vsub.f32 %v503, %v449
        %v541 = vsub.f32 %v507, %v449
        %v542 = vsub.f32 %v511, %v449
        %v543 = vsub.f32 %v515, %v449
        %v544 = vsub.f32 %v519, %v449
        %v545 = vsub.f32 %v523, %v449
        %v546 = vsub.f32 %v527, %v449
        %v547 = vsub.f32 %v531, %v449
        %v548 = vmul.f32 %v540, %v540
        %v549 = vmul.f32 %v541, %v541
        %v550 = vmul.f32 %v542, %v542
        %v551 = vmul.f32 %v543, %v543
        %v552 = vmul.f32 %v544, %v544
        %v553 = vmul.f32 %v545, %v545
        %v554 = vmul.f32 %v546, %v546
        %v555 = vmul.f32 %v547, %v547
        %vm556 = vcmask 23552
        %v557 = vsel %vm556, %v548, 0.0
        %558 = vadd.xlane.f32.xlu0 %v557
        %v559 = vpop.xlane.xlu0 %558
        %v560 = vsel %vm556, %v549, 0.0
        %561 = vadd.xlane.f32.xlu0 %v560
        %v562 = vpop.xlane.xlu0 %561
        %v563 = vsel %vm556, %v550, 0.0
        %564 = vadd.xlane.f32.xlu0 %v563
        %v565 = vpop.xlane.xlu0 %564
        %v566 = vsel %vm556, %v551, 0.0
        %567 = vadd.xlane.f32.xlu0 %v566
        %v568 = vpop.xlane.xlu0 %567
        %v569 = vsel %vm556, %v552, 0.0
        %570 = vadd.xlane.f32.xlu0 %v569
        %v571 = vpop.xlane.xlu0 %570
        %v572 = vsel %vm556, %v553, 0.0
        %573 = vadd.xlane.f32.xlu0 %v572
        %v574 = vpop.xlane.xlu0 %573
        %v575 = vsel %vm556, %v554, 0.0
        %576 = vadd.xlane.f32.xlu0 %v575
        %v577 = vpop.xlane.xlu0 %576
        %v578 = vsel %vm556, %v555, 0.0
        %579 = vadd.xlane.f32.xlu0 %v578
        %v580 = vpop.xlane.xlu0 %579
        %v581 = vrsqrt.pop %v559
        %v582 = vmul.f32 %v559, %v581
        %vm583 = vcmp.eq.f32.partialorder %v559, inf
        %v584 = vsel %vm583, %v559, %v582
        %vm585 = vcmp.eq.f32.partialorder %v559, 0.0
        %v586 = vand.u32 %v559, 2147483648
        %v587 = vsel %vm585, %v586, %v584
        %v588 = vrsqrt.pop %v562
        %v589 = vmul.f32 %v562, %v588
        %vm590 = vcmp.eq.f32.partialorder %v562, inf
        %v591 = vsel %vm590, %v562, %v589
        %vm592 = vcmp.eq.f32.partialorder %v562, 0.0
        %v593 = vand.u32 %v562, 2147483648
        %v594 = vsel %vm592, %v593, %v591
        %v595 = vrsqrt.pop %v565
        %v596 = vmul.f32 %v565, %v595
        %vm597 = vcmp.eq.f32.partialorder %v565, inf
        %v598 = vsel %vm597, %v565, %v596
        %vm599 = vcmp.eq.f32.partialorder %v565, 0.0
        %v600 = vand.u32 %v565, 2147483648
        %v601 = vsel %vm599, %v600, %v598
        %v602 = vrsqrt.pop %v568
        %v603 = vmul.f32 %v568, %v602
        %vm604 = vcmp.eq.f32.partialorder %v568, inf
        %v605 = vsel %vm604, %v568, %v603
        %vm606 = vcmp.eq.f32.partialorder %v568, 0.0
        %v607 = vand.u32 %v568, 2147483648
        %v608 = vsel %vm606, %v607, %v605
        %v609 = vrsqrt.pop %v571
        %v610 = vmul.f32 %v571, %v609
        %vm611 = vcmp.eq.f32.partialorder %v571, inf
        %v612 = vsel %vm611, %v571, %v610
        %vm613 = vcmp.eq.f32.partialorder %v571, 0.0
        %v614 = vand.u32 %v571, 2147483648
        %v615 = vsel %vm613, %v614, %v612
        %v616 = vrsqrt.pop %v574
        %v617 = vmul.f32 %v574, %v616
        %vm618 = vcmp.eq.f32.partialorder %v574, inf
        %v619 = vsel %vm618, %v574, %v617
        %vm620 = vcmp.eq.f32.partialorder %v574, 0.0
        %v621 = vand.u32 %v574, 2147483648
        %v622 = vsel %vm620, %v621, %v619
        %v623 = vrsqrt.pop %v577
        %v624 = vmul.f32 %v577, %v623
        %vm625 = vcmp.eq.f32.partialorder %v577, inf
        %v626 = vsel %vm625, %v577, %v624
        %vm627 = vcmp.eq.f32.partialorder %v577, 0.0
        %v628 = vand.u32 %v577, 2147483648
        %v629 = vsel %vm627, %v628, %v626
        %v630 = vrsqrt.pop %v580
        %v631 = vmul.f32 %v580, %v630
        %vm632 = vcmp.eq.f32.partialorder %v580, inf
        %v633 = vsel %vm632, %v580, %v631
        %vm634 = vcmp.eq.f32.partialorder %v580, 0.0
        %v635 = vand.u32 %v580, 2147483648
        %v636 = vsel %vm634, %v635, %v633
        %vm637 = vcmp.lt.f32.partialorder %v587, 10.0
        %vm638 = vcmp.lt.f32.partialorder %v594, 10.0
        %vm639 = vcmp.lt.f32.partialorder %v601, 10.0
        %vm640 = vcmp.lt.f32.partialorder %v608, 10.0
        %vm641 = vcmp.lt.f32.partialorder %v615, 10.0
        %vm642 = vcmp.lt.f32.partialorder %v622, 10.0
        %vm643 = vcmp.lt.f32.partialorder %v629, 10.0
        %vm644 = vcmp.lt.f32.partialorder %v636, 10.0
        %v645 = vsel %vm637, 1.0, 0.0
        %v646 = vsel %vm638, 1.0, 0.0
        %v647 = vsel %vm639, 1.0, 0.0
        %v648 = vsel %vm640, 1.0, 0.0
        %v649 = vsel %vm641, 1.0, 0.0
        %v650 = vsel %vm642, 1.0, 0.0
        %v651 = vsel %vm643, 1.0, 0.0
        %v652 = vsel %vm644, 1.0, 0.0
        %v653 = vld [vmem:[#allocation7] sm:$0x1]
        %v655 = vlaneseq
        %v656 = vshrl.u32 %v655, 7
        %v657 = vsub.s32 0, %v656
        %v658 = vrot.slane %v653, %v657
        %v660 = vmul.f32 %v587, %v658
        %v661 = vmul.f32 %v594, %v658
        %v662 = vmul.f32 %v601, %v658
        %v663 = vmul.f32 %v608, %v658
        %v664 = vmul.f32 %v615, %v658
        %v665 = vmul.f32 %v622, %v658
        %v666 = vmul.f32 %v629, %v658
        %v667 = vmul.f32 %v636, %v658
        %v668 = vld [vmem:[#allocation8] sm:$0x1]
        %v670 = vlaneseq
        %v671 = vshrl.u32 %v670, 7
        %v672 = vsub.s32 0, %v671
        %v673 = vrot.slane %v668, %v672
        %v675 = vadd.f32 %v660, %v673
        %v676 = vadd.f32 %v661, %v673
        %v677 = vadd.f32 %v662, %v673
        %v678 = vadd.f32 %v663, %v673
        %v679 = vadd.f32 %v664, %v673
        %v680 = vadd.f32 %v665, %v673
        %v681 = vadd.f32 %v666, %v673
        %v682 = vadd.f32 %v667, %v673
        %v683 = vld [vmem:[#allocation10] sm:$0x1]
        %v684 = vld [vmem:[#allocation11] sm:$0x1]
        %vm685 = vcmask 523264
        %v686 = vsel %vm685, %v675, 0.0
        %687 = vadd.xlane.f32.xlu0 %v686
        %v688 = vpop.xlane.xlu0 %687
        %v689 = vsel %vm685, %v676, 0.0
        %690 = vadd.xlane.f32.xlu0 %v689
        %v691 = vpop.xlane.xlu0 %690
        %v692 = vsel %vm685, %v677, 0.0
        %693 = vadd.xlane.f32.xlu0 %v692
        %v694 = vpop.xlane.xlu0 %693
        %v695 = vsel %vm685, %v678, 0.0
        %696 = vadd.xlane.f32.xlu0 %v695
        %v697 = vpop.xlane.xlu0 %696
        %v698 = vsel %vm685, %v679, 0.0
        %699 = vadd.xlane.f32.xlu0 %v698
        %v700 = vpop.xlane.xlu0 %699
        %v701 = vsel %vm685, %v680, 0.0
        %702 = vadd.xlane.f32.xlu0 %v701
        %v703 = vpop.xlane.xlu0 %702
        %v704 = vsel %vm685, %v681, 0.0
        %705 = vadd.xlane.f32.xlu0 %v704
        %v706 = vpop.xlane.xlu0 %705
        %v707 = vsel %vm685, %v682, 0.0
        %708 = vadd.xlane.f32.xlu0 %v707
        %v709 = vpop.xlane.xlu0 %708
        %v710 = vrcp.pop 64.0
        %v711 = vmul.f32 %v688, %v710
        %v712 = vmul.f32 %v691, %v710
        %v713 = vmul.f32 %v694, %v710
        %v714 = vmul.f32 %v697, %v710
        %v715 = vmul.f32 %v700, %v710
        %v716 = vmul.f32 %v703, %v710
        %v717 = vmul.f32 %v706, %v710
        %v718 = vmul.f32 %v709, %v710
        %v719 = vmul.f32 %v675, %v675
        %v720 = vmul.f32 %v676, %v676
        %v721 = vmul.f32 %v677, %v677
        %v722 = vmul.f32 %v678, %v678
        %v723 = vmul.f32 %v679, %v679
        %v724 = vmul.f32 %v680, %v680
        %v725 = vmul.f32 %v681, %v681
        %v726 = vmul.f32 %v682, %v682
        %v727 = vsel %vm685, %v719, 0.0
        %728 = vadd.xlane.f32.xlu0 %v727
        %v729 = vpop.xlane.xlu0 %728
        %v730 = vsel %vm685, %v720, 0.0
        %731 = vadd.xlane.f32.xlu0 %v730
        %v732 = vpop.xlane.xlu0 %731
        %v733 = vsel %vm685, %v721, 0.0
        %734 = vadd.xlane.f32.xlu0 %v733
        %v735 = vpop.xlane.xlu0 %734
        %v736 = vsel %vm685, %v722, 0.0
        %737 = vadd.xlane.f32.xlu0 %v736
        %v738 = vpop.xlane.xlu0 %737
        %v739 = vsel %vm685, %v723, 0.0
        %740 = vadd.xlane.f32.xlu0 %v739
        %v741 = vpop.xlane.xlu0 %740
        %v742 = vsel %vm685, %v724, 0.0
        %743 = vadd.xlane.f32.xlu0 %v742
        %v744 = vpop.xlane.xlu0 %743
        %v745 = vsel %vm685, %v725, 0.0
        %746 = vadd.xlane.f32.xlu0 %v745
        %v747 = vpop.xlane.xlu0 %746
        %v748 = vsel %vm685, %v726, 0.0
        %749 = vadd.xlane.f32.xlu0 %v748
        %v750 = vpop.xlane.xlu0 %749
        %v751 = vmul.f32 %v729, %v710
        %v752 = vmul.f32 %v732, %v710
        %v753 = vmul.f32 %v735, %v710
        %v754 = vmul.f32 %v738, %v710
        %v755 = vmul.f32 %v741, %v710
        %v756 = vmul.f32 %v744, %v710
        %v757 = vmul.f32 %v747, %v710
        %v758 = vmul.f32 %v750, %v710
        %v759 = vmul.f32 %v711, %v711
        %v760 = vmul.f32 %v712, %v712
        %v761 = vmul.f32 %v713, %v713
        %v762 = vmul.f32 %v714, %v714
        %v763 = vmul.f32 %v715, %v715
        %v764 = vmul.f32 %v716, %v716
        %v765 = vmul.f32 %v717, %v717
        %v766 = vmul.f32 %v718, %v718
        %v767 = vsub.f32 %v751, %v759
        %v768 = vsub.f32 %v752, %v760
        %v769 = vsub.f32 %v753, %v761
        %v770 = vsub.f32 %v754, %v762
        %v771 = vsub.f32 %v755, %v763
        %v772 = vsub.f32 %v756, %v764
        %v773 = vsub.f32 %v757, %v765
        %v774 = vsub.f32 %v758, %v766
        %v775 = vmax.f32 %v767, 0.0
        %v776 = vmax.f32 %v768, 0.0
        %v777 = vmax.f32 %v769, 0.0
        %v778 = vmax.f32 %v770, 0.0
        %v779 = vmax.f32 %v771, 0.0
        %v780 = vmax.f32 %v772, 0.0
        %v781 = vmax.f32 %v773, 0.0
        %v782 = vmax.f32 %v774, 0.0
        %v783 = vsub.f32 %v675, %v711
        %v784 = vsub.f32 %v676, %v712
        %v785 = vsub.f32 %v677, %v713
        %v786 = vsub.f32 %v678, %v714
        %v787 = vsub.f32 %v679, %v715
        %v788 = vsub.f32 %v680, %v716
        %v789 = vsub.f32 %v681, %v717
        %v790 = vsub.f32 %v682, %v718
        %v791 = vadd.f32 %v775, 1e-05
        %v792 = vadd.f32 %v776, 1e-05
        %v793 = vadd.f32 %v777, 1e-05
        %v794 = vadd.f32 %v778, 1e-05
        %v795 = vadd.f32 %v779, 1e-05
        %v796 = vadd.f32 %v780, 1e-05
        %v797 = vadd.f32 %v781, 1e-05
        %v798 = vadd.f32 %v782, 1e-05
        %v799 = vrsqrt.pop %v791
        %v800 = vrsqrt.pop %v792
        %v801 = vrsqrt.pop %v793
        %v802 = vrsqrt.pop %v794
        %v803 = vrsqrt.pop %v795
        %v804 = vrsqrt.pop %v796
        %v805 = vrsqrt.pop %v797
        %v806 = vrsqrt.pop %v798
        %v807 = vmul.f32 %v783, %v799
        %v808 = vmul.f32 %v784, %v800
        %v809 = vmul.f32 %v785, %v801
        %v810 = vmul.f32 %v786, %v802
        %v811 = vmul.f32 %v787, %v803
        %v812 = vmul.f32 %v788, %v804
        %v813 = vmul.f32 %v789, %v805
        %v814 = vmul.f32 %v790, %v806
        %v816 = vlaneseq
        %v817 = vshrl.u32 %v816, 7
        %v818 = vsub.s32 0, %v817
        %v819 = vrot.slane %v683, %v818
        %v821 = vmul.f32 %v807, %v819
        %v822 = vmul.f32 %v808, %v819
        %v823 = vmul.f32 %v809, %v819
        %v824 = vmul.f32 %v810, %v819
        %v825 = vmul.f32 %v811, %v819
        %v826 = vmul.f32 %v812, %v819
        %v827 = vmul.f32 %v813, %v819
        %v828 = vmul.f32 %v814, %v819
        %v830 = vlaneseq
        %v831 = vshrl.u32 %v830, 7
        %v832 = vsub.s32 0, %v831
        %v833 = vrot.slane %v684, %v832
        %v835 = vadd.f32 %v821, %v833
        %v836 = vadd.f32 %v822, %v833
        %v837 = vadd.f32 %v823, %v833
        %v838 = vadd.f32 %v824, %v833
        %v839 = vadd.f32 %v825, %v833
        %v840 = vadd.f32 %v826, %v833
        %v841 = vadd.f32 %v827, %v833
        %v842 = vadd.f32 %v828, %v833
        %v843 = vmax.f32 %v835, 0.0
        %v844 = vmax.f32 %v836, 0.0
        %v845 = vmax.f32 %v837, 0.0
        %v846 = vmax.f32 %v838, 0.0
        %v847 = vmax.f32 %v839, 0.0
        %v848 = vmax.f32 %v840, 0.0
        %v849 = vmax.f32 %v841, 0.0
        %v850 = vmax.f32 %v842, 0.0
        %v851 = vpack.c.bf16 %v843, %v843
        %v852 = vpack.c.bf16 %v844, %v844
        %v853 = vpack.c.bf16 %v845, %v845
        %v854 = vpack.c.bf16 %v846, %v846
        %v855 = vpack.c.bf16 %v847, %v847
        %v856 = vpack.c.bf16 %v848, %v848
        %v857 = vpack.c.bf16 %v849, %v849
        %v858 = vpack.c.bf16 %v850, %v850
        %vm859 = vcmask 519168
        %860 = vst.msk [vmem:[%s432] sm:$0xf] %vm859, %v851
        %861 = vst.msk [vmem:[%s432 + $0x4] sm:$0xf] %vm859, %v852
        %862 = vst.msk [vmem:[%s432 + $0x8] sm:$0xf] %vm859, %v853
        %863 = vst.msk [vmem:[%s432 + $0xc] sm:$0xf] %vm859, %v854
        %864 = vst.msk [vmem:[%s432 + $0x10] sm:$0xf] %vm859, %v855
        %865 = vst.msk [vmem:[%s432 + $0x14] sm:$0xf] %vm859, %v856
        %866 = vst.msk [vmem:[%s432 + $0x18] sm:$0xf] %vm859, %v857
        %867 = vst.msk [vmem:[%s432 + $0x1c] sm:$0xf] %vm859, %v858
        %v876 = vlaneseq
        %v877 = vand.u32 %v876, 127
        %v878 = vlaneseq
        %v879 = vshrl.u32 %v878, 7
        %v880 = vsub.s32 %v877, %v879
        %v881 = vrot.slane %v645, %v880
        %v882 = vlaneseq
        %v883 = vshrl.u32 %v882, 7
        %v884 = vsub.s32 %v877, %v883
        %v885 = vrot.slane %v646, %v884
        %v886 = vlaneseq
        %v887 = vshrl.u32 %v886, 7
        %v888 = vsub.s32 %v877, %v887
        %v889 = vrot.slane %v647, %v888
        %v890 = vlaneseq
        %v891 = vshrl.u32 %v890, 7
        %v892 = vsub.s32 %v877, %v891
        %v893 = vrot.slane %v648, %v892
        %v894 = vlaneseq
        %v895 = vshrl.u32 %v894, 7
        %v896 = vsub.s32 %v877, %v895
        %v897 = vrot.slane %v649, %v896
        %v898 = vlaneseq
        %v899 = vshrl.u32 %v898, 7
        %v900 = vsub.s32 %v877, %v899
        %v901 = vrot.slane %v650, %v900
        %v902 = vlaneseq
        %v903 = vshrl.u32 %v902, 7
        %v904 = vsub.s32 %v877, %v903
        %v905 = vrot.slane %v651, %v904
        %v906 = vlaneseq
        %v907 = vshrl.u32 %v906, 7
        %v908 = vsub.s32 %v877, %v907
        %v909 = vrot.slane %v652, %v908
        %vm910 = vcmask 1041409
        %v911 = vsel %vm910, %v885, %v881
        %vm912 = vcmask 1042434
        %v913 = vsel %vm912, %v889, %v911
        %vm914 = vcmask 1043459
        %v915 = vsel %vm914, %v893, %v913
        %vm916 = vcmask 1044484
        %v917 = vsel %vm916, %v897, %v915
        %vm918 = vcmask 1045509
        %v919 = vsel %vm918, %v901, %v917
        %vm920 = vcmask 1046534
        %v921 = vsel %vm920, %v905, %v919
        %vm922 = vcmask 1047559
        %v923 = vsel %vm922, %v909, %v921
        %vm925 = vcmask 64512
        %926 = vst.msk [vmem:[%s439] sm:$0xff] %vm925, %v923
        %v927 = vunpack.c.l.bf16 %v851
        %v928 = vunpack.c.l.bf16 %v852
        %v929 = vunpack.c.l.bf16 %v853
        %v930 = vunpack.c.l.bf16 %v854
        %v931 = vunpack.c.l.bf16 %v855
        %v932 = vunpack.c.l.bf16 %v856
        %v933 = vunpack.c.l.bf16 %v857
        %v934 = vunpack.c.l.bf16 %v858
        %v935 = vmul.f32 %v927, %v645
        %v936 = vmul.f32 %v928, %v646
        %v937 = vmul.f32 %v929, %v647
        %v938 = vmul.f32 %v930, %v648
        %v939 = vmul.f32 %v931, %v649
        %v940 = vmul.f32 %v932, %v650
        %v941 = vmul.f32 %v933, %v651
        %v942 = vmul.f32 %v934, %v652
        %v943 = vsel %vm685, %v935, 0.0
        %v944 = vrot.slane %v943, 4
        %v945 = vadd.f32 %v943, %v944
        %v946 = vrot.slane %v945, 2
        %v947 = vadd.f32 %v945, %v946
        %v948 = vrot.slane %v947, 1
        %v949 = vadd.f32 %v947, %v948
        %v950 = vsel %vm685, %v936, 0.0
        %v951 = vrot.slane %v950, 4
        %v952 = vadd.f32 %v950, %v951
        %v953 = vrot.slane %v952, 2
        %v954 = vadd.f32 %v952, %v953
        %v955 = vrot.slane %v954, 1
        %v956 = vadd.f32 %v954, %v955
        %v957 = vsel %vm685, %v937, 0.0
        %v958 = vrot.slane %v957, 4
        %v959 = vadd.f32 %v957, %v958
        %v960 = vrot.slane %v959, 2
        %v961 = vadd.f32 %v959, %v960
        %v962 = vrot.slane %v961, 1
        %v963 = vadd.f32 %v961, %v962
        %v964 = vsel %vm685, %v938, 0.0
        %v965 = vrot.slane %v964, 4
        %v966 = vadd.f32 %v964, %v965
        %v967 = vrot.slane %v966, 2
        %v968 = vadd.f32 %v966, %v967
        %v969 = vrot.slane %v968, 1
        %v970 = vadd.f32 %v968, %v969
        %v971 = vsel %vm685, %v939, 0.0
        %v972 = vrot.slane %v971, 4
        %v973 = vadd.f32 %v971, %v972
        %v974 = vrot.slane %v973, 2
        %v975 = vadd.f32 %v973, %v974
        %v976 = vrot.slane %v975, 1
        %v977 = vadd.f32 %v975, %v976
        %v978 = vsel %vm685, %v940, 0.0
        %v979 = vrot.slane %v978, 4
        %v980 = vadd.f32 %v978, %v979
        %v981 = vrot.slane %v980, 2
        %v982 = vadd.f32 %v980, %v981
        %v983 = vrot.slane %v982, 1
        %v984 = vadd.f32 %v982, %v983
        %v985 = vsel %vm685, %v941, 0.0
        %v986 = vrot.slane %v985, 4
        %v987 = vadd.f32 %v985, %v986
        %v988 = vrot.slane %v987, 2
        %v989 = vadd.f32 %v987, %v988
        %v990 = vrot.slane %v989, 1
        %v991 = vadd.f32 %v989, %v990
        %v992 = vsel %vm685, %v942, 0.0
        %v993 = vrot.slane %v992, 4
        %v994 = vadd.f32 %v992, %v993
        %v995 = vrot.slane %v994, 2
        %v996 = vadd.f32 %v994, %v995
        %v997 = vrot.slane %v996, 1
        %v998 = vadd.f32 %v996, %v997
        %v1007 = vsel %vm910, %v956, %v949
        %v1008 = vsel %vm912, %v963, %v1007
        %v1009 = vsel %vm914, %v970, %v1008
        %v1010 = vsel %vm916, %v977, %v1009
        %v1011 = vsel %vm918, %v984, %v1010
        %v1012 = vsel %vm920, %v991, %v1011
        %v1013 = vsel %vm922, %v998, %v1012
        %1015 = vst.msk [vmem:[%s446] sm:$0xff] %vm685, %v1013
        %s1016 = sand.u32 %s194, 1
        %s1017 = scalar_lea.sflag [#allocation4], %s1016
        %s1018 = sand.u32 %s194, 1
        %s1019 = smul.addr %s1018, 32
        %s1020 = scalar_lea.vmem [#allocation13], %s1019
        %s1021 = sand.u32 %s34, 1
        %s1022 = scalar_lea.sflag [#allocation15], %s1021
        %s1023 = sand.u32 %s222, 1
        %s1024 = smul.addr %s1023, 8
        %s1025 = scalar_lea.vmem [#allocation14], %s1024
        %s1026 = sand.u32 %s34, 1
        %s1027 = scalar_lea.sflag [#allocation15], %s1026
        %s1028 = sand.u32 %s250, 1
        %s1029 = smul.addr %s1028, 8
        %s1030 = scalar_lea.vmem [#allocation16], %s1029
        // Predicated region
        $region69: #{graph_sampler_forward.7} parent=43 // pred_check
          %p1031 = pneg %p204
        $region70: #{graph_sampler_forward.7} parent=43 // pred_check_branch
          %1033 = sbr.rel (%p1031) target = $region72
        $region71: #{graph_sampler_forward.7} parent=43 // pred_region
          %s1034 = smul.u32 8, %s39
          %s1036 = ssub.s32 512, 512
          %1037 = vsyncadd %s1017, %s1036
          %s1038 = smul.addr %s38, 8
          %s1039 = sadd.s32 %s1034, %s1038
          %s1040 = smul.addr %s1039, 64
          %s1041 = scalar_lea.hbm %s6, %s1040
          %s1042 = sshll.u32 %s1020, 4
          %s1043 = int_to_ptr.vmem [resolvable:$true] %s1042
          %1048 = dma.vmem_to_hbm [thread:$0]  %s1043, 512, %s1041, %s1017, 64, 64, 4
        $region72: #{graph_sampler_forward.7} parent=43 // pred_fallthru
          _
        // Predicated region
        $region73: #{graph_sampler_forward.7} parent=43 // pred_check
          %p1049 = pneg %p232
        $region74: #{graph_sampler_forward.7} parent=43 // pred_check_branch
          %1051 = sbr.rel (%p1049) target = $region76
        $region75: #{graph_sampler_forward.7} parent=43 // pred_region
          %s1053 = ssub.s32 128, 128
          %1054 = vsyncadd %s1022, %s1053
          %s1055 = sadd.s32 %s39, %s38
          %s1056 = smul.addr %s1055, 128
          %s1057 = scalar_lea.hbm %s7, %s1056
          %s1059 = sshll.u32 %s1025, 4
          %s1060 = int_to_ptr.vmem [resolvable:$true] %s1059
          %1062 = dma.vmem_to_hbm [thread:$0]  %s1060, 128, %s1057, %s1022
        $region76: #{graph_sampler_forward.7} parent=43 // pred_fallthru
          _
        // Predicated region
        $region77: #{graph_sampler_forward.7} parent=43 // pred_check
          %p1063 = pneg %p260
        $region78: #{graph_sampler_forward.7} parent=43 // pred_check_branch
          %1065 = sbr.rel (%p1063) target = $region80
        $region79: #{graph_sampler_forward.7} parent=43 // pred_region
          %s1067 = ssub.s32 128, 128
          %1068 = vsyncadd %s1027, %s1067
          %s1069 = sadd.s32 %s39, %s38
          %s1070 = smul.addr %s1069, 128
          %s1071 = scalar_lea.hbm %s8, %s1070
          %s1073 = sshll.u32 %s1030, 4
          %s1074 = int_to_ptr.vmem [resolvable:$true] %s1073
          %1076 = dma.vmem_to_hbm [thread:$0]  %s1074, 128, %s1071, %s1027
        $region80: #{graph_sampler_forward.7} parent=43 // pred_fallthru
          _
      $region44: #{graph_sampler_forward.7} parent=5 // pred_fallthru
        _
      %p1077 = scmp.le.s32.totalorder 2, %s29
      // Predicated region
      $region81: #{graph_sampler_forward.7} parent=5 // pred_check
        %p1078 = pneg %p1077
      $region82: #{graph_sampler_forward.7} parent=5 // pred_check_branch
        %1080 = sbr.rel (%p1078) target = $region84
      $region83: #{graph_sampler_forward.7} parent=5 // pred_region
        %s1081 = ssub.s32 %s29, 2
        // Predicated region
        $region85: #{graph_sampler_forward.7} parent=83 // pred_check
          %p1082 = pneg %p210
        $region86: #{graph_sampler_forward.7} parent=83 // pred_check_branch
          %1084 = sbr.rel (%p1082) target = $region88
        $region87: #{graph_sampler_forward.7} parent=83 // pred_region
          %s1085 = sand.u32 %s195, 1
          %s1086 = scalar_lea.sflag [#allocation4], %s1085
          %s1087 = sand.u32 %s195, 1
          %s1088 = smul.addr %s1087, 32
          %s1089 = scalar_lea.vmem [#allocation13], %s1088
          %1090 = dma.done %s1086, 512
        $region88: #{graph_sampler_forward.7} parent=83 // pred_fallthru
          _
        // Predicated region
        $region89: #{graph_sampler_forward.7} parent=83 // pred_check
          %p1091 = pneg %p238
        $region90: #{graph_sampler_forward.7} parent=83 // pred_check_branch
          %1093 = sbr.rel (%p1091) target = $region92
        $region91: #{graph_sampler_forward.7} parent=83 // pred_region
          %s1094 = sand.u32 %s35, 1
          %s1095 = scalar_lea.sflag [#allocation15], %s1094
          %s1096 = sand.u32 %s223, 1
          %s1097 = smul.addr %s1096, 8
          %s1098 = scalar_lea.vmem [#allocation14], %s1097
          %1099 = dma.done %s1095, 128
        $region92: #{graph_sampler_forward.7} parent=83 // pred_fallthru
          _
        // Predicated region
        $region93: #{graph_sampler_forward.7} parent=83 // pred_check
          %p1100 = pneg %p266
        $region94: #{graph_sampler_forward.7} parent=83 // pred_check_branch
          %1102 = sbr.rel (%p1100) target = $region96
        $region95: #{graph_sampler_forward.7} parent=83 // pred_region
          %s1103 = sand.u32 %s35, 1
          %s1104 = scalar_lea.sflag [#allocation15], %s1103
          %s1105 = sand.u32 %s251, 1
          %s1106 = smul.addr %s1105, 8
          %s1107 = scalar_lea.vmem [#allocation16], %s1106
          %1108 = dma.done %s1104, 128
        $region96: #{graph_sampler_forward.7} parent=83 // pred_fallthru
          _
      $region84: #{graph_sampler_forward.7} parent=5 // pred_fallthru
        _
    $region6: #{graph_sampler_forward.7} parent=1 // loop_footer
      %s33 = sadd.s32 1, %s29
    $region7: #{graph_sampler_forward.7} parent=1 // loop_footer_branch
      %28 = sbr.rel target = $region3
    $region8: #{graph_sampler_forward.7} parent=1 // loop_exit
      _
    %1109 = vsyncpa [#allocation3], 1
    %s1110 = scalar_lea.sflag [#allocation3], 1
    %1111 = vsyncpa %s1110, 1
    %1112 = vsyncpa [#allocation6], 1
    %s1113 = scalar_lea.sflag [#allocation6], 1
    %1114 = vsyncpa %s1113, 1
    %1115 = vsyncpa [#allocation9], 1
    %1116 = vsyncpa [#allocation12], 1
    %1117 = vsyncpa [#allocation4], 1
    %s1118 = scalar_lea.sflag [#allocation4], 1
    %1119 = vsyncpa %s1118, 1
    %1120 = vsyncpa [#allocation15], 1
    %s1121 = scalar_lea.sflag [#allocation15], 1
    %1122 = vsyncpa %s1121, 1

// kernel: graph_sampler_forward.9
$region0: #{graph_sampler_forward.9}
  #allocation0 [shape = 'u32[]', space=smem, size = 0x4, offset = 0x4, fixed_abs, tag = 'smem constant byte address 0x4 - core index']
  #allocation1 [shape = 'u32[144,128]{1,0:T(1,128)}', space=vmem, size = 0x12000, scoped, tag = 'internal scratch']
  %s0 = inlined_call_operand.hbm [shape: bf16[2,8,8,64], index: 0, kind: input, shape index: {}]
  %s1 = inlined_call_operand.hbm [shape: f32[2,8,8], index: 1, kind: input, shape index: {}]
  %s2 = inlined_call_operand.hbm [shape: f32[2,8,128], index: 2, kind: input, shape index: {}]
  %s3 = inlined_call_operand.hbm [shape: f32[2,8,128], index: 3, kind: input, shape index: {}]
  %s4 = inlined_call_operand.hbm [shape: bf16[64,128], index: 4, kind: input, shape index: {}]
  %s5 = inlined_call_operand.hbm [shape: f32[1,128], index: 5, kind: input, shape index: {}]
  %s6 = inlined_call_operand.hbm [shape: f32[1,128], index: 6, kind: input, shape index: {}]
  %s7 = inlined_call_operand.hbm [shape: bf16[128,64], index: 7, kind: input, shape index: {}]
  %s8 = inlined_call_operand.hbm [shape: f32[1,64], index: 8, kind: input, shape index: {}]
  %s9 = inlined_call_operand.hbm [shape: bf16[2,8,8,64], index: 9, kind: output, shape index: {0}]
  %s10 = inlined_call_operand.hbm [shape: f32[2,8,64], index: 10, kind: output, shape index: {1}]
  %11 = xla_tuple %s9, %s10
  %s12 = sld [smem:[#allocation0]]
  $region113: #{graph_sampler_forward.9} parent=0
    _
  %s14 = ssub.s32 1, %s12
  %s15 = scalar_select 0, %s14, %s12
  $region1: #{graph_sampler_forward.9} parent=0
    #allocation2 [shape = 'u8[32768]{0}', space=vmem, size = 0x8000, scoped, tag = 'input window, operand 0']
    #allocation3 [shape = 's32[2]{0}', space=sflag, size = 0x8, scoped, tag = 'scoped memory for graph_sampler_forward.9']
    #allocation4 [shape = 's32[2]{0}', space=sflag, size = 0x8, scoped, tag = 'scoped memory for graph_sampler_forward.9']
    #allocation5 [shape = 'u8[8192]{0}', space=vmem, size = 0x2000, scoped, tag = 'input window, operand 1']
    #allocation6 [shape = 's32[2]{0}', space=sflag, size = 0x8, scoped, tag = 'scoped memory for graph_sampler_forward.9']
    #allocation7 [shape = 'u8[8192]{0}', space=vmem, size = 0x2000, scoped, tag = 'input window, operand 2']
    #allocation8 [shape = 'u8[8192]{0}', space=vmem, size = 0x2000, scoped, tag = 'input window, operand 3']
    #allocation9 [shape = 's32[2]{0}', space=sflag, size = 0x8, scoped, tag = 'scoped memory for graph_sampler_forward.9']
    #allocation10 [shape = 'u8[16384]{0}', space=vmem, size = 0x4000, scoped, tag = 'input window, operand 4, single buffered']
    #allocation11 [shape = 'u8[512]{0}', space=vmem, size = 0x400, scoped, tag = 'input window, operand 5, single buffered']
    #allocation12 [shape = 's32[1]{0}', space=sflag, size = 0x4, scoped, tag = 'scoped memory for graph_sampler_forward.9']
    #allocation13 [shape = 'u8[512]{0}', space=vmem, size = 0x400, scoped, tag = 'input window, operand 6, single buffered']
    #allocation14 [shape = 'u8[32768]{0}', space=vmem, size = 0x8000, scoped, tag = 'input window, operand 7, single buffered']
    #allocation15 [shape = 's32[1]{0}', space=sflag, size = 0x4, scoped, tag = 'scoped memory for graph_sampler_forward.9']
    #allocation16 [shape = 'u8[512]{0}', space=vmem, size = 0x400, scoped, tag = 'input window, operand 8, single buffered']
    #allocation17 [shape = 'u8[32768]{0}', space=vmem, size = 0x8000, scoped, tag = 'output window, operand 0']
    #allocation18 [shape = 'u8[8192]{0}', space=vmem, size = 0x2000, scoped, tag = 'output window, operand 1']
    #allocation19 [shape = 's32[2]{0}', space=sflag, size = 0x8, scoped, tag = 'scoped memory for graph_sampler_forward.9']
    %16 = vsyncpa [#allocation3], 0
    %s17 = scalar_lea.sflag [#allocation3], 1
    %18 = vsyncpa %s17, 0
    %19 = vsyncpa [#allocation6], 0
    %s20 = scalar_lea.sflag [#allocation6], 1
    %21 = vsyncpa %s20, 0
    %22 = vsyncpa [#allocation9], 0
    %s23 = scalar_lea.sflag [#allocation9], 1
    %24 = vsyncpa %s23, 0
    %25 = vsyncpa [#allocation12], 0
    %26 = vsyncpa [#allocation15], 0
    %27 = vsyncpa [#allocation4], 0
    %s28 = scalar_lea.sflag [#allocation4], 1
    %29 = vsyncpa %s28, 0
    %30 = vsyncpa [#allocation19], 0
    %s31 = scalar_lea.sflag [#allocation19], 1
    %32 = vsyncpa %s31, 0
    loop: start=0, step=1, limit=4
    $region2: #{graph_sampler_forward.9} parent=1 // loop_pre_header
      _
    $region3: #{graph_sampler_forward.9} parent=1 // loop_header
      %s34 = sphi 0, %s38
      %p35 = scmp.ge.s32.totalorder %s34, 4
      %s41 = sphi 0, %s53
      %s42 = sphi 0, %s49
      %s43 = sphi 0, %s41
      %s44 = sphi 0, %s42
      %s45 = sphi 0, %s43
      %s46 = sphi 0, %s44
      %s58 = sphi 0, %s60
      %s61 = sphi 0, %s58
      %s62 = sphi 0, %s61
      %s78 = sphi 0, %s62
      %s86 = sphi 0, %s88
      %s89 = sphi 0, %s86
      %s90 = sphi 0, %s89
      %s106 = sphi 0, %s90
      %s114 = sphi 0, %s116
      %s117 = sphi 0, %s114
      %s118 = sphi 0, %s117
      %s134 = sphi 0, %s118
      %s140 = sphi 0, %s142
      %s143 = sphi 0, %s140
      %s144 = sphi 0, %s143
      %s160 = sphi 0, %s144
      %s164 = sphi 0, %s164
      %s166 = sphi 0, %s164
      %s167 = sphi 0, %s166
      %s181 = sphi 0, %s167
      %s185 = sphi 0, %s185
      %s187 = sphi 0, %s185
      %s188 = sphi 0, %s187
      %s202 = sphi 0, %s188
      %s206 = sphi 0, %s206
      %s208 = sphi 0, %s206
      %s209 = sphi 0, %s208
      %s223 = sphi 0, %s209
      %s227 = sphi 0, %s227
      %s229 = sphi 0, %s227
      %s230 = sphi 0, %s229
      %s244 = sphi 0, %s230
      %s248 = sphi 0, %s248
      %s250 = sphi 0, %s248
      %s251 = sphi 0, %s250
      %s265 = sphi 0, %s251
      %s273 = sphi 0, %s275
      %s276 = sphi 0, %s273
      %s277 = sphi 0, %s276
      %s293 = sphi 0, %s277
      %s301 = sphi 0, %s303
      %s304 = sphi 0, %s301
      %s305 = sphi 0, %s304
      %s321 = sphi 0, %s305
    $region4: #{graph_sampler_forward.9} parent=1 // loop_header_branch
      %37 = sbr.rel (%p35) target = $region8
    $region5: #{graph_sampler_forward.9} parent=1 // loop_body
      %s39 = ssub.s32 %s34, 1
      %s40 = ssub.s32 %s34, 2
      %s47 = sadd.s32 1, %s42
      %p48 = scmp.ge.s32.totalorder %s47, 1
      %s49 = scalar_select %p48, 0, %s47
      %s50 = sadd.s32 1, %s41
      %s51 = scalar_select %p48, %s50, %s41
      %p52 = scmp.ge.s32.totalorder %s51, 2
      %s53 = scalar_select %p52, 0, %s51
      %s54 = ssub.s32 %s41, %s53
      %s55 = ssub.s32 %s42, %s49
      %s56 = sor.u32 %s54, %s55
      %p57 = scmp.eq.s32.totalorder %s56, 0
      %s59 = sadd.s32 %s58, 1
      %s60 = scalar_select %p57, %s58, %s59
      %p63 = pneg %p57
      %p64 = scmp.eq.s32.totalorder %s34, 1
      %p65 = por %p63, %p64
      %p66 = scmp.ne.s32.totalorder %s58, %s61
      %p67 = scmp.eq.s32.totalorder %s34, 0
      %p68 = por %p66, %p67
      %p69 = scmp.ne.s32.totalorder %s58, %s61
      %p70 = scmp.eq.s32.totalorder %s39, 1
      %p71 = por %p69, %p70
      %p72 = scmp.ne.s32.totalorder %s61, %s62
      %p73 = scmp.eq.s32.totalorder %s39, 0
      %p74 = por %p72, %p73
      %p75 = scmp.ne.s32.totalorder %s61, %s62
      %p76 = scmp.eq.s32.totalorder %s40, 1
      %p77 = por %p75, %p76
      %p79 = scmp.ne.s32.totalorder %s62, %s78
      %p80 = scmp.eq.s32.totalorder %s40, 0
      %p81 = por %p79, %p80
      %s82 = ssub.s32 %s41, %s53
      %s83 = ssub.s32 %s42, %s49
      %s84 = sor.u32 %s82, %s83
      %p85 = scmp.eq.s32.totalorder %s84, 0
      %s87 = sadd.s32 %s86, 1
      %s88 = scalar_select %p85, %s86, %s87
      %p91 = pneg %p85
      %p92 = scmp.eq.s32.totalorder %s34, 1
      %p93 = por %p91, %p92
      %p94 = scmp.ne.s32.totalorder %s86, %s89
      %p95 = scmp.eq.s32.totalorder %s34, 0
      %p96 = por %p94, %p95
      %p97 = scmp.ne.s32.totalorder %s86, %s89
      %p98 = scmp.eq.s32.totalorder %s39, 1
      %p99 = por %p97, %p98
      %p100 = scmp.ne.s32.totalorder %s89, %s90
      %p101 = scmp.eq.s32.totalorder %s39, 0
      %p102 = por %p100, %p101
      %p103 = scmp.ne.s32.totalorder %s89, %s90
      %p104 = scmp.eq.s32.totalorder %s40, 1
      %p105 = por %p103, %p104
      %p107 = scmp.ne.s32.totalorder %s90, %s106
      %p108 = scmp.eq.s32.totalorder %s40, 0
      %p109 = por %p107, %p108
      %s110 = ssub.s32 %s41, %s53
      %s111 = ssub.s32 %s42, %s49
      %s112 = sor.u32 %s110, %s111
      %p113 = scmp.eq.s32.totalorder %s112, 0
      %s115 = sadd.s32 %s114, 1
      %s116 = scalar_select %p113, %s114, %s115
      %p119 = pneg %p113
      %p120 = scmp.eq.s32.totalorder %s34, 1
      %p121 = por %p119, %p120
      %p122 = scmp.ne.s32.totalorder %s114, %s117
      %p123 = scmp.eq.s32.totalorder %s34, 0
      %p124 = por %p122, %p123
      %p125 = scmp.ne.s32.totalorder %s114, %s117
      %p126 = scmp.eq.s32.totalorder %s39, 1
      %p127 = por %p125, %p126
      %p128 = scmp.ne.s32.totalorder %s117, %s118
      %p129 = scmp.eq.s32.totalorder %s39, 0
      %p130 = por %p128, %p129
      %p131 = scmp.ne.s32.totalorder %s117, %s118
      %p132 = scmp.eq.s32.totalorder %s40, 1
      %p133 = por %p131, %p132
      %p135 = scmp.ne.s32.totalorder %s118, %s134
      %p136 = scmp.eq.s32.totalorder %s40, 0
      %p137 = por %p135, %p136
      %s138 = ssub.s32 %s41, %s53
      %p139 = scmp.eq.s32.totalorder %s138, 0
      %s141 = sadd.s32 %s140, 1
      %s142 = scalar_select %p139, %s140, %s141
      %p145 = pneg %p139
      %p146 = scmp.eq.s32.totalorder %s34, 1
      %p147 = por %p145, %p146
      %p148 = scmp.ne.s32.totalorder %s140, %s143
      %p149 = scmp.eq.s32.totalorder %s34, 0
      %p150 = por %p148, %p149
      %p151 = scmp.ne.s32.totalorder %s140, %s143
      %p152 = scmp.eq.s32.totalorder %s39, 1
      %p153 = por %p151, %p152
      %p154 = scmp.ne.s32.totalorder %s143, %s144
      %p155 = scmp.eq.s32.totalorder %s39, 0
      %p156 = por %p154, %p155
      %p157 = scmp.ne.s32.totalorder %s143, %s144
      %p158 = scmp.eq.s32.totalorder %s40, 1
      %p159 = por %p157, %p158
      %p161 = scmp.ne.s32.totalorder %s144, %s160
      %p162 = scmp.eq.s32.totalorder %s40, 0
      %p163 = por %p161, %p162
      %s165 = sadd.s32 %s164, 1
      %p168 = scmp.eq.s32.totalorder %s34, 1
      %p169 = scmp.ne.s32.totalorder %s164, %s166
      %p170 = scmp.eq.s32.totalorder %s34, 0
      %p171 = por %p169, %p170
      %p172 = scmp.ne.s32.totalorder %s164, %s166
      %p173 = scmp.eq.s32.totalorder %s39, 1
      %p174 = por %p172, %p173
      %p175 = scmp.ne.s32.totalorder %s166, %s167
      %p176 = scmp.eq.s32.totalorder %s39, 0
      %p177 = por %p175, %p176
      %p178 = scmp.ne.s32.totalorder %s166, %s167
      %p179 = scmp.eq.s32.totalorder %s40, 1
      %p180 = por %p178, %p179
      %p182 = scmp.ne.s32.totalorder %s167, %s181
      %p183 = scmp.eq.s32.totalorder %s40, 0
      %p184 = por %p182, %p183
      %s186 = sadd.s32 %s185, 1
      %p189 = scmp.eq.s32.totalorder %s34, 1
      %p190 = scmp.ne.s32.totalorder %s185, %s187
      %p191 = scmp.eq.s32.totalorder %s34, 0
      %p192 = por %p190, %p191
      %p193 = scmp.ne.s32.totalorder %s185, %s187
      %p194 = scmp.eq.s32.totalorder %s39, 1
      %p195 = por %p193, %p194
      %p196 = scmp.ne.s32.totalorder %s187, %s188
      %p197 = scmp.eq.s32.totalorder %s39, 0
      %p198 = por %p196, %p197
      %p199 = scmp.ne.s32.totalorder %s187, %s188
      %p200 = scmp.eq.s32.totalorder %s40, 1
      %p201 = por %p199, %p200
      %p203 = scmp.ne.s32.totalorder %s188, %s202
      %p204 = scmp.eq.s32.totalorder %s40, 0
      %p205 = por %p203, %p204
      %s207 = sadd.s32 %s206, 1
      %p210 = scmp.eq.s32.totalorder %s34, 1
      %p211 = scmp.ne.s32.totalorder %s206, %s208
      %p212 = scmp.eq.s32.totalorder %s34, 0
      %p213 = por %p211, %p212
      %p214 = scmp.ne.s32.totalorder %s206, %s208
      %p215 = scmp.eq.s32.totalorder %s39, 1
      %p216 = por %p214, %p215
      %p217 = scmp.ne.s32.totalorder %s208, %s209
      %p218 = scmp.eq.s32.totalorder %s39, 0
      %p219 = por %p217, %p218
      %p220 = scmp.ne.s32.totalorder %s208, %s209
      %p221 = scmp.eq.s32.totalorder %s40, 1
      %p222 = por %p220, %p221
      %p224 = scmp.ne.s32.totalorder %s209, %s223
      %p225 = scmp.eq.s32.totalorder %s40, 0
      %p226 = por %p224, %p225
      %s228 = sadd.s32 %s227, 1
      %p231 = scmp.eq.s32.totalorder %s34, 1
      %p232 = scmp.ne.s32.totalorder %s227, %s229
      %p233 = scmp.eq.s32.totalorder %s34, 0
      %p234 = por %p232, %p233
      %p235 = scmp.ne.s32.totalorder %s227, %s229
      %p236 = scmp.eq.s32.totalorder %s39, 1
      %p237 = por %p235, %p236
      %p238 = scmp.ne.s32.totalorder %s229, %s230
      %p239 = scmp.eq.s32.totalorder %s39, 0
      %p240 = por %p238, %p239
      %p241 = scmp.ne.s32.totalorder %s229, %s230
      %p242 = scmp.eq.s32.totalorder %s40, 1
      %p243 = por %p241, %p242
      %p245 = scmp.ne.s32.totalorder %s230, %s244
      %p246 = scmp.eq.s32.totalorder %s40, 0
      %p247 = por %p245, %p246
      %s249 = sadd.s32 %s248, 1
      %p252 = scmp.eq.s32.totalorder %s34, 1
      %p253 = scmp.ne.s32.totalorder %s248, %s250
      %p254 = scmp.eq.s32.totalorder %s34, 0
      %p255 = por %p253, %p254
      %p256 = scmp.ne.s32.totalorder %s248, %s250
      %p257 = scmp.eq.s32.totalorder %s39, 1
      %p258 = por %p256, %p257
      %p259 = scmp.ne.s32.totalorder %s250, %s251
      %p260 = scmp.eq.s32.totalorder %s39, 0
      %p261 = por %p259, %p260
      %p262 = scmp.ne.s32.totalorder %s250, %s251
      %p263 = scmp.eq.s32.totalorder %s40, 1
      %p264 = por %p262, %p263
      %p266 = scmp.ne.s32.totalorder %s251, %s265
      %p267 = scmp.eq.s32.totalorder %s40, 0
      %p268 = por %p266, %p267
      %s269 = ssub.s32 %s41, %s53
      %s270 = ssub.s32 %s42, %s49
      %s271 = sor.u32 %s269, %s270
      %p272 = scmp.eq.s32.totalorder %s271, 0
      %s274 = sadd.s32 %s273, 1
      %s275 = scalar_select %p272, %s273, %s274
      %p278 = pneg %p272
      %p279 = scmp.eq.s32.totalorder %s34, 1
      %p280 = por %p278, %p279
      %p281 = scmp.ne.s32.totalorder %s273, %s276
      %p282 = scmp.eq.s32.totalorder %s34, 0
      %p283 = por %p281, %p282
      %p284 = scmp.ne.s32.totalorder %s273, %s276
      %p285 = scmp.eq.s32.totalorder %s39, 1
      %p286 = por %p284, %p285
      %p287 = scmp.ne.s32.totalorder %s276, %s277
      %p288 = scmp.eq.s32.totalorder %s39, 0
      %p289 = por %p287, %p288
      %p290 = scmp.ne.s32.totalorder %s276, %s277
      %p291 = scmp.eq.s32.totalorder %s40, 1
      %p292 = por %p290, %p291
      %p294 = scmp.ne.s32.totalorder %s277, %s293
      %p295 = scmp.eq.s32.totalorder %s40, 0
      %p296 = por %p294, %p295
      %s297 = ssub.s32 %s41, %s53
      %s298 = ssub.s32 %s42, %s49
      %s299 = sor.u32 %s297, %s298
      %p300 = scmp.eq.s32.totalorder %s299, 0
      %s302 = sadd.s32 %s301, 1
      %s303 = scalar_select %p300, %s301, %s302
      %p306 = pneg %p300
      %p307 = scmp.eq.s32.totalorder %s34, 1
      %p308 = por %p306, %p307
      %p309 = scmp.ne.s32.totalorder %s301, %s304
      %p310 = scmp.eq.s32.totalorder %s34, 0
      %p311 = por %p309, %p310
      %p312 = scmp.ne.s32.totalorder %s301, %s304
      %p313 = scmp.eq.s32.totalorder %s39, 1
      %p314 = por %p312, %p313
      %p315 = scmp.ne.s32.totalorder %s304, %s305
      %p316 = scmp.eq.s32.totalorder %s39, 0
      %p317 = por %p315, %p316
      %p318 = scmp.ne.s32.totalorder %s304, %s305
      %p319 = scmp.eq.s32.totalorder %s40, 1
      %p320 = por %p318, %p319
      %p322 = scmp.ne.s32.totalorder %s305, %s321
      %p323 = scmp.eq.s32.totalorder %s40, 0
      %p324 = por %p322, %p323
      %p325 = scmp.le.s32.totalorder 1, %s34
      %p326 = scmp.lt.s32.totalorder %s34, 3
      %p327 = pnand %p325, %p326
      %p328 = pneg %p327
      // Predicated region
      $region9: #{graph_sampler_forward.9} parent=5 // pred_check
        _
      $region10: #{graph_sampler_forward.9} parent=5 // pred_check_branch
        %330 = sbr.rel (%p327) target = $region12
      $region11: #{graph_sampler_forward.9} parent=5 // pred_region
        %s331 = ssub.s32 %s34, 1
        // Predicated region
        $region13: #{graph_sampler_forward.9} parent=11 // pred_check
          %p332 = pneg %p177
        $region14: #{graph_sampler_forward.9} parent=11 // pred_check_branch
          %334 = sbr.rel (%p332) target = $region16
        $region15: #{graph_sampler_forward.9} parent=11 // pred_region
          %s336 = ssub.s32 512, 512
          %337 = vsyncadd [#allocation9], %s336
          %s338 = sshll.u32 [#allocation10], 4
          %s339 = int_to_ptr.vmem [resolvable:$true] %s338
          %344 = dma.hbm_to_vmem [thread:$0]  %s4, 512, %s339, [#allocation9], 64, 64, 4
        $region16: #{graph_sampler_forward.9} parent=11 // pred_fallthru
          _
        // Predicated region
        $region17: #{graph_sampler_forward.9} parent=11 // pred_check
          %p345 = pneg %p198
        $region18: #{graph_sampler_forward.9} parent=11 // pred_check_branch
          %347 = sbr.rel (%p345) target = $region20
        $region19: #{graph_sampler_forward.9} parent=11 // pred_region
          %s349 = ssub.s32 16, 16
          %350 = vsyncadd [#allocation12], %s349
          %s352 = sshll.u32 [#allocation11], 4
          %s353 = int_to_ptr.vmem [resolvable:$true] %s352
          %355 = dma.hbm_to_vmem [thread:$0]  %s5, 16, %s353, [#allocation12]
        $region20: #{graph_sampler_forward.9} parent=11 // pred_fallthru
          _
        // Predicated region
        $region21: #{graph_sampler_forward.9} parent=11 // pred_check
          %p356 = pneg %p219
        $region22: #{graph_sampler_forward.9} parent=11 // pred_check_branch
          %358 = sbr.rel (%p356) target = $region24
        $region23: #{graph_sampler_forward.9} parent=11 // pred_region
          %s360 = ssub.s32 16, 16
          %361 = vsyncadd [#allocation12], %s360
          %s363 = sshll.u32 [#allocation13], 4
          %s364 = int_to_ptr.vmem [resolvable:$true] %s363
          %366 = dma.hbm_to_vmem [thread:$0]  %s6, 16, %s364, [#allocation12]
        $region24: #{graph_sampler_forward.9} parent=11 // pred_fallthru
          _
        // Predicated region
        $region25: #{graph_sampler_forward.9} parent=11 // pred_check
          %p367 = pneg %p240
        $region26: #{graph_sampler_forward.9} parent=11 // pred_check_branch
          %369 = sbr.rel (%p367) target = $region28
        $region27: #{graph_sampler_forward.9} parent=11 // pred_region
          %s371 = ssub.s32 1024, 1024
          %372 = vsyncadd [#allocation15], %s371
          %s373 = sshll.u32 [#allocation14], 4
          %s374 = int_to_ptr.vmem [resolvable:$true] %s373
          %379 = dma.hbm_to_vmem [thread:$0]  %s7, 1024, %s374, [#allocation15], 64, 64, 4
        $region28: #{graph_sampler_forward.9} parent=11 // pred_fallthru
          _
        // Predicated region
        $region29: #{graph_sampler_forward.9} parent=11 // pred_check
          %p380 = pneg %p261
        $region30: #{graph_sampler_forward.9} parent=11 // pred_check_branch
          %382 = sbr.rel (%p380) target = $region32
        $region31: #{graph_sampler_forward.9} parent=11 // pred_region
          %s384 = ssub.s32 16, 16
          %385 = vsyncadd [#allocation15], %s384
          %s387 = sshll.u32 [#allocation16], 4
          %s388 = int_to_ptr.vmem [resolvable:$true] %s387
          %390 = dma.hbm_to_vmem [thread:$0]  %s8, 16, %s388, [#allocation15]
        $region32: #{graph_sampler_forward.9} parent=11 // pred_fallthru
          _
      $region12: #{graph_sampler_forward.9} parent=5 // pred_fallthru
        _
      %p391 = scmp.lt.s32.totalorder %s34, 2
      // Predicated region
      $region33: #{graph_sampler_forward.9} parent=5 // pred_check
        %p392 = pneg %p391
      $region34: #{graph_sampler_forward.9} parent=5 // pred_check_branch
        %394 = sbr.rel (%p392) target = $region36
      $region35: #{graph_sampler_forward.9} parent=5 // pred_region
        // Predicated region
        $region37: #{graph_sampler_forward.9} parent=35 // pred_check
          %p395 = pneg %p68
        $region38: #{graph_sampler_forward.9} parent=35 // pred_check_branch
          %397 = sbr.rel (%p395) target = $region40
        $region39: #{graph_sampler_forward.9} parent=35 // pred_region
          %s398 = sand.u32 %s58, 1
          %s399 = scalar_lea.sflag [#allocation3], %s398
          %s400 = sand.u32 %s58, 1
          %s401 = smul.addr %s400, 32
          %s402 = scalar_lea.vmem [#allocation2], %s401
          %s403 = smul.u32 8, %s42
          %s405 = ssub.s32 512, 512
          %406 = vsyncadd %s399, %s405
          %s407 = smul.addr %s41, 8
          %s408 = sadd.s32 %s403, %s407
          %s409 = smul.addr %s408, 64
          %s410 = scalar_lea.hbm %s0, %s409
          %s411 = sshll.u32 %s402, 4
          %s412 = int_to_ptr.vmem [resolvable:$true] %s411
          %417 = dma.hbm_to_vmem [thread:$0]  %s410, 512, %s412, %s399, 64, 64, 4
        $region40: #{graph_sampler_forward.9} parent=35 // pred_fallthru
          _
        // Predicated region
        $region41: #{graph_sampler_forward.9} parent=35 // pred_check
          %p418 = pneg %p96
        $region42: #{graph_sampler_forward.9} parent=35 // pred_check_branch
          %420 = sbr.rel (%p418) target = $region44
        $region43: #{graph_sampler_forward.9} parent=35 // pred_region
          %s421 = sand.u32 %s34, 1
          %s422 = scalar_lea.sflag [#allocation6], %s421
          %s423 = sand.u32 %s86, 1
          %s424 = smul.addr %s423, 8
          %s425 = scalar_lea.vmem [#allocation5], %s424
          %s427 = ssub.s32 128, 128
          %428 = vsyncadd %s422, %s427
          %s429 = sadd.s32 %s42, %s41
          %s430 = smul.addr %s429, 128
          %s431 = scalar_lea.hbm %s1, %s430
          %s433 = sshll.u32 %s425, 4
          %s434 = int_to_ptr.vmem [resolvable:$true] %s433
          %436 = dma.hbm_to_vmem [thread:$0]  %s431, 128, %s434, %s422
        $region44: #{graph_sampler_forward.9} parent=35 // pred_fallthru
          _
        // Predicated region
        $region45: #{graph_sampler_forward.9} parent=35 // pred_check
          %p437 = pneg %p124
        $region46: #{graph_sampler_forward.9} parent=35 // pred_check_branch
          %439 = sbr.rel (%p437) target = $region48
        $region47: #{graph_sampler_forward.9} parent=35 // pred_region
          %s440 = sand.u32 %s34, 1
          %s441 = scalar_lea.sflag [#allocation6], %s440
          %s442 = sand.u32 %s114, 1
          %s443 = smul.addr %s442, 8
          %s444 = scalar_lea.vmem [#allocation7], %s443
          %s446 = ssub.s32 128, 128
          %447 = vsyncadd %s441, %s446
          %s448 = sadd.s32 %s42, %s41
          %s449 = smul.addr %s448, 128
          %s450 = scalar_lea.hbm %s2, %s449
          %s452 = sshll.u32 %s444, 4
          %s453 = int_to_ptr.vmem [resolvable:$true] %s452
          %455 = dma.hbm_to_vmem [thread:$0]  %s450, 128, %s453, %s441
        $region48: #{graph_sampler_forward.9} parent=35 // pred_fallthru
          _
        // Predicated region
        $region49: #{graph_sampler_forward.9} parent=35 // pred_check
          %p456 = pneg %p150
        $region50: #{graph_sampler_forward.9} parent=35 // pred_check_branch
          %458 = sbr.rel (%p456) target = $region52
        $region51: #{graph_sampler_forward.9} parent=35 // pred_region
          %s459 = sand.u32 %s34, 1
          %s460 = scalar_lea.sflag [#allocation9], %s459
          %s461 = sand.u32 %s140, 1
          %s462 = smul.addr %s461, 8
          %s463 = scalar_lea.vmem [#allocation8], %s462
          %s465 = ssub.s32 128, 128
          %466 = vsyncadd %s460, %s465
          %s467 = smul.addr %s41, 128
          %s468 = scalar_lea.hbm %s3, %s467
          %s470 = sshll.u32 %s463, 4
          %s471 = int_to_ptr.vmem [resolvable:$true] %s470
          %473 = dma.hbm_to_vmem [thread:$0]  %s468, 128, %s471, %s460
        $region52: #{graph_sampler_forward.9} parent=35 // pred_fallthru
          _
      $region36: #{graph_sampler_forward.9} parent=5 // pred_fallthru
        _
      %p474 = scmp.le.s32.totalorder 1, %s34
      %p475 = scmp.lt.s32.totalorder %s34, 3
      %p476 = pnand %p474, %p475
      %p477 = pneg %p476
      // Predicated region
      $region53: #{graph_sampler_forward.9} parent=5 // pred_check
        _
      $region54: #{graph_sampler_forward.9} parent=5 // pred_check_branch
        %479 = sbr.rel (%p476) target = $region56
      $region55: #{graph_sampler_forward.9} parent=5 // pred_region
        %s480 = ssub.s32 %s34, 1
        %s481 = sand.u32 %s61, 1
        %s482 = scalar_lea.sflag [#allocation3], %s481
        %s483 = sand.u32 %s61, 1
        %s484 = smul.addr %s483, 32
        %s485 = scalar_lea.vmem [#allocation2], %s484
        // Predicated region
        $region57: #{graph_sampler_forward.9} parent=55 // pred_check
          %p486 = pneg %p74
        $region58: #{graph_sampler_forward.9} parent=55 // pred_check_branch
          %488 = sbr.rel (%p486) target = $region60
        $region59: #{graph_sampler_forward.9} parent=55 // pred_region
          %489 = dma.done %s482, 512
        $region60: #{graph_sampler_forward.9} parent=55 // pred_fallthru
          _
        %s490 = sand.u32 %s39, 1
        %s491 = scalar_lea.sflag [#allocation6], %s490
        %s492 = sand.u32 %s89, 1
        %s493 = smul.addr %s492, 8
        %s494 = scalar_lea.vmem [#allocation5], %s493
        // Predicated region
        $region61: #{graph_sampler_forward.9} parent=55 // pred_check
          %p495 = pneg %p102
        $region62: #{graph_sampler_forward.9} parent=55 // pred_check_branch
          %497 = sbr.rel (%p495) target = $region64
        $region63: #{graph_sampler_forward.9} parent=55 // pred_region
          %498 = dma.done %s491, 128
        $region64: #{graph_sampler_forward.9} parent=55 // pred_fallthru
          _
        %s499 = sand.u32 %s39, 1
        %s500 = scalar_lea.sflag [#allocation6], %s499
        %s501 = sand.u32 %s117, 1
        %s502 = smul.addr %s501, 8
        %s503 = scalar_lea.vmem [#allocation7], %s502
        // Predicated region
        $region65: #{graph_sampler_forward.9} parent=55 // pred_check
          %p504 = pneg %p130
        $region66: #{graph_sampler_forward.9} parent=55 // pred_check_branch
          %506 = sbr.rel (%p504) target = $region68
        $region67: #{graph_sampler_forward.9} parent=55 // pred_region
          %507 = dma.done %s500, 128
        $region68: #{graph_sampler_forward.9} parent=55 // pred_fallthru
          _
        %s508 = sand.u32 %s39, 1
        %s509 = scalar_lea.sflag [#allocation9], %s508
        %s510 = sand.u32 %s143, 1
        %s511 = smul.addr %s510, 8
        %s512 = scalar_lea.vmem [#allocation8], %s511
        // Predicated region
        $region69: #{graph_sampler_forward.9} parent=55 // pred_check
          %p513 = pneg %p156
        $region70: #{graph_sampler_forward.9} parent=55 // pred_check_branch
          %515 = sbr.rel (%p513) target = $region72
        $region71: #{graph_sampler_forward.9} parent=55 // pred_region
          %516 = dma.done %s509, 128
        $region72: #{graph_sampler_forward.9} parent=55 // pred_fallthru
          _
        // Predicated region
        $region73: #{graph_sampler_forward.9} parent=55 // pred_check
          %p517 = pneg %p177
        $region74: #{graph_sampler_forward.9} parent=55 // pred_check_branch
          %519 = sbr.rel (%p517) target = $region76
        $region75: #{graph_sampler_forward.9} parent=55 // pred_region
          %520 = dma.done [#allocation9], 512
        $region76: #{graph_sampler_forward.9} parent=55 // pred_fallthru
          _
        // Predicated region
        $region77: #{graph_sampler_forward.9} parent=55 // pred_check
          %p521 = pneg %p198
        $region78: #{graph_sampler_forward.9} parent=55 // pred_check_branch
          %523 = sbr.rel (%p521) target = $region80
        $region79: #{graph_sampler_forward.9} parent=55 // pred_region
          %524 = dma.done [#allocation12], 16
        $region80: #{graph_sampler_forward.9} parent=55 // pred_fallthru
          _
        // Predicated region
        $region81: #{graph_sampler_forward.9} parent=55 // pred_check
          %p525 = pneg %p219
        $region82: #{graph_sampler_forward.9} parent=55 // pred_check_branch
          %527 = sbr.rel (%p525) target = $region84
        $region83: #{graph_sampler_forward.9} parent=55 // pred_region
          %528 = dma.done [#allocation12], 16
        $region84: #{graph_sampler_forward.9} parent=55 // pred_fallthru
          _
        // Predicated region
        $region85: #{graph_sampler_forward.9} parent=55 // pred_check
          %p529 = pneg %p240
        $region86: #{graph_sampler_forward.9} parent=55 // pred_check_branch
          %531 = sbr.rel (%p529) target = $region88
        $region87: #{graph_sampler_forward.9} parent=55 // pred_region
          %532 = dma.done [#allocation15], 1024
        $region88: #{graph_sampler_forward.9} parent=55 // pred_fallthru
          _
        // Predicated region
        $region89: #{graph_sampler_forward.9} parent=55 // pred_check
          %p533 = pneg %p261
        $region90: #{graph_sampler_forward.9} parent=55 // pred_check_branch
          %535 = sbr.rel (%p533) target = $region92
        $region91: #{graph_sampler_forward.9} parent=55 // pred_region
          %536 = dma.done [#allocation15], 16
        $region92: #{graph_sampler_forward.9} parent=55 // pred_fallthru
          _
        %s537 = sand.u32 %s61, 1
        %s538 = scalar_lea.sflag [#allocation3], %s537
        %s539 = sand.u32 %s61, 1
        %s540 = smul.addr %s539, 32
        %s541 = scalar_lea.vmem [#allocation2], %s540
        %p542 = pneg %p74
        %p543 = pneg %p71
        %s544 = sand.u32 %s39, 1
        %s545 = scalar_lea.sflag [#allocation6], %s544
        %s546 = sand.u32 %s89, 1
        %s547 = smul.addr %s546, 8
        %s548 = scalar_lea.vmem [#allocation5], %s547
        %p549 = pneg %p102
        %p550 = pneg %p99
        %s551 = sand.u32 %s39, 1
        %s552 = scalar_lea.sflag [#allocation6], %s551
        %s553 = sand.u32 %s117, 1
        %s554 = smul.addr %s553, 8
        %s555 = scalar_lea.vmem [#allocation7], %s554
        %p556 = pneg %p130
        %p557 = pneg %p127
        %s558 = sand.u32 %s39, 1
        %s559 = scalar_lea.sflag [#allocation9], %s558
        %s560 = sand.u32 %s143, 1
        %s561 = smul.addr %s560, 8
        %s562 = scalar_lea.vmem [#allocation8], %s561
        %p563 = pneg %p156
        %p564 = pneg %p153
        %p565 = pneg %p177
        %p566 = pneg %p174
        %p567 = pneg %p198
        %p568 = pneg %p195
        %p569 = pneg %p219
        %p570 = pneg %p216
        %p571 = pneg %p240
        %p572 = pneg %p237
        %p573 = pneg %p261
        %p574 = pneg %p258
        %p575 = pneg %p289
        %p576 = pneg %p286
        %s577 = sand.u32 %s276, 1
        %s578 = scalar_lea.sflag [#allocation4], %s577
        %s579 = sand.u32 %s276, 1
        %s580 = smul.addr %s579, 32
        %s581 = scalar_lea.vmem [#allocation17], %s580
        %p582 = pneg %p317
        %p583 = pneg %p314
        %s584 = sand.u32 %s304, 1
        %s585 = scalar_lea.sflag [#allocation19], %s584
        %s586 = sand.u32 %s304, 1
        %s587 = smul.addr %s586, 8
        %s588 = scalar_lea.vmem [#allocation18], %s587
        %s589 = smul.u32 8, %s44
        %s590 = smul.u32 8, %s44
        %v592 = vld [vmem:[%s485] sm:$0xf]
        %v593 = vld [vmem:[%s485 + $0x4] sm:$0xf]
        %v594 = vld [vmem:[%s485 + $0x8] sm:$0xf]
        %v595 = vld [vmem:[%s485 + $0xc] sm:$0xf]
        %v596 = vld [vmem:[%s485 + $0x10] sm:$0xf]
        %v597 = vld [vmem:[%s485 + $0x14] sm:$0xf]
        %v598 = vld [vmem:[%s485 + $0x18] sm:$0xf]
        %v599 = vld [vmem:[%s485 + $0x1c] sm:$0xf]
        %v600 = vld [vmem:[#allocation10] sm:$0xf]
        %v601 = vld [vmem:[#allocation10 + $0x4] sm:$0xf]
        %v602 = vld [vmem:[#allocation10 + $0x8] sm:$0xf]
        %v603 = vld [vmem:[#allocation10 + $0xc] sm:$0xf]
        %v604 = vld [vmem:[#allocation10 + $0x10] sm:$0xf]
        %v605 = vld [vmem:[#allocation10 + $0x14] sm:$0xf]
        %v606 = vld [vmem:[#allocation10 + $0x18] sm:$0xf]
        %v607 = vld [vmem:[#allocation10 + $0x1c] sm:$0xf]
        %v616 = vunpack.c.l.b16 %v592
        %v617 = vunpack.c.l.b16 %v593
        %v618 = vunpack.c.l.b16 %v594
        %v619 = vunpack.c.l.b16 %v595
        %v620 = vunpack.c.l.b16 %v596
        %v621 = vunpack.c.l.b16 %v597
        %v622 = vunpack.c.l.b16 %v598
        %v623 = vunpack.c.l.b16 %v599
        %v624 = vpack.c.b16 %v617, %v616
        %v625 = vpack.c.b16 %v619, %v618
        %v626 = vpack.c.b16 %v621, %v620
        %v627 = vpack.c.b16 %v623, %v622
        %v636 = vunpack.c.l.b16 %v600
        %v637 = vunpack.c.l.b16 %v601
        %v638 = vunpack.c.l.b16 %v602
        %v639 = vunpack.c.l.b16 %v603
        %v640 = vunpack.c.l.b16 %v604
        %v641 = vunpack.c.l.b16 %v605
        %v642 = vunpack.c.l.b16 %v606
        %v643 = vunpack.c.l.b16 %v607
        %v644 = vpack.c.b16 %v637, %v636
        %v645 = vpack.c.b16 %v639, %v638
        %v646 = vpack.c.b16 %v641, %v640
        %v647 = vpack.c.b16 %v643, %v642
        %vm652 = vcmask 523264
        %v654 = vsel %vm652, %v624, 0
        %v657 = vsel %vm652, %v625, 0
        %v660 = vsel %vm652, %v626, 0
        %v663 = vsel %vm652, %v627, 0
        %665 = vmatprep.subr.bf16.mxu0 0
        %666 = vmatpush1.bf16.msra.mxu0 %v644
        %667 = vmatprep.subr.bf16.mxu0 0
        %668 = vmatpush1.bf16.msra.mxu0 %v645
        %669 = vmatprep.subr.bf16.mxu0 0
        %670 = vmatpush1.bf16.msra.mxu0 %v646
        %671 = vmatprep.subr.bf16.mxu0 0
        %672 = vmatpush1.bf16.msra.mxu0 %v647
        %673 = vmatprep.subr.bf16.mxu0 0
        %674 = vmatpush1.bf16.msra.mxu0 0
        %675 = vmatprep.subr.bf16.mxu0 0
        %676 = vmatpush1.bf16.msra.mxu0 0
        %677 = vmatprep.subr.bf16.mxu0 0
        %678 = vmatpush1.bf16.msra.mxu0 0
        %679 = vmatprep.subr.bf16.mxu0 0
        %680 = vmatpush1.bf16.msra.mxu0 0
        %681 = vmatprep.subr.bf16.mxu0 0
        %682 = vmatpush1.bf16.msra.mxu0 0
        %683 = vmatprep.subr.bf16.mxu0 0
        %684 = vmatpush1.bf16.msra.mxu0 0
        %685 = vmatprep.subr.bf16.mxu0 0
        %686 = vmatpush1.bf16.msra.mxu0 0
        %687 = vmatprep.subr.bf16.mxu0 0
        %688 = vmatpush1.bf16.msra.mxu0 0
        %689 = vmatprep.subr.bf16.mxu0 0
        %690 = vmatpush1.bf16.msra.mxu0 0
        %691 = vmatprep.subr.bf16.mxu0 0
        %692 = vmatpush1.bf16.msra.mxu0 0
        %693 = vmatprep.subr.bf16.mxu0 0
        %694 = vmatpush1.bf16.msra.mxu0 0
        %695 = vmatprep.subr.bf16.mxu0 0
        %696 = vmatpush1.bf16.msra.mxu0 0
        %697 = vmatprep.mubr.bf16.mxu0 0
        %698 = vmatmul.mubr.bf16.gmra.mrb[0].mxu0 %v654
        %v699 = vpop.f32.mrb[0].mxu0
        %v700 = vadd.f32 0.0, %v699
        %v701 = vpop.f32.mrb[0].mxu0
        %v702 = vpop.f32.mrb[0].mxu0
        %v703 = vadd.f32 0.0, %v702
        %v704 = vpop.f32.mrb[0].mxu0
        %705 = vmatprep.mubr.bf16.mxu0 0
        %706 = vmatmul.mubr.bf16.gmra.mrb[0].mxu0 %v657
        %v707 = vpop.f32.mrb[0].mxu0
        %v708 = vadd.f32 0.0, %v707
        %v709 = vpop.f32.mrb[0].mxu0
        %v710 = vpop.f32.mrb[0].mxu0
        %v711 = vadd.f32 0.0, %v710
        %v712 = vpop.f32.mrb[0].mxu0
        %713 = vmatprep.mubr.bf16.mxu0 0
        %714 = vmatmul.mubr.bf16.gmra.mrb[0].mxu0 %v660
        %v715 = vpop.f32.mrb[0].mxu0
        %v716 = vadd.f32 0.0, %v715
        %v717 = vpop.f32.mrb[0].mxu0
        %v718 = vpop.f32.mrb[0].mxu0
        %v719 = vadd.f32 0.0, %v718
        %v720 = vpop.f32.mrb[0].mxu0
        %721 = vmatprep.mubr.bf16.mxu0 0
        %722 = vmatmul.mubr.bf16.gmra.mrb[0].mxu0 %v663
        %v723 = vpop.f32.mrb[0].mxu0
        %v724 = vadd.f32 0.0, %v723
        %v725 = vpop.f32.mrb[0].mxu0
        %v726 = vpop.f32.mrb[0].mxu0
        %v727 = vadd.f32 0.0, %v726
        %v728 = vpop.f32.mrb[0].mxu0
        %729 = vdwg.mxu0
        %v730 = vld [vmem:[%s503] sm:$0xff]
        %v732 = vcombine.high %v730, %v730
        %v734 = vunpack.c.l.s4 1966171168
        %v735 = vunpack.c.0.s8 %v734
        %v736 = vlaneseq
        %v737 = vshrl.u32 %v736, 7
        %v738 = vsub.s32 %v735, %v737
        %v739 = vrot.slane %v730, %v738
        %v741 = vunpack.c.l.s4 1966171168
        %v742 = vunpack.c.0.s8 %v741
        %v743 = vlaneseq
        %v744 = vshrl.u32 %v743, 7
        %v745 = vsub.s32 %v742, %v744
        %v746 = vrot.slane %v732, %v745
        %v747 = vcombine.high %v739, %v739
        %v748 = vcombine.high %v746, %v746
        %v750 = vunpack.c.l.s4 1966171168
        %v751 = vunpack.c.0.s8 %v750
        %v752 = vlaneseq
        %v753 = vshrl.u32 %v752, 7
        %v754 = vsub.s32 %v751, %v753
        %v755 = vrot.slane %v739, %v754
        %v757 = vunpack.c.l.s4 1966171168
        %v758 = vunpack.c.0.s8 %v757
        %v759 = vlaneseq
        %v760 = vshrl.u32 %v759, 7
        %v761 = vsub.s32 %v758, %v760
        %v762 = vrot.slane %v746, %v761
        %v764 = vunpack.c.l.s4 1966171168
        %v765 = vunpack.c.0.s8 %v764
        %v766 = vlaneseq
        %v767 = vshrl.u32 %v766, 7
        %v768 = vsub.s32 %v765, %v767
        %v769 = vrot.slane %v747, %v768
        %v771 = vunpack.c.l.s4 1966171168
        %v772 = vunpack.c.0.s8 %v771
        %v773 = vlaneseq
        %v774 = vshrl.u32 %v773, 7
        %v775 = vsub.s32 %v772, %v774
        %v776 = vrot.slane %v748, %v775
        %v777 = vcombine.high %v755, %v755
        %v778 = vcombine.high %v762, %v762
        %v779 = vcombine.high %v769, %v769
        %v780 = vcombine.high %v776, %v776
        %v781 = vlaneseq
        %v782 = vshrl.u32 %v781, 7
        %v783 = vsub.s32 0, %v782
        %v784 = vrot.slane %v755, %v783
        %v785 = vlaneseq
        %v786 = vshrl.u32 %v785, 7
        %v787 = vsub.s32 0, %v786
        %v788 = vrot.slane %v769, %v787
        %v789 = vlaneseq
        %v790 = vshrl.u32 %v789, 7
        %v791 = vsub.s32 0, %v790
        %v792 = vrot.slane %v777, %v791
        %v793 = vlaneseq
        %v794 = vshrl.u32 %v793, 7
        %v795 = vsub.s32 0, %v794
        %v796 = vrot.slane %v779, %v795
        %v797 = vlaneseq
        %v798 = vshrl.u32 %v797, 7
        %v799 = vsub.s32 0, %v798
        %v800 = vrot.slane %v762, %v799
        %v801 = vlaneseq
        %v802 = vshrl.u32 %v801, 7
        %v803 = vsub.s32 0, %v802
        %v804 = vrot.slane %v776, %v803
        %v805 = vlaneseq
        %v806 = vshrl.u32 %v805, 7
        %v807 = vsub.s32 0, %v806
        %v808 = vrot.slane %v778, %v807
        %v809 = vlaneseq
        %v810 = vshrl.u32 %v809, 7
        %v811 = vsub.s32 0, %v810
        %v812 = vrot.slane %v780, %v811
        %v821 = vadd.f32 %v700, %v784
        %v822 = vadd.f32 %v703, %v788
        %v823 = vadd.f32 %v708, %v792
        %v824 = vadd.f32 %v711, %v796
        %v825 = vadd.f32 %v716, %v800
        %v826 = vadd.f32 %v719, %v804
        %v827 = vadd.f32 %v724, %v808
        %v828 = vadd.f32 %v727, %v812
        %v829 = vld [vmem:[%s512] sm:$0xff]
        %v830 = vadd.f32 %v821, %v829
        %v831 = vadd.f32 %v822, %v829
        %v832 = vadd.f32 %v823, %v829
        %v833 = vadd.f32 %v824, %v829
        %v834 = vadd.f32 %v825, %v829
        %v835 = vadd.f32 %v826, %v829
        %v836 = vadd.f32 %v827, %v829
        %v837 = vadd.f32 %v828, %v829
        %v838 = vld [vmem:[#allocation11] sm:$0x1]
        %v839 = vld [vmem:[#allocation13] sm:$0x1]
        %840 = vadd.xlane.f32.xlu0 %v830
        %v841 = vpop.xlane.xlu0 %840
        %842 = vadd.xlane.f32.xlu0 %v831
        %v843 = vpop.xlane.xlu0 %842
        %844 = vadd.xlane.f32.xlu0 %v832
        %v845 = vpop.xlane.xlu0 %844
        %846 = vadd.xlane.f32.xlu0 %v833
        %v847 = vpop.xlane.xlu0 %846
        %848 = vadd.xlane.f32.xlu0 %v834
        %v849 = vpop.xlane.xlu0 %848
        %850 = vadd.xlane.f32.xlu0 %v835
        %v851 = vpop.xlane.xlu0 %850
        %852 = vadd.xlane.f32.xlu0 %v836
        %v853 = vpop.xlane.xlu0 %852
        %854 = vadd.xlane.f32.xlu0 %v837
        %v855 = vpop.xlane.xlu0 %854
        %v856 = vrcp.pop 128.0
        %v857 = vmul.f32 %v841, %v856
        %v858 = vmul.f32 %v843, %v856
        %v859 = vmul.f32 %v845, %v856
        %v860 = vmul.f32 %v847, %v856
        %v861 = vmul.f32 %v849, %v856
        %v862 = vmul.f32 %v851, %v856
        %v863 = vmul.f32 %v853, %v856
        %v864 = vmul.f32 %v855, %v856
        %v865 = vmul.f32 %v830, %v830
        %v866 = vmul.f32 %v831, %v831
        %v867 = vmul.f32 %v832, %v832
        %v868 = vmul.f32 %v833, %v833
        %v869 = vmul.f32 %v834, %v834
        %v870 = vmul.f32 %v835, %v835
        %v871 = vmul.f32 %v836, %v836
        %v872 = vmul.f32 %v837, %v837
        %873 = vadd.xlane.f32.xlu0 %v865
        %v874 = vpop.xlane.xlu0 %873
        %875 = vadd.xlane.f32.xlu0 %v866
        %v876 = vpop.xlane.xlu0 %875
        %877 = vadd.xlane.f32.xlu0 %v867
        %v878 = vpop.xlane.xlu0 %877
        %879 = vadd.xlane.f32.xlu0 %v868
        %v880 = vpop.xlane.xlu0 %879
        %881 = vadd.xlane.f32.xlu0 %v869
        %v882 = vpop.xlane.xlu0 %881
        %883 = vadd.xlane.f32.xlu0 %v870
        %v884 = vpop.xlane.xlu0 %883
        %885 = vadd.xlane.f32.xlu0 %v871
        %v886 = vpop.xlane.xlu0 %885
        %887 = vadd.xlane.f32.xlu0 %v872
        %v888 = vpop.xlane.xlu0 %887
        %v889 = vmul.f32 %v874, %v856
        %v890 = vmul.f32 %v876, %v856
        %v891 = vmul.f32 %v878, %v856
        %v892 = vmul.f32 %v880, %v856
        %v893 = vmul.f32 %v882, %v856
        %v894 = vmul.f32 %v884, %v856
        %v895 = vmul.f32 %v886, %v856
        %v896 = vmul.f32 %v888, %v856
        %v897 = vmul.f32 %v857, %v857
        %v898 = vmul.f32 %v858, %v858
        %v899 = vmul.f32 %v859, %v859
        %v900 = vmul.f32 %v860, %v860
        %v901 = vmul.f32 %v861, %v861
        %v902 = vmul.f32 %v862, %v862
        %v903 = vmul.f32 %v863, %v863
        %v904 = vmul.f32 %v864, %v864
        %v905 = vsub.f32 %v889, %v897
        %v906 = vsub.f32 %v890, %v898
        %v907 = vsub.f32 %v891, %v899
        %v908 = vsub.f32 %v892, %v900
        %v909 = vsub.f32 %v893, %v901
        %v910 = vsub.f32 %v894, %v902
        %v911 = vsub.f32 %v895, %v903
        %v912 = vsub.f32 %v896, %v904
        %v913 = vmax.f32 %v905, 0.0
        %v914 = vmax.f32 %v906, 0.0
        %v915 = vmax.f32 %v907, 0.0
        %v916 = vmax.f32 %v908, 0.0
        %v917 = vmax.f32 %v909, 0.0
        %v918 = vmax.f32 %v910, 0.0
        %v919 = vmax.f32 %v911, 0.0
        %v920 = vmax.f32 %v912, 0.0
        %v921 = vsub.f32 %v830, %v857
        %v922 = vsub.f32 %v831, %v858
        %v923 = vsub.f32 %v832, %v859
        %v924 = vsub.f32 %v833, %v860
        %v925 = vsub.f32 %v834, %v861
        %v926 = vsub.f32 %v835, %v862
        %v927 = vsub.f32 %v836, %v863
        %v928 = vsub.f32 %v837, %v864
        %v929 = vadd.f32 %v913, 1e-05
        %v930 = vadd.f32 %v914, 1e-05
        %v931 = vadd.f32 %v915, 1e-05
        %v932 = vadd.f32 %v916, 1e-05
        %v933 = vadd.f32 %v917, 1e-05
        %v934 = vadd.f32 %v918, 1e-05
        %v935 = vadd.f32 %v919, 1e-05
        %v936 = vadd.f32 %v920, 1e-05
        %v937 = vrsqrt.pop %v929
        %v938 = vrsqrt.pop %v930
        %v939 = vrsqrt.pop %v931
        %v940 = vrsqrt.pop %v932
        %v941 = vrsqrt.pop %v933
        %v942 = vrsqrt.pop %v934
        %v943 = vrsqrt.pop %v935
        %v944 = vrsqrt.pop %v936
        %v945 = vmul.f32 %v921, %v937
        %v946 = vmul.f32 %v922, %v938
        %v947 = vmul.f32 %v923, %v939
        %v948 = vmul.f32 %v924, %v940
        %v949 = vmul.f32 %v925, %v941
        %v950 = vmul.f32 %v926, %v942
        %v951 = vmul.f32 %v927, %v943
        %v952 = vmul.f32 %v928, %v944
        %v954 = vlaneseq
        %v955 = vshrl.u32 %v954, 7
        %v956 = vsub.s32 0, %v955
        %v957 = vrot.slane %v838, %v956
        %v959 = vmul.f32 %v945, %v957
        %v960 = vmul.f32 %v946, %v957
        %v961 = vmul.f32 %v947, %v957
        %v962 = vmul.f32 %v948, %v957
        %v963 = vmul.f32 %v949, %v957
        %v964 = vmul.f32 %v950, %v957
        %v965 = vmul.f32 %v951, %v957
        %v966 = vmul.f32 %v952, %v957
        %v968 = vlaneseq
        %v969 = vshrl.u32 %v968, 7
        %v970 = vsub.s32 0, %v969
        %v971 = vrot.slane %v839, %v970
        %v973 = vadd.f32 %v959, %v971
        %v974 = vadd.f32 %v960, %v971
        %v975 = vadd.f32 %v961, %v971
        %v976 = vadd.f32 %v962, %v971
        %v977 = vadd.f32 %v963, %v971
        %v978 = vadd.f32 %v964, %v971
        %v979 = vadd.f32 %v965, %v971
        %v980 = vadd.f32 %v966, %v971
        %v981 = vmax.f32 %v973, 0.0
        %v982 = vmax.f32 %v974, 0.0
        %v983 = vmax.f32 %v975, 0.0
        %v984 = vmax.f32 %v976, 0.0
        %v985 = vmax.f32 %v977, 0.0
        %v986 = vmax.f32 %v978, 0.0
        %v987 = vmax.f32 %v979, 0.0
        %v988 = vmax.f32 %v980, 0.0
        %v989 = vpack.c.bf16 %v982, %v981
        %v990 = vpack.c.bf16 %v984, %v983
        %v991 = vpack.c.bf16 %v986, %v985
        %v992 = vpack.c.bf16 %v988, %v987
        %v993 = vld [vmem:[#allocation14] sm:$0xf]
        %v994 = vld [vmem:[#allocation14 + $0x4] sm:$0xf]
        %v995 = vld [vmem:[#allocation14 + $0x8] sm:$0xf]
        %v996 = vld [vmem:[#allocation14 + $0xc] sm:$0xf]
        %v997 = vld [vmem:[#allocation14 + $0x10] sm:$0xf]
        %v998 = vld [vmem:[#allocation14 + $0x14] sm:$0xf]
        %v999 = vld [vmem:[#allocation14 + $0x18] sm:$0xf]
        %v1000 = vld [vmem:[#allocation14 + $0x1c] sm:$0xf]
        %v1001 = vld [vmem:[#allocation14 + $0x20] sm:$0xf]
        %v1002 = vld [vmem:[#allocation14 + $0x24] sm:$0xf]
        %v1003 = vld [vmem:[#allocation14 + $0x28] sm:$0xf]
        %v1004 = vld [vmem:[#allocation14 + $0x2c] sm:$0xf]
        %v1005 = vld [vmem:[#allocation14 + $0x30] sm:$0xf]
        %v1006 = vld [vmem:[#allocation14 + $0x34] sm:$0xf]
        %v1007 = vld [vmem:[#allocation14 + $0x38] sm:$0xf]
        %v1008 = vld [vmem:[#allocation14 + $0x3c] sm:$0xf]
        %v1025 = vunpack.c.l.b16 %v993
        %v1026 = vunpack.c.l.b16 %v994
        %v1027 = vunpack.c.l.b16 %v995
        %v1028 = vunpack.c.l.b16 %v996
        %v1029 = vunpack.c.l.b16 %v997
        %v1030 = vunpack.c.l.b16 %v998
        %v1031 = vunpack.c.l.b16 %v999
        %v1032 = vunpack.c.l.b16 %v1000
        %v1033 = vunpack.c.l.b16 %v1001
        %v1034 = vunpack.c.l.b16 %v1002
        %v1035 = vunpack.c.l.b16 %v1003
        %v1036 = vunpack.c.l.b16 %v1004
        %v1037 = vunpack.c.l.b16 %v1005
        %v1038 = vunpack.c.l.b16 %v1006
        %v1039 = vunpack.c.l.b16 %v1007
        %v1040 = vunpack.c.l.b16 %v1008
        %v1041 = vpack.c.b16 %v1026, %v1025
        %v1042 = vpack.c.b16 %v1028, %v1027
        %v1043 = vpack.c.b16 %v1030, %v1029
        %v1044 = vpack.c.b16 %v1032, %v1031
        %v1045 = vpack.c.b16 %v1034, %v1033
        %v1046 = vpack.c.b16 %v1036, %v1035
        %v1047 = vpack.c.b16 %v1038, %v1037
        %v1048 = vpack.c.b16 %v1040, %v1039
        %1057 = vmatprep.subr.bf16.mxu0 0
        %1058 = vmatpush1.bf16.msra.mxu0 %v1041
        %1059 = vmatprep.subr.bf16.mxu0 0
        %1060 = vmatpush1.bf16.msra.mxu0 %v1042
        %1061 = vmatprep.subr.bf16.mxu0 0
        %1062 = vmatpush1.bf16.msra.mxu0 %v1043
        %1063 = vmatprep.subr.bf16.mxu0 0
        %1064 = vmatpush1.bf16.msra.mxu0 %v1044
        %1065 = vmatprep.subr.bf16.mxu0 0
        %1066 = vmatpush1.bf16.msra.mxu0 %v1045
        %1067 = vmatprep.subr.bf16.mxu0 0
        %1068 = vmatpush1.bf16.msra.mxu0 %v1046
        %1069 = vmatprep.subr.bf16.mxu0 0
        %1070 = vmatpush1.bf16.msra.mxu0 %v1047
        %1071 = vmatprep.subr.bf16.mxu0 0
        %1072 = vmatpush1.bf16.msra.mxu0 %v1048
        %1073 = vmatprep.subr.bf16.mxu0 0
        %1074 = vmatpush1.bf16.msra.mxu0 0
        %1075 = vmatprep.subr.bf16.mxu0 0
        %1076 = vmatpush1.bf16.msra.mxu0 0
        %1077 = vmatprep.subr.bf16.mxu0 0
        %1078 = vmatpush1.bf16.msra.mxu0 0
        %1079 = vmatprep.subr.bf16.mxu0 0
        %1080 = vmatpush1.bf16.msra.mxu0 0
        %1081 = vmatprep.subr.bf16.mxu0 0
        %1082 = vmatpush1.bf16.msra.mxu0 0
        %1083 = vmatprep.subr.bf16.mxu0 0
        %1084 = vmatpush1.bf16.msra.mxu0 0
        %1085 = vmatprep.subr.bf16.mxu0 0
        %1086 = vmatpush1.bf16.msra.mxu0 0
        %1087 = vmatprep.subr.bf16.mxu0 0
        %1088 = vmatpush1.bf16.msra.mxu0 0
        %1089 = vmatprep.mubr.bf16.mxu0 0
        %1090 = vmatmul.mubr.bf16.gmra.mrb[0].mxu0 %v989
        %v1091 = vpop.f32.mrb[0].mxu0
        %v1092 = vadd.f32 0.0, %v1091
        %v1093 = vpop.f32.mrb[0].mxu0
        %v1094 = vpop.f32.mrb[0].mxu0
        %v1095 = vadd.f32 0.0, %v1094
        %v1096 = vpop.f32.mrb[0].mxu0
        %1097 = vmatprep.mubr.bf16.mxu0 0
        %1098 = vmatmul.mubr.bf16.gmra.mrb[0].mxu0 %v990
        %v1099 = vpop.f32.mrb[0].mxu0
        %v1100 = vadd.f32 0.0, %v1099
        %v1101 = vpop.f32.mrb[0].mxu0
        %v1102 = vpop.f32.mrb[0].mxu0
        %v1103 = vadd.f32 0.0, %v1102
        %v1104 = vpop.f32.mrb[0].mxu0
        %1105 = vmatprep.mubr.bf16.mxu0 0
        %1106 = vmatmul.mubr.bf16.gmra.mrb[0].mxu0 %v991
        %v1107 = vpop.f32.mrb[0].mxu0
        %v1108 = vadd.f32 0.0, %v1107
        %v1109 = vpop.f32.mrb[0].mxu0
        %v1110 = vpop.f32.mrb[0].mxu0
        %v1111 = vadd.f32 0.0, %v1110
        %v1112 = vpop.f32.mrb[0].mxu0
        %1113 = vmatprep.mubr.bf16.mxu0 0
        %1114 = vmatmul.mubr.bf16.gmra.mrb[0].mxu0 %v992
        %v1115 = vpop.f32.mrb[0].mxu0
        %v1116 = vadd.f32 0.0, %v1115
        %v1117 = vpop.f32.mrb[0].mxu0
        %v1118 = vpop.f32.mrb[0].mxu0
        %v1119 = vadd.f32 0.0, %v1118
        %v1120 = vpop.f32.mrb[0].mxu0
        %1121 = vdwg.mxu0
        %v1122 = vld [vmem:[#allocation16] sm:$0x1]
        %v1124 = vlaneseq
        %v1125 = vshrl.u32 %v1124, 7
        %v1126 = vsub.s32 0, %v1125
        %v1127 = vrot.slane %v1122, %v1126
        %v1129 = vadd.f32 %v1092, %v1127
        %v1130 = vadd.f32 %v1095, %v1127
        %v1131 = vadd.f32 %v1100, %v1127
        %v1132 = vadd.f32 %v1103, %v1127
        %v1133 = vadd.f32 %v1108, %v1127
        %v1134 = vadd.f32 %v1111, %v1127
        %v1135 = vadd.f32 %v1116, %v1127
        %v1136 = vadd.f32 %v1119, %v1127
        %v1137 = vunpack.c.l.bf16 %v592
        %v1138 = vunpack.c.l.bf16 %v593
        %v1139 = vunpack.c.l.bf16 %v594
        %v1140 = vunpack.c.l.bf16 %v595
        %v1141 = vunpack.c.l.bf16 %v596
        %v1142 = vunpack.c.l.bf16 %v597
        %v1143 = vunpack.c.l.bf16 %v598
        %v1144 = vunpack.c.l.bf16 %v599
        %v1145 = vadd.f32 %v1137, %v1129
        %v1146 = vadd.f32 %v1138, %v1130
        %v1147 = vadd.f32 %v1139, %v1131
        %v1148 = vadd.f32 %v1140, %v1132
        %v1149 = vadd.f32 %v1141, %v1133
        %v1150 = vadd.f32 %v1142, %v1134
        %v1151 = vadd.f32 %v1143, %v1135
        %v1152 = vadd.f32 %v1144, %v1136
        %v1153 = vpack.c.bf16 %v1145, %v1145
        %v1154 = vpack.c.bf16 %v1146, %v1146
        %v1155 = vpack.c.bf16 %v1147, %v1147
        %v1156 = vpack.c.bf16 %v1148, %v1148
        %v1157 = vpack.c.bf16 %v1149, %v1149
        %v1158 = vpack.c.bf16 %v1150, %v1150
        %v1159 = vpack.c.bf16 %v1151, %v1151
        %v1160 = vpack.c.bf16 %v1152, %v1152
        %vm1161 = vcmask 519168
        %1162 = vst.msk [vmem:[%s581] sm:$0xf] %vm1161, %v1153
        %1163 = vst.msk [vmem:[%s581 + $0x4] sm:$0xf] %vm1161, %v1154
        %1164 = vst.msk [vmem:[%s581 + $0x8] sm:$0xf] %vm1161, %v1155
        %1165 = vst.msk [vmem:[%s581 + $0xc] sm:$0xf] %vm1161, %v1156
        %1166 = vst.msk [vmem:[%s581 + $0x10] sm:$0xf] %vm1161, %v1157
        %1167 = vst.msk [vmem:[%s581 + $0x14] sm:$0xf] %vm1161, %v1158
        %1168 = vst.msk [vmem:[%s581 + $0x18] sm:$0xf] %vm1161, %v1159
        %1169 = vst.msk [vmem:[%s581 + $0x1c] sm:$0xf] %vm1161, %v1160
        %v1170 = vunpack.c.l.bf16 %v1153
        %v1171 = vunpack.c.l.bf16 %v1154
        %v1172 = vunpack.c.l.bf16 %v1155
        %v1173 = vunpack.c.l.bf16 %v1156
        %v1174 = vunpack.c.l.bf16 %v1157
        %v1175 = vunpack.c.l.bf16 %v1158
        %v1176 = vunpack.c.l.bf16 %v1159
        %v1177 = vunpack.c.l.bf16 %v1160
        %v1178 = vld [vmem:[%s494] sm:$0xff]
        %v1179 = vlaneseq
        %v1180 = vshrl.u32 %v1179, 7
        %v1181 = vsub.s32 0, %v1180
        %v1182 = vrot.slane %v1178, %v1181
        %1184 = vbcast.lane.b32.xlu0 %v1182, 256
        %v1185 = vpop.permute.xlu0 %1184
        %v1186 = vlaneseq
        %v1187 = vshrl.u32 %v1186, 7
        %v1188 = vsub.s32 1, %v1187
        %v1189 = vrot.slane %v1178, %v1188
        %1191 = vbcast.lane.b32.xlu0 %v1189, 256
        %v1192 = vpop.permute.xlu0 %1191
        %v1193 = vlaneseq
        %v1194 = vshrl.u32 %v1193, 7
        %v1195 = vsub.s32 2, %v1194
        %v1196 = vrot.slane %v1178, %v1195
        %1198 = vbcast.lane.b32.xlu0 %v1196, 256
        %v1199 = vpop.permute.xlu0 %1198
        %v1200 = vlaneseq
        %v1201 = vshrl.u32 %v1200, 7
        %v1202 = vsub.s32 3, %v1201
        %v1203 = vrot.slane %v1178, %v1202
        %1205 = vbcast.lane.b32.xlu0 %v1203, 256
        %v1206 = vpop.permute.xlu0 %1205
        %v1207 = vlaneseq
        %v1208 = vshrl.u32 %v1207, 7
        %v1209 = vsub.s32 4, %v1208
        %v1210 = vrot.slane %v1178, %v1209
        %1212 = vbcast.lane.b32.xlu0 %v1210, 256
        %v1213 = vpop.permute.xlu0 %1212
        %v1214 = vlaneseq
        %v1215 = vshrl.u32 %v1214, 7
        %v1216 = vsub.s32 5, %v1215
        %v1217 = vrot.slane %v1178, %v1216
        %1219 = vbcast.lane.b32.xlu0 %v1217, 256
        %v1220 = vpop.permute.xlu0 %1219
        %v1221 = vlaneseq
        %v1222 = vshrl.u32 %v1221, 7
        %v1223 = vsub.s32 6, %v1222
        %v1224 = vrot.slane %v1178, %v1223
        %1226 = vbcast.lane.b32.xlu0 %v1224, 256
        %v1227 = vpop.permute.xlu0 %1226
        %v1228 = vlaneseq
        %v1229 = vshrl.u32 %v1228, 7
        %v1230 = vsub.s32 7, %v1229
        %v1231 = vrot.slane %v1178, %v1230
        %1233 = vbcast.lane.b32.xlu0 %v1231, 256
        %v1234 = vpop.permute.xlu0 %1233
        %v1235 = vmul.f32 %v1170, %v1185
        %v1236 = vmul.f32 %v1171, %v1192
        %v1237 = vmul.f32 %v1172, %v1199
        %v1238 = vmul.f32 %v1173, %v1206
        %v1239 = vmul.f32 %v1174, %v1213
        %v1240 = vmul.f32 %v1175, %v1220
        %v1241 = vmul.f32 %v1176, %v1227
        %v1242 = vmul.f32 %v1177, %v1234
        %v1243 = vsel %vm652, %v1235, 0.0
        %v1244 = vrot.slane %v1243, 4
        %v1245 = vadd.f32 %v1243, %v1244
        %v1246 = vrot.slane %v1245, 2
        %v1247 = vadd.f32 %v1245, %v1246
        %v1248 = vrot.slane %v1247, 1
        %v1249 = vadd.f32 %v1247, %v1248
        %v1250 = vsel %vm652, %v1236, 0.0
        %v1251 = vrot.slane %v1250, 4
        %v1252 = vadd.f32 %v1250, %v1251
        %v1253 = vrot.slane %v1252, 2
        %v1254 = vadd.f32 %v1252, %v1253
        %v1255 = vrot.slane %v1254, 1
        %v1256 = vadd.f32 %v1254, %v1255
        %v1257 = vsel %vm652, %v1237, 0.0
        %v1258 = vrot.slane %v1257, 4
        %v1259 = vadd.f32 %v1257, %v1258
        %v1260 = vrot.slane %v1259, 2
        %v1261 = vadd.f32 %v1259, %v1260
        %v1262 = vrot.slane %v1261, 1
        %v1263 = vadd.f32 %v1261, %v1262
        %v1264 = vsel %vm652, %v1238, 0.0
        %v1265 = vrot.slane %v1264, 4
        %v1266 = vadd.f32 %v1264, %v1265
        %v1267 = vrot.slane %v1266, 2
        %v1268 = vadd.f32 %v1266, %v1267
        %v1269 = vrot.slane %v1268, 1
        %v1270 = vadd.f32 %v1268, %v1269
        %v1271 = vsel %vm652, %v1239, 0.0
        %v1272 = vrot.slane %v1271, 4
        %v1273 = vadd.f32 %v1271, %v1272
        %v1274 = vrot.slane %v1273, 2
        %v1275 = vadd.f32 %v1273, %v1274
        %v1276 = vrot.slane %v1275, 1
        %v1277 = vadd.f32 %v1275, %v1276
        %v1278 = vsel %vm652, %v1240, 0.0
        %v1279 = vrot.slane %v1278, 4
        %v1280 = vadd.f32 %v1278, %v1279
        %v1281 = vrot.slane %v1280, 2
        %v1282 = vadd.f32 %v1280, %v1281
        %v1283 = vrot.slane %v1282, 1
        %v1284 = vadd.f32 %v1282, %v1283
        %v1285 = vsel %vm652, %v1241, 0.0
        %v1286 = vrot.slane %v1285, 4
        %v1287 = vadd.f32 %v1285, %v1286
        %v1288 = vrot.slane %v1287, 2
        %v1289 = vadd.f32 %v1287, %v1288
        %v1290 = vrot.slane %v1289, 1
        %v1291 = vadd.f32 %v1289, %v1290
        %v1292 = vsel %vm652, %v1242, 0.0
        %v1293 = vrot.slane %v1292, 4
        %v1294 = vadd.f32 %v1292, %v1293
        %v1295 = vrot.slane %v1294, 2
        %v1296 = vadd.f32 %v1294, %v1295
        %v1297 = vrot.slane %v1296, 1
        %v1298 = vadd.f32 %v1296, %v1297
        %vm1307 = vcmask 1041409
        %v1308 = vsel %vm1307, %v1256, %v1249
        %vm1309 = vcmask 1042434
        %v1310 = vsel %vm1309, %v1263, %v1308
        %vm1311 = vcmask 1043459
        %v1312 = vsel %vm1311, %v1270, %v1310
        %vm1313 = vcmask 1044484
        %v1314 = vsel %vm1313, %v1277, %v1312
        %vm1315 = vcmask 1045509
        %v1316 = vsel %vm1315, %v1284, %v1314
        %vm1317 = vcmask 1046534
        %v1318 = vsel %vm1317, %v1291, %v1316
        %vm1319 = vcmask 1047559
        %v1320 = vsel %vm1319, %v1298, %v1318
        %1322 = vst.msk [vmem:[%s588] sm:$0xff] %vm652, %v1320
        %s1323 = sand.u32 %s276, 1
        %s1324 = scalar_lea.sflag [#allocation4], %s1323
        %s1325 = sand.u32 %s276, 1
        %s1326 = smul.addr %s1325, 32
        %s1327 = scalar_lea.vmem [#allocation17], %s1326
        %s1328 = sand.u32 %s304, 1
        %s1329 = scalar_lea.sflag [#allocation19], %s1328
        %s1330 = sand.u32 %s304, 1
        %s1331 = smul.addr %s1330, 8
        %s1332 = scalar_lea.vmem [#allocation18], %s1331
        // Predicated region
        $region93: #{graph_sampler_forward.9} parent=55 // pred_check
          %p1333 = pneg %p286
        $region94: #{graph_sampler_forward.9} parent=55 // pred_check_branch
          %1335 = sbr.rel (%p1333) target = $region96
        $region95: #{graph_sampler_forward.9} parent=55 // pred_region
          %s1336 = smul.u32 8, %s44
          %s1338 = ssub.s32 512, 512
          %1339 = vsyncadd %s1324, %s1338
          %s1340 = smul.addr %s43, 8
          %s1341 = sadd.s32 %s1336, %s1340
          %s1342 = smul.addr %s1341, 64
          %s1343 = scalar_lea.hbm %s9, %s1342
          %s1344 = sshll.u32 %s1327, 4
          %s1345 = int_to_ptr.vmem [resolvable:$true] %s1344
          %1350 = dma.vmem_to_hbm [thread:$0]  %s1345, 512, %s1343, %s1324, 64, 64, 4
        $region96: #{graph_sampler_forward.9} parent=55 // pred_fallthru
          _
        // Predicated region
        $region97: #{graph_sampler_forward.9} parent=55 // pred_check
          %p1351 = pneg %p314
        $region98: #{graph_sampler_forward.9} parent=55 // pred_check_branch
          %1353 = sbr.rel (%p1351) target = $region100
        $region99: #{graph_sampler_forward.9} parent=55 // pred_region
          %s1355 = ssub.s32 128, 128
          %1356 = vsyncadd %s1329, %s1355
          %s1357 = sadd.s32 %s44, %s43
          %s1358 = smul.addr %s1357, 128
          %s1359 = scalar_lea.hbm %s10, %s1358
          %s1361 = sshll.u32 %s1332, 4
          %s1362 = int_to_ptr.vmem [resolvable:$true] %s1361
          %1364 = dma.vmem_to_hbm [thread:$0]  %s1362, 128, %s1359, %s1329
        $region100: #{graph_sampler_forward.9} parent=55 // pred_fallthru
          _
      $region56: #{graph_sampler_forward.9} parent=5 // pred_fallthru
        _
      %p1365 = scmp.le.s32.totalorder 2, %s34
      // Predicated region
      $region101: #{graph_sampler_forward.9} parent=5 // pred_check
        %p1366 = pneg %p1365
      $region102: #{graph_sampler_forward.9} parent=5 // pred_check_branch
        %1368 = sbr.rel (%p1366) target = $region104
      $region103: #{graph_sampler_forward.9} parent=5 // pred_region
        %s1369 = ssub.s32 %s34, 2
        // Predicated region
        $region105: #{graph_sampler_forward.9} parent=103 // pred_check
          %p1370 = pneg %p292
        $region106: #{graph_sampler_forward.9} parent=103 // pred_check_branch
          %1372 = sbr.rel (%p1370) target = $region108
        $region107: #{graph_sampler_forward.9} parent=103 // pred_region
          %s1373 = sand.u32 %s277, 1
          %s1374 = scalar_lea.sflag [#allocation4], %s1373
          %s1375 = sand.u32 %s277, 1
          %s1376 = smul.addr %s1375, 32
          %s1377 = scalar_lea.vmem [#allocation17], %s1376
          %1378 = dma.done %s1374, 512
        $region108: #{graph_sampler_forward.9} parent=103 // pred_fallthru
          _
        // Predicated region
        $region109: #{graph_sampler_forward.9} parent=103 // pred_check
          %p1379 = pneg %p320
        $region110: #{graph_sampler_forward.9} parent=103 // pred_check_branch
          %1381 = sbr.rel (%p1379) target = $region112
        $region111: #{graph_sampler_forward.9} parent=103 // pred_region
          %s1382 = sand.u32 %s305, 1
          %s1383 = scalar_lea.sflag [#allocation19], %s1382
          %s1384 = sand.u32 %s305, 1
          %s1385 = smul.addr %s1384, 8
          %s1386 = scalar_lea.vmem [#allocation18], %s1385
          %1387 = dma.done %s1383, 128
        $region112: #{graph_sampler_forward.9} parent=103 // pred_fallthru
          _
      $region104: #{graph_sampler_forward.9} parent=5 // pred_fallthru
        _
    $region6: #{graph_sampler_forward.9} parent=1 // loop_footer
      %s38 = sadd.s32 1, %s34
    $region7: #{graph_sampler_forward.9} parent=1 // loop_footer_branch
      %33 = sbr.rel target = $region3
    $region8: #{graph_sampler_forward.9} parent=1 // loop_exit
      _
    %1388 = vsyncpa [#allocation3], 1
    %s1389 = scalar_lea.sflag [#allocation3], 1
    %1390 = vsyncpa %s1389, 1
    %1391 = vsyncpa [#allocation6], 1
    %s1392 = scalar_lea.sflag [#allocation6], 1
    %1393 = vsyncpa %s1392, 1
    %1394 = vsyncpa [#allocation9], 1
    %s1395 = scalar_lea.sflag [#allocation9], 1
    %1396 = vsyncpa %s1395, 1
    %1397 = vsyncpa [#allocation12], 1
    %1398 = vsyncpa [#allocation15], 1
    %1399 = vsyncpa [#allocation4], 1
    %s1400 = scalar_lea.sflag [#allocation4], 1
    %1401 = vsyncpa %s1400, 1
    %1402 = vsyncpa [#allocation19], 1
    %s1403 = scalar_lea.sflag [#allocation19], 1
    %1404 = vsyncpa %s1403, 1

// kernel: graph_sampler_forward.8
$region0: #{graph_sampler_forward.8}
  #allocation0 [shape = 'u32[]', space=smem, size = 0x4, offset = 0x4, fixed_abs, tag = 'smem constant byte address 0x4 - core index']
  #allocation1 [shape = 'u32[144,128]{1,0:T(1,128)}', space=vmem, size = 0x12000, scoped, tag = 'internal scratch']
  %s0 = inlined_call_operand.hbm [shape: f32[16,64], index: 0, kind: input, shape index: {}]
  %s1 = inlined_call_operand.hbm [shape: f32[16,128], index: 1, kind: input, shape index: {}]
  %s2 = inlined_call_operand.hbm [shape: bf16[64,128], index: 2, kind: input, shape index: {}]
  %s3 = inlined_call_operand.hbm [shape: bf16[128,128], index: 3, kind: input, shape index: {}]
  %s4 = inlined_call_operand.hbm [shape: f32[1,128], index: 4, kind: input, shape index: {}]
  %s5 = inlined_call_operand.hbm [shape: f32[1,128], index: 5, kind: input, shape index: {}]
  %s6 = inlined_call_operand.hbm [shape: f32[1,128], index: 6, kind: input, shape index: {}]
  %s7 = inlined_call_operand.hbm [shape: bf16[128,128], index: 7, kind: input, shape index: {}]
  %s8 = inlined_call_operand.hbm [shape: f32[1,128], index: 8, kind: input, shape index: {}]
  %s9 = inlined_call_operand.hbm [shape: f32[16,128], index: 9, kind: output, shape index: {}]
  %s10 = sld [smem:[#allocation0]]
  $region82: #{graph_sampler_forward.8} parent=0
    _
  %s12 = ssub.s32 1, %s10
  %s13 = scalar_select 0, %s12, %s10
  $region1: #{graph_sampler_forward.8} parent=0
    #allocation2 [shape = 'u8[8192]{0}', space=vmem, size = 0x2000, scoped, tag = 'input window, operand 0, single buffered']
    #allocation3 [shape = 's32[1]{0}', space=sflag, size = 0x4, scoped, tag = 'scoped memory for graph_sampler_forward.8']
    #allocation4 [shape = 's32[1]{0}', space=sflag, size = 0x4, scoped, tag = 'scoped memory for graph_sampler_forward.8']
    #allocation5 [shape = 'u8[8192]{0}', space=vmem, size = 0x2000, scoped, tag = 'input window, operand 1, single buffered']
    #allocation6 [shape = 's32[1]{0}', space=sflag, size = 0x4, scoped, tag = 'scoped memory for graph_sampler_forward.8']
    #allocation7 [shape = 'u8[16384]{0}', space=vmem, size = 0x4000, scoped, tag = 'input window, operand 2, single buffered']
    #allocation8 [shape = 'u8[32768]{0}', space=vmem, size = 0x8000, scoped, tag = 'input window, operand 3, single buffered']
    #allocation9 [shape = 's32[1]{0}', space=sflag, size = 0x4, scoped, tag = 'scoped memory for graph_sampler_forward.8']
    #allocation10 [shape = 'u8[512]{0}', space=vmem, size = 0x400, scoped, tag = 'input window, operand 4, single buffered']
    #allocation11 [shape = 'u8[512]{0}', space=vmem, size = 0x400, scoped, tag = 'input window, operand 5, single buffered']
    #allocation12 [shape = 's32[1]{0}', space=sflag, size = 0x4, scoped, tag = 'scoped memory for graph_sampler_forward.8']
    #allocation13 [shape = 'u8[512]{0}', space=vmem, size = 0x400, scoped, tag = 'input window, operand 6, single buffered']
    #allocation14 [shape = 'u8[32768]{0}', space=vmem, size = 0x8000, scoped, tag = 'input window, operand 7, single buffered']
    #allocation15 [shape = 's32[1]{0}', space=sflag, size = 0x4, scoped, tag = 'scoped memory for graph_sampler_forward.8']
    #allocation16 [shape = 'u8[512]{0}', space=vmem, size = 0x400, scoped, tag = 'input window, operand 8, single buffered']
    #allocation17 [shape = 'u8[8192]{0}', space=vmem, size = 0x2000, scoped, tag = 'output window, operand 0, single buffered']
    %14 = vsyncpa [#allocation3], 0
    %15 = vsyncpa [#allocation6], 0
    %16 = vsyncpa [#allocation9], 0
    %17 = vsyncpa [#allocation12], 0
    %18 = vsyncpa [#allocation15], 0
    %19 = vsyncpa [#allocation4], 0
    // Predicated region
    $region2: #{graph_sampler_forward.8} parent=1 // pred_check
      _
    $region3: #{graph_sampler_forward.8} parent=1 // pred_check_branch
      %21 = sbr.rel (0) target = $region5
    $region4: #{graph_sampler_forward.8} parent=1 // pred_region
      %s23 = ssub.s32 256, 256
      %24 = vsyncadd [#allocation3], %s23
      %s25 = sshll.u32 [#allocation2], 4
      %s26 = int_to_ptr.vmem [resolvable:$true] %s25
      %31 = dma.hbm_to_vmem [thread:$0]  %s0, 256, %s26, [#allocation3], 128, 128, 8
    $region5: #{graph_sampler_forward.8} parent=1 // pred_fallthru
      _
    // Predicated region
    $region6: #{graph_sampler_forward.8} parent=1 // pred_check
      _
    $region7: #{graph_sampler_forward.8} parent=1 // pred_check_branch
      %33 = sbr.rel (0) target = $region9
    $region8: #{graph_sampler_forward.8} parent=1 // pred_region
      %s35 = ssub.s32 256, 256
      %36 = vsyncadd [#allocation6], %s35
      %s37 = sshll.u32 [#allocation5], 4
      %s38 = int_to_ptr.vmem [resolvable:$true] %s37
      %43 = dma.hbm_to_vmem [thread:$0]  %s1, 256, %s38, [#allocation6], 128, 128, 8
    $region9: #{graph_sampler_forward.8} parent=1 // pred_fallthru
      _
    // Predicated region
    $region10: #{graph_sampler_forward.8} parent=1 // pred_check
      _
    $region11: #{graph_sampler_forward.8} parent=1 // pred_check_branch
      %45 = sbr.rel (0) target = $region13
    $region12: #{graph_sampler_forward.8} parent=1 // pred_region
      %s47 = ssub.s32 512, 512
      %48 = vsyncadd [#allocation6], %s47
      %s49 = sshll.u32 [#allocation7], 4
      %s50 = int_to_ptr.vmem [resolvable:$true] %s49
      %55 = dma.hbm_to_vmem [thread:$0]  %s2, 512, %s50, [#allocation6], 64, 64, 4
    $region13: #{graph_sampler_forward.8} parent=1 // pred_fallthru
      _
    // Predicated region
    $region14: #{graph_sampler_forward.8} parent=1 // pred_check
      _
    $region15: #{graph_sampler_forward.8} parent=1 // pred_check_branch
      %57 = sbr.rel (0) target = $region17
    $region16: #{graph_sampler_forward.8} parent=1 // pred_region
      %s59 = ssub.s32 1024, 1024
      %60 = vsyncadd [#allocation9], %s59
      %s61 = sshll.u32 [#allocation8], 4
      %s62 = int_to_ptr.vmem [resolvable:$true] %s61
      %67 = dma.hbm_to_vmem [thread:$0]  %s3, 1024, %s62, [#allocation9], 64, 64, 4
    $region17: #{graph_sampler_forward.8} parent=1 // pred_fallthru
      _
    // Predicated region
    $region18: #{graph_sampler_forward.8} parent=1 // pred_check
      _
    $region19: #{graph_sampler_forward.8} parent=1 // pred_check_branch
      %69 = sbr.rel (0) target = $region21
    $region20: #{graph_sampler_forward.8} parent=1 // pred_region
      %s71 = ssub.s32 16, 16
      %72 = vsyncadd [#allocation9], %s71
      %s74 = sshll.u32 [#allocation10], 4
      %s75 = int_to_ptr.vmem [resolvable:$true] %s74
      %77 = dma.hbm_to_vmem [thread:$0]  %s4, 16, %s75, [#allocation9]
    $region21: #{graph_sampler_forward.8} parent=1 // pred_fallthru
      _
    // Predicated region
    $region22: #{graph_sampler_forward.8} parent=1 // pred_check
      _
    $region23: #{graph_sampler_forward.8} parent=1 // pred_check_branch
      %79 = sbr.rel (0) target = $region25
    $region24: #{graph_sampler_forward.8} parent=1 // pred_region
      %s81 = ssub.s32 16, 16
      %82 = vsyncadd [#allocation12], %s81
      %s84 = sshll.u32 [#allocation11], 4
      %s85 = int_to_ptr.vmem [resolvable:$true] %s84
      %87 = dma.hbm_to_vmem [thread:$0]  %s5, 16, %s85, [#allocation12]
    $region25: #{graph_sampler_forward.8} parent=1 // pred_fallthru
      _
    // Predicated region
    $region26: #{graph_sampler_forward.8} parent=1 // pred_check
      _
    $region27: #{graph_sampler_forward.8} parent=1 // pred_check_branch
      %89 = sbr.rel (0) target = $region29
    $region28: #{graph_sampler_forward.8} parent=1 // pred_region
      %s91 = ssub.s32 16, 16
      %92 = vsyncadd [#allocation12], %s91
      %s94 = sshll.u32 [#allocation13], 4
      %s95 = int_to_ptr.vmem [resolvable:$true] %s94
      %97 = dma.hbm_to_vmem [thread:$0]  %s6, 16, %s95, [#allocation12]
    $region29: #{graph_sampler_forward.8} parent=1 // pred_fallthru
      _
    // Predicated region
    $region30: #{graph_sampler_forward.8} parent=1 // pred_check
      _
    $region31: #{graph_sampler_forward.8} parent=1 // pred_check_branch
      %99 = sbr.rel (0) target = $region33
    $region32: #{graph_sampler_forward.8} parent=1 // pred_region
      %s101 = ssub.s32 1024, 1024
      %102 = vsyncadd [#allocation15], %s101
      %s103 = sshll.u32 [#allocation14], 4
      %s104 = int_to_ptr.vmem [resolvable:$true] %s103
      %109 = dma.hbm_to_vmem [thread:$0]  %s7, 1024, %s104, [#allocation15], 64, 64, 4
    $region33: #{graph_sampler_forward.8} parent=1 // pred_fallthru
      _
    // Predicated region
    $region34: #{graph_sampler_forward.8} parent=1 // pred_check
      _
    $region35: #{graph_sampler_forward.8} parent=1 // pred_check_branch
      %111 = sbr.rel (0) target = $region37
    $region36: #{graph_sampler_forward.8} parent=1 // pred_region
      %s113 = ssub.s32 16, 16
      %114 = vsyncadd [#allocation15], %s113
      %s116 = sshll.u32 [#allocation16], 4
      %s117 = int_to_ptr.vmem [resolvable:$true] %s116
      %119 = dma.hbm_to_vmem [thread:$0]  %s8, 16, %s117, [#allocation15]
    $region37: #{graph_sampler_forward.8} parent=1 // pred_fallthru
      _
    // Predicated region
    $region38: #{graph_sampler_forward.8} parent=1 // pred_check
      _
    $region39: #{graph_sampler_forward.8} parent=1 // pred_check_branch
      %121 = sbr.rel (0) target = $region41
    $region40: #{graph_sampler_forward.8} parent=1 // pred_region
      %122 = dma.done [#allocation3], 256
    $region41: #{graph_sampler_forward.8} parent=1 // pred_fallthru
      _
    // Predicated region
    $region42: #{graph_sampler_forward.8} parent=1 // pred_check
      _
    $region43: #{graph_sampler_forward.8} parent=1 // pred_check_branch
      %124 = sbr.rel (0) target = $region45
    $region44: #{graph_sampler_forward.8} parent=1 // pred_region
      %125 = dma.done [#allocation6], 256
    $region45: #{graph_sampler_forward.8} parent=1 // pred_fallthru
      _
    // Predicated region
    $region46: #{graph_sampler_forward.8} parent=1 // pred_check
      _
    $region47: #{graph_sampler_forward.8} parent=1 // pred_check_branch
      %127 = sbr.rel (0) target = $region49
    $region48: #{graph_sampler_forward.8} parent=1 // pred_region
      %128 = dma.done [#allocation6], 512
    $region49: #{graph_sampler_forward.8} parent=1 // pred_fallthru
      _
    // Predicated region
    $region50: #{graph_sampler_forward.8} parent=1 // pred_check
      _
    $region51: #{graph_sampler_forward.8} parent=1 // pred_check_branch
      %130 = sbr.rel (0) target = $region53
    $region52: #{graph_sampler_forward.8} parent=1 // pred_region
      %131 = dma.done [#allocation9], 1024
    $region53: #{graph_sampler_forward.8} parent=1 // pred_fallthru
      _
    // Predicated region
    $region54: #{graph_sampler_forward.8} parent=1 // pred_check
      _
    $region55: #{graph_sampler_forward.8} parent=1 // pred_check_branch
      %133 = sbr.rel (0) target = $region57
    $region56: #{graph_sampler_forward.8} parent=1 // pred_region
      %134 = dma.done [#allocation9], 16
    $region57: #{graph_sampler_forward.8} parent=1 // pred_fallthru
      _
    // Predicated region
    $region58: #{graph_sampler_forward.8} parent=1 // pred_check
      _
    $region59: #{graph_sampler_forward.8} parent=1 // pred_check_branch
      %136 = sbr.rel (0) target = $region61
    $region60: #{graph_sampler_forward.8} parent=1 // pred_region
      %137 = dma.done [#allocation12], 16
    $region61: #{graph_sampler_forward.8} parent=1 // pred_fallthru
      _
    // Predicated region
    $region62: #{graph_sampler_forward.8} parent=1 // pred_check
      _
    $region63: #{graph_sampler_forward.8} parent=1 // pred_check_branch
      %139 = sbr.rel (0) target = $region65
    $region64: #{graph_sampler_forward.8} parent=1 // pred_region
      %140 = dma.done [#allocation12], 16
    $region65: #{graph_sampler_forward.8} parent=1 // pred_fallthru
      _
    // Predicated region
    $region66: #{graph_sampler_forward.8} parent=1 // pred_check
      _
    $region67: #{graph_sampler_forward.8} parent=1 // pred_check_branch
      %142 = sbr.rel (0) target = $region69
    $region68: #{graph_sampler_forward.8} parent=1 // pred_region
      %143 = dma.done [#allocation15], 1024
    $region69: #{graph_sampler_forward.8} parent=1 // pred_fallthru
      _
    // Predicated region
    $region70: #{graph_sampler_forward.8} parent=1 // pred_check
      _
    $region71: #{graph_sampler_forward.8} parent=1 // pred_check_branch
      %145 = sbr.rel (0) target = $region73
    $region72: #{graph_sampler_forward.8} parent=1 // pred_region
      %146 = dma.done [#allocation15], 16
    $region73: #{graph_sampler_forward.8} parent=1 // pred_fallthru
      _
    %v148 = vld [vmem:[#allocation5] sm:$0xff]
    %v149 = vld [vmem:[#allocation5 + $0x8] sm:$0xff]
    %v150 = vld [vmem:[#allocation2] sm:$0xff]
    %v151 = vld [vmem:[#allocation2 + $0x8] sm:$0xff]
    %v152 = vpack.c.bf16 %v151, %v150
    %v153 = vld [vmem:[#allocation7] sm:$0xf]
    %v154 = vld [vmem:[#allocation7 + $0x4] sm:$0xf]
    %v155 = vld [vmem:[#allocation7 + $0x8] sm:$0xf]
    %v156 = vld [vmem:[#allocation7 + $0xc] sm:$0xf]
    %v157 = vld [vmem:[#allocation7 + $0x10] sm:$0xf]
    %v158 = vld [vmem:[#allocation7 + $0x14] sm:$0xf]
    %v159 = vld [vmem:[#allocation7 + $0x18] sm:$0xf]
    %v160 = vld [vmem:[#allocation7 + $0x1c] sm:$0xf]
    %v161 = vpack.c.bf16 %v149, %v148
    %v162 = vld [vmem:[#allocation8] sm:$0xf]
    %v163 = vld [vmem:[#allocation8 + $0x4] sm:$0xf]
    %v164 = vld [vmem:[#allocation8 + $0x8] sm:$0xf]
    %v165 = vld [vmem:[#allocation8 + $0xc] sm:$0xf]
    %v166 = vld [vmem:[#allocation8 + $0x10] sm:$0xf]
    %v167 = vld [vmem:[#allocation8 + $0x14] sm:$0xf]
    %v168 = vld [vmem:[#allocation8 + $0x18] sm:$0xf]
    %v169 = vld [vmem:[#allocation8 + $0x1c] sm:$0xf]
    %v170 = vld [vmem:[#allocation8 + $0x20] sm:$0xf]
    %v171 = vld [vmem:[#allocation8 + $0x24] sm:$0xf]
    %v172 = vld [vmem:[#allocation8 + $0x28] sm:$0xf]
    %v173 = vld [vmem:[#allocation8 + $0x2c] sm:$0xf]
    %v174 = vld [vmem:[#allocation8 + $0x30] sm:$0xf]
    %v175 = vld [vmem:[#allocation8 + $0x34] sm:$0xf]
    %v176 = vld [vmem:[#allocation8 + $0x38] sm:$0xf]
    %v177 = vld [vmem:[#allocation8 + $0x3c] sm:$0xf]
    %v194 = vunpack.c.l.b16 %v162
    %v195 = vunpack.c.l.b16 %v163
    %v196 = vunpack.c.l.b16 %v164
    %v197 = vunpack.c.l.b16 %v165
    %v198 = vunpack.c.l.b16 %v166
    %v199 = vunpack.c.l.b16 %v167
    %v200 = vunpack.c.l.b16 %v168
    %v201 = vunpack.c.l.b16 %v169
    %v202 = vunpack.c.l.b16 %v170
    %v203 = vunpack.c.l.b16 %v171
    %v204 = vunpack.c.l.b16 %v172
    %v205 = vunpack.c.l.b16 %v173
    %v206 = vunpack.c.l.b16 %v174
    %v207 = vunpack.c.l.b16 %v175
    %v208 = vunpack.c.l.b16 %v176
    %v209 = vunpack.c.l.b16 %v177
    %v210 = vpack.c.b16 %v195, %v194
    %v211 = vpack.c.b16 %v197, %v196
    %v212 = vpack.c.b16 %v199, %v198
    %v213 = vpack.c.b16 %v201, %v200
    %v214 = vpack.c.b16 %v203, %v202
    %v215 = vpack.c.b16 %v205, %v204
    %v216 = vpack.c.b16 %v207, %v206
    %v217 = vpack.c.b16 %v209, %v208
    %226 = vmatprep.subr.bf16.mxu0 0
    %227 = vmatpush1.bf16.msra.mxu0 %v210
    %228 = vmatprep.subr.bf16.mxu0 0
    %229 = vmatpush1.bf16.msra.mxu0 %v211
    %230 = vmatprep.subr.bf16.mxu0 0
    %231 = vmatpush1.bf16.msra.mxu0 %v212
    %232 = vmatprep.subr.bf16.mxu0 0
    %233 = vmatpush1.bf16.msra.mxu0 %v213
    %234 = vmatprep.subr.bf16.mxu0 0
    %235 = vmatpush1.bf16.msra.mxu0 %v214
    %236 = vmatprep.subr.bf16.mxu0 0
    %237 = vmatpush1.bf16.msra.mxu0 %v215
    %238 = vmatprep.subr.bf16.mxu0 0
    %239 = vmatpush1.bf16.msra.mxu0 %v216
    %240 = vmatprep.subr.bf16.mxu0 0
    %241 = vmatpush1.bf16.msra.mxu0 %v217
    %242 = vmatprep.subr.bf16.mxu0 0
    %243 = vmatpush1.bf16.msra.mxu0 0
    %244 = vmatprep.subr.bf16.mxu0 0
    %245 = vmatpush1.bf16.msra.mxu0 0
    %246 = vmatprep.subr.bf16.mxu0 0
    %247 = vmatpush1.bf16.msra.mxu0 0
    %248 = vmatprep.subr.bf16.mxu0 0
    %249 = vmatpush1.bf16.msra.mxu0 0
    %250 = vmatprep.subr.bf16.mxu0 0
    %251 = vmatpush1.bf16.msra.mxu0 0
    %252 = vmatprep.subr.bf16.mxu0 0
    %253 = vmatpush1.bf16.msra.mxu0 0
    %254 = vmatprep.subr.bf16.mxu0 0
    %255 = vmatpush1.bf16.msra.mxu0 0
    %256 = vmatprep.subr.bf16.mxu0 0
    %257 = vmatpush1.bf16.msra.mxu0 0
    %258 = vmatprep.mubr.bf16.mxu0 0
    %259 = vmatmul.mubr.bf16.gmra.mrb[0].mxu0 %v161
    %v260 = vpop.f32.mrb[0].mxu0
    %v261 = vadd.f32 0.0, %v260
    %v262 = vpop.f32.mrb[0].mxu0
    %v263 = vpop.f32.mrb[0].mxu0
    %v264 = vadd.f32 0.0, %v263
    %v265 = vpop.f32.mrb[0].mxu0
    %266 = vdwg.mxu0
    %v275 = vunpack.c.l.b16 %v153
    %v276 = vunpack.c.l.b16 %v154
    %v277 = vunpack.c.l.b16 %v155
    %v278 = vunpack.c.l.b16 %v156
    %v279 = vunpack.c.l.b16 %v157
    %v280 = vunpack.c.l.b16 %v158
    %v281 = vunpack.c.l.b16 %v159
    %v282 = vunpack.c.l.b16 %v160
    %v283 = vpack.c.b16 %v276, %v275
    %v284 = vpack.c.b16 %v278, %v277
    %v285 = vpack.c.b16 %v280, %v279
    %v286 = vpack.c.b16 %v282, %v281
    %vm291 = vcmask 523264
    %v293 = vsel %vm291, %v152, 0
    %295 = vmatprep.subr.bf16.mxu0 0
    %296 = vmatpush1.bf16.msra.mxu0 %v283
    %297 = vmatprep.subr.bf16.mxu0 0
    %298 = vmatpush1.bf16.msra.mxu0 %v284
    %299 = vmatprep.subr.bf16.mxu0 0
    %300 = vmatpush1.bf16.msra.mxu0 %v285
    %301 = vmatprep.subr.bf16.mxu0 0
    %302 = vmatpush1.bf16.msra.mxu0 %v286
    %303 = vmatprep.subr.bf16.mxu0 0
    %304 = vmatpush1.bf16.msra.mxu0 0
    %305 = vmatprep.subr.bf16.mxu0 0
    %306 = vmatpush1.bf16.msra.mxu0 0
    %307 = vmatprep.subr.bf16.mxu0 0
    %308 = vmatpush1.bf16.msra.mxu0 0
    %309 = vmatprep.subr.bf16.mxu0 0
    %310 = vmatpush1.bf16.msra.mxu0 0
    %311 = vmatprep.subr.bf16.mxu0 0
    %312 = vmatpush1.bf16.msra.mxu0 0
    %313 = vmatprep.subr.bf16.mxu0 0
    %314 = vmatpush1.bf16.msra.mxu0 0
    %315 = vmatprep.subr.bf16.mxu0 0
    %316 = vmatpush1.bf16.msra.mxu0 0
    %317 = vmatprep.subr.bf16.mxu0 0
    %318 = vmatpush1.bf16.msra.mxu0 0
    %319 = vmatprep.subr.bf16.mxu0 0
    %320 = vmatpush1.bf16.msra.mxu0 0
    %321 = vmatprep.subr.bf16.mxu0 0
    %322 = vmatpush1.bf16.msra.mxu0 0
    %323 = vmatprep.subr.bf16.mxu0 0
    %324 = vmatpush1.bf16.msra.mxu0 0
    %325 = vmatprep.subr.bf16.mxu0 0
    %326 = vmatpush1.bf16.msra.mxu0 0
    %327 = vmatprep.mubr.bf16.mxu0 0
    %328 = vmatmul.mubr.bf16.gmra.mrb[0].mxu0 %v293
    %v329 = vpop.f32.mrb[0].mxu0
    %v330 = vadd.f32 %v261, %v329
    %v331 = vpop.f32.mrb[0].mxu0
    %v332 = vpop.f32.mrb[0].mxu0
    %v333 = vadd.f32 %v264, %v332
    %v334 = vpop.f32.mrb[0].mxu0
    %335 = vdwg.mxu0
    %v336 = vld [vmem:[#allocation10] sm:$0x1]
    %v338 = vlaneseq
    %v339 = vshrl.u32 %v338, 7
    %v340 = vsub.s32 0, %v339
    %v341 = vrot.slane %v336, %v340
    %v343 = vadd.f32 %v330, %v341
    %v344 = vadd.f32 %v333, %v341
    %v345 = vld [vmem:[#allocation11] sm:$0x1]
    %v346 = vld [vmem:[#allocation13] sm:$0x1]
    %347 = vadd.xlane.f32.xlu0 %v343
    %v348 = vpop.xlane.xlu0 %347
    %349 = vadd.xlane.f32.xlu0 %v344
    %v350 = vpop.xlane.xlu0 %349
    %v351 = vrcp.pop 128.0
    %v352 = vmul.f32 %v348, %v351
    %v353 = vmul.f32 %v350, %v351
    %v354 = vmul.f32 %v343, %v343
    %v355 = vmul.f32 %v344, %v344
    %356 = vadd.xlane.f32.xlu0 %v354
    %v357 = vpop.xlane.xlu0 %356
    %358 = vadd.xlane.f32.xlu0 %v355
    %v359 = vpop.xlane.xlu0 %358
    %v360 = vmul.f32 %v357, %v351
    %v361 = vmul.f32 %v359, %v351
    %v362 = vmul.f32 %v352, %v352
    %v363 = vmul.f32 %v353, %v353
    %v364 = vsub.f32 %v360, %v362
    %v365 = vsub.f32 %v361, %v363
    %v366 = vmax.f32 %v364, 0.0
    %v367 = vmax.f32 %v365, 0.0
    %v368 = vsub.f32 %v343, %v352
    %v369 = vsub.f32 %v344, %v353
    %v370 = vadd.f32 %v366, 1e-05
    %v371 = vadd.f32 %v367, 1e-05
    %v372 = vrsqrt.pop %v370
    %v373 = vrsqrt.pop %v371
    %v374 = vmul.f32 %v368, %v372
    %v375 = vmul.f32 %v369, %v373
    %v377 = vlaneseq
    %v378 = vshrl.u32 %v377, 7
    %v379 = vsub.s32 0, %v378
    %v380 = vrot.slane %v345, %v379
    %v382 = vmul.f32 %v374, %v380
    %v383 = vmul.f32 %v375, %v380
    %v385 = vlaneseq
    %v386 = vshrl.u32 %v385, 7
    %v387 = vsub.s32 0, %v386
    %v388 = vrot.slane %v346, %v387
    %v390 = vadd.f32 %v382, %v388
    %v391 = vadd.f32 %v383, %v388
    %v392 = vmax.f32 %v390, 0.0
    %v393 = vmax.f32 %v391, 0.0
    %v394 = vpack.c.bf16 %v393, %v392
    %v395 = vld [vmem:[#allocation14] sm:$0xf]
    %v396 = vld [vmem:[#allocation14 + $0x4] sm:$0xf]
    %v397 = vld [vmem:[#allocation14 + $0x8] sm:$0xf]
    %v398 = vld [vmem:[#allocation14 + $0xc] sm:$0xf]
    %v399 = vld [vmem:[#allocation14 + $0x10] sm:$0xf]
    %v400 = vld [vmem:[#allocation14 + $0x14] sm:$0xf]
    %v401 = vld [vmem:[#allocation14 + $0x18] sm:$0xf]
    %v402 = vld [vmem:[#allocation14 + $0x1c] sm:$0xf]
    %v403 = vld [vmem:[#allocation14 + $0x20] sm:$0xf]
    %v404 = vld [vmem:[#allocation14 + $0x24] sm:$0xf]
    %v405 = vld [vmem:[#allocation14 + $0x28] sm:$0xf]
    %v406 = vld [vmem:[#allocation14 + $0x2c] sm:$0xf]
    %v407 = vld [vmem:[#allocation14 + $0x30] sm:$0xf]
    %v408 = vld [vmem:[#allocation14 + $0x34] sm:$0xf]
    %v409 = vld [vmem:[#allocation14 + $0x38] sm:$0xf]
    %v410 = vld [vmem:[#allocation14 + $0x3c] sm:$0xf]
    %v427 = vunpack.c.l.b16 %v395
    %v428 = vunpack.c.l.b16 %v396
    %v429 = vunpack.c.l.b16 %v397
    %v430 = vunpack.c.l.b16 %v398
    %v431 = vunpack.c.l.b16 %v399
    %v432 = vunpack.c.l.b16 %v400
    %v433 = vunpack.c.l.b16 %v401
    %v434 = vunpack.c.l.b16 %v402
    %v435 = vunpack.c.l.b16 %v403
    %v436 = vunpack.c.l.b16 %v404
    %v437 = vunpack.c.l.b16 %v405
    %v438 = vunpack.c.l.b16 %v406
    %v439 = vunpack.c.l.b16 %v407
    %v440 = vunpack.c.l.b16 %v408
    %v441 = vunpack.c.l.b16 %v409
    %v442 = vunpack.c.l.b16 %v410
    %v443 = vpack.c.b16 %v428, %v427
    %v444 = vpack.c.b16 %v430, %v429
    %v445 = vpack.c.b16 %v432, %v431
    %v446 = vpack.c.b16 %v434, %v433
    %v447 = vpack.c.b16 %v436, %v435
    %v448 = vpack.c.b16 %v438, %v437
    %v449 = vpack.c.b16 %v440, %v439
    %v450 = vpack.c.b16 %v442, %v441
    %459 = vmatprep.subr.bf16.mxu0 0
    %460 = vmatpush1.bf16.msra.mxu0 %v443
    %461 = vmatprep.subr.bf16.mxu0 0
    %462 = vmatpush1.bf16.msra.mxu0 %v444
    %463 = vmatprep.subr.bf16.mxu0 0
    %464 = vmatpush1.bf16.msra.mxu0 %v445
    %465 = vmatprep.subr.bf16.mxu0 0
    %466 = vmatpush1.bf16.msra.mxu0 %v446
    %467 = vmatprep.subr.bf16.mxu0 0
    %468 = vmatpush1.bf16.msra.mxu0 %v447
    %469 = vmatprep.subr.bf16.mxu0 0
    %470 = vmatpush1.bf16.msra.mxu0 %v448
    %471 = vmatprep.subr.bf16.mxu0 0
    %472 = vmatpush1.bf16.msra.mxu0 %v449
    %473 = vmatprep.subr.bf16.mxu0 0
    %474 = vmatpush1.bf16.msra.mxu0 %v450
    %475 = vmatprep.subr.bf16.mxu0 0
    %476 = vmatpush1.bf16.msra.mxu0 0
    %477 = vmatprep.subr.bf16.mxu0 0
    %478 = vmatpush1.bf16.msra.mxu0 0
    %479 = vmatprep.subr.bf16.mxu0 0
    %480 = vmatpush1.bf16.msra.mxu0 0
    %481 = vmatprep.subr.bf16.mxu0 0
    %482 = vmatpush1.bf16.msra.mxu0 0
    %483 = vmatprep.subr.bf16.mxu0 0
    %484 = vmatpush1.bf16.msra.mxu0 0
    %485 = vmatprep.subr.bf16.mxu0 0
    %486 = vmatpush1.bf16.msra.mxu0 0
    %487 = vmatprep.subr.bf16.mxu0 0
    %488 = vmatpush1.bf16.msra.mxu0 0
    %489 = vmatprep.subr.bf16.mxu0 0
    %490 = vmatpush1.bf16.msra.mxu0 0
    %491 = vmatprep.mubr.bf16.mxu0 0
    %492 = vmatmul.mubr.bf16.gmra.mrb[0].mxu0 %v394
    %v493 = vpop.f32.mrb[0].mxu0
    %v494 = vadd.f32 0.0, %v493
    %v495 = vpop.f32.mrb[0].mxu0
    %v496 = vpop.f32.mrb[0].mxu0
    %v497 = vadd.f32 0.0, %v496
    %v498 = vpop.f32.mrb[0].mxu0
    %499 = vdwg.mxu0
    %v500 = vadd.f32 %v148, %v494
    %v501 = vadd.f32 %v149, %v497
    %v502 = vld [vmem:[#allocation16] sm:$0x1]
    %v504 = vlaneseq
    %v505 = vshrl.u32 %v504, 7
    %v506 = vsub.s32 0, %v505
    %v507 = vrot.slane %v502, %v506
    %v509 = vadd.f32 %v500, %v507
    %v510 = vadd.f32 %v501, %v507
    %511 = vst [vmem:[#allocation17] sm:$0xff] %v509
    %512 = vst [vmem:[#allocation17 + $0x8] sm:$0xff] %v510
    // Predicated region
    $region74: #{graph_sampler_forward.8} parent=1 // pred_check
      _
    $region75: #{graph_sampler_forward.8} parent=1 // pred_check_branch
      %514 = sbr.rel (0) target = $region77
    $region76: #{graph_sampler_forward.8} parent=1 // pred_region
      %s516 = ssub.s32 256, 256
      %517 = vsyncadd [#allocation4], %s516
      %s518 = sshll.u32 [#allocation17], 4
      %s519 = int_to_ptr.vmem [resolvable:$true] %s518
      %524 = dma.vmem_to_hbm [thread:$0]  %s519, 256, %s9, [#allocation4], 128, 128, 8
    $region77: #{graph_sampler_forward.8} parent=1 // pred_fallthru
      _
    // Predicated region
    $region78: #{graph_sampler_forward.8} parent=1 // pred_check
      _
    $region79: #{graph_sampler_forward.8} parent=1 // pred_check_branch
      %526 = sbr.rel (0) target = $region81
    $region80: #{graph_sampler_forward.8} parent=1 // pred_region
      %527 = dma.done [#allocation4], 256
    $region81: #{graph_sampler_forward.8} parent=1 // pred_fallthru
      _
    %528 = vsyncpa [#allocation3], 1
    %529 = vsyncpa [#allocation6], 1
    %530 = vsyncpa [#allocation9], 1
    %531 = vsyncpa [#allocation12], 1
    %532 = vsyncpa [#allocation15], 1
    %533 = vsyncpa [#allocation4], 1

</llo_original>
